<compile_context>
chip_gen: v7x
topology: tpu7x:2x2x1
jax: 0.10.0
libtpu: 0.0.40
codegen_flags: <defaults>
</compile_context>

<pallas_src>
import functools
import math
from functools import partial

import numpy as np

import jax
import jax.numpy as jnp
from jax.experimental import pallas as pl
from jax.experimental.pallas import tpu as pltpu

_SQRT_HALF = math.sqrt(0.5)


# ----------------------------------------------------------------------------
# pltpu.roll direction probe (run once, cached)
# ----------------------------------------------------------------------------

@functools.lru_cache(maxsize=None)
def _roll_mode():
    """Returns 'fwd' if pltpu.roll matches np.roll, 'bwd' if reversed,
    'shift' (concat fallback) if the probe fails."""
    def probe(x_ref, o_ref):
        o_ref[...] = pltpu.roll(x_ref[...], 1, axis=1)

    try:
        base = jnp.arange(256, dtype=jnp.float32)
        x = jnp.broadcast_to(base, (1, 256))
        out = pl.pallas_call(
            probe, out_shape=jax.ShapeDtypeStruct((1, 256), jnp.float32))(x)
        row = np.asarray(jax.device_get(out))[0]
        b = np.asarray(jax.device_get(base))
        if np.array_equal(row, np.roll(b, 1)):
            return "fwd"
        if np.array_equal(row, np.roll(b, -1)):
            return "bwd"
    except Exception:
        pass
    return "shift"


# ----------------------------------------------------------------------------
# Pallas kernels
# ----------------------------------------------------------------------------

def _flow_kernel(z_ref, c_ref, tot_ref,
                 fw_ref, fb_ref, wfg_ref, bfg_ref, wrs_ref, brs_ref,
                 w1_ref, b1_ref, w2_ref, b2_ref,
                 z_out_ref, tot_out_ref, xb_ref,
                 *, K, Kf, R, Cc, dilations, roll_mode):
    """One full Wavenet_Flow + IAF update for a single batch element."""
    f32 = jnp.float32
    op_dtype = xb_ref.dtype                         # matmul-operand dtype
    z = z_ref[0].astype(f32)                        # (1, T)
    T = z.shape[-1]
    nrows = K * R + Cc
    G = wfg_ref.shape[1] // 2
    S = wrs_ref.shape[1] - R

    # hoisted iotas (avoid re-broadcasting masks inside the layer loop)
    iota1 = jax.lax.broadcasted_iota(jnp.int32, (1, T), 1)
    iota2 = jax.lax.broadcasted_iota(jnp.int32, (2, T), 1)
    iotaR = jax.lax.broadcasted_iota(jnp.int32, (R, T), 1)

    def delay(x, s, iota):
        """y[:, t] = x[:, t - s] for t >= s, else 0.  s is a static int >= 0."""
        if s == 0:
            return x
        if s >= T:
            return jnp.zeros_like(x)
        if roll_mode == "shift":                    # safe fallback path
            return jnp.concatenate(
                [jnp.zeros((x.shape[0], s), x.dtype), x[:, :T - s]], axis=-1)
        amt = s if roll_mode == "fwd" else T - s
        y = pltpu.roll(x, amt, axis=1)              # XLU lane rotation
        # mask wrapped-in columns (right-pad garbage) to zero -> causal halo
        return jnp.where(iota >= s, y, 0.0)

    # ---- front causal conv as one (R, Kf) x (Kf, T) matmul over the scratch
    for k in range(Kf):
        xb_ref[k:k + 1, :] = delay(z, Kf - 1 - k, iota1).astype(op_dtype)
    h = jnp.dot(fw_ref[...], xb_ref[0:Kf, :],
                preferred_element_type=f32) + fb_ref[...]
    h = jnp.maximum(h, 0.0)                         # (R, T)

    # ---- conditioning rows written ONCE per flow (reused by every layer)
    xb_ref[K * R:nrows, :] = c_ref[0].astype(op_dtype)

    # ---- gated dilated ResBlocks: one fused matmul pair per layer
    skip = jnp.zeros((S, T), f32)
    for li, d in enumerate(dilations):
        for k in range(K):
            s = d * (K - 1 - k)
            xb_ref[k * R:(k + 1) * R, :] = delay(h, s, iotaR).astype(op_dtype)
        fg = jnp.dot(wfg_ref[li], xb_ref[...],
                     preferred_element_type=f32) + bfg_ref[li]       # (2G, T)
        gated = jnp.tanh(fg[:G]) * jax.nn.sigmoid(fg[G:])            # (G, T)
        rs = jnp.dot(wrs_ref[li], gated.astype(op_dtype),
                     preferred_element_type=f32) + brs_ref[li]       # (R+S, T)
        h = (h + rs[:R]) * _SQRT_HALF
        skip = skip + rs[R:]

    # ---- final convs: ReLU -> Conv(S,S,1) -> ReLU -> fused Conv(S,2,1)
    o1 = jnp.maximum(
        jnp.dot(w1_ref[...], jnp.maximum(skip, 0.0).astype(op_dtype),
                preferred_element_type=f32) + b1_ref[...], 0.0)      # (S, T)
    ml = jnp.dot(w2_ref[...], o1.astype(op_dtype),
                 preferred_element_type=f32) + b2_ref[...]           # (2, T): [mu; logs]

    # ---- IAF update (torch semantics, carried as one (2, T) block)
    tot = tot_ref[0].astype(f32)                                     # [mu_tot; logs_tot]
    e = jnp.exp(ml[1:2])
    tot_new = jnp.concatenate([tot[0:1] * e + ml[0:1],               # mu_tot*e + mu
                               tot[1:2] + ml[1:2]], axis=0)          # logs_tot + logs
    tot_out_ref[0] = tot_new.astype(tot_out_ref.dtype)

    # z_new[t] = z[t] * exp(logs[t-1]) + mu[t-1]  (t >= 1),  z_new[0] = 0
    ml_sh = delay(ml, 1, iota2)
    z_new = jnp.where(iota1 >= 1, z * jnp.exp(ml_sh[1:2]) + ml_sh[0:1], 0.0)
    z_out_ref[0] = z_new.astype(z_out_ref.dtype)


def _conv1x1_kernel(x_ref, w_ref, b_ref, o_ref):
    """Pointwise Conv1d (used only for down_z when in_channels != 1)."""
    x = x_ref[0].astype(jnp.float32)
    y = jnp.dot(w_ref[...], x, preferred_element_type=jnp.float32) + b_ref[...]
    o_ref[0] = y.astype(o_ref.dtype)


# ----------------------------------------------------------------------------
# Wrappers (pallas_call plumbing)
# ----------------------------------------------------------------------------

def _apply_down_z(p, z):
    B, cin, T = z.shape
    cout = p["w"].shape[0]
    return pl.pallas_call(
        _conv1x1_kernel,
        out_shape=jax.ShapeDtypeStruct((B, cout, T), z.dtype),
        grid=(B,),
        in_specs=[pl.BlockSpec((1, cin, T), lambda i: (i, 0, 0)),
                  pl.BlockSpec((cout, cin), lambda i: (0, 0)),
                  pl.BlockSpec((cout, 1), lambda i: (0, 0))],
        out_specs=pl.BlockSpec((1, cout, T), lambda i: (i, 0, 0)),
        compiler_params=pltpu.CompilerParams(dimension_semantics=("parallel",)),
    )(z, p["w"], p["b"])


def _apply_flow(fp, z, c, tot, *, num_layers):
    """One fused Wavenet_Flow + IAF update (single pallas_call, grid over batch)."""
    B, _, T = z.shape                               # T is already lane-padded
    Cc = c.shape[1]
    fw, fb = fp["front_w"], fp["front_b"]
    wfg, bfg = fp["wfg"], fp["bfg"]
    wrs, brs = fp["wrs"], fp["brs"]
    w1, b1 = fp["w1"], fp["b1"]
    w2, b2 = fp["w2"], fp["b2"]

    R, Kf = fw.shape
    L, twoG, KRC = wfg.shape
    K = (KRC - Cc) // R
    G = twoG // 2
    S = wrs.shape[1] - R
    assert Kf <= KRC, "front-conv taps must fit inside the shared x_big scratch"
    dilations = tuple(2 ** (i % num_layers) for i in range(L))
    op_dtype = wfg.dtype

    kern = partial(_flow_kernel, K=K, Kf=Kf, R=R, Cc=Cc,
                   dilations=dilations, roll_mode=_roll_mode())

    def row_spec(cdim):
        return pl.BlockSpec((1, cdim, T), lambda i: (i, 0, 0))

    def w_spec(arr):
        nd = arr.ndim
        return pl.BlockSpec(arr.shape, lambda i: (0,) * nd)

    weights = (fw, fb, wfg, bfg, wrs, brs, w1, b1, w2, b2)

    # ---- VMEM budget: double-buffered streams + resident weights + scratch
    # ---- + value intermediates, clamped to this chip's VMEM capacity.
    w_bytes = sum(int(a.size) * a.dtype.itemsize for a in weights)
    stream_bytes = (1 + Cc + 2 + 1 + 2) * T * 4
    scratch_bytes = KRC * T * op_dtype.itemsize
    interm_bytes = (R + S + 2 * G + G + (R + S) + S + 16) * T * 4
    est = (2 * w_bytes + 2 * stream_bytes + scratch_bytes
           + 2 * interm_bytes + (8 << 20))
    try:
        cap = int(pltpu.get_tpu_info().vmem_capacity_bytes)
    except Exception:
        cap = 64 << 20
    vmem_limit = int(min(max(est, 32 << 20), cap - (2 << 20)))

    return pl.pallas_call(
        kern,
        out_shape=(jax.ShapeDtypeStruct((B, 1, T), z.dtype),
                   jax.ShapeDtypeStruct((B, 2, T), tot.dtype)),
        grid=(B,),
        in_specs=[row_spec(1), row_spec(Cc), row_spec(2)]
                 + [w_spec(a) for a in weights],
        out_specs=(row_spec(1), row_spec(2)),
        scratch_shapes=[pltpu.VMEM((KRC, T), op_dtype)],
        input_output_aliases={0: 0, 2: 1},          # z -> z_out, tot -> tot_out
        compiler_params=pltpu.CompilerParams(
            dimension_semantics=("parallel",),
            vmem_limit_bytes=vmem_limit),
    )(z, c, tot, *weights)


def wavenet_iaf_forward(params, z, c, *, num_layers):
    """Wavenet_IAF.forward(z, c) == iaf(z, c)."""
    B, cz, T = z.shape
    T_pad = int(pl.cdiv(T, 128)) * 128              # lane-dense time axis
    op_dtype = params["flows"][0]["wfg"].dtype
    z = jnp.pad(z, ((0, 0), (0, 0), (0, T_pad - T)))
    c = jnp.pad(c, ((0, 0), (0, 0), (0, T_pad - T))).astype(op_dtype)
    if cz != 1:
        z = _apply_down_z(params["down_z"], z)
    tot = jnp.zeros((B, 2, T_pad), z.dtype)         # [mu_tot; logs_tot] (0.0 in torch)
    for fp in params["flows"]:
        z, tot = _apply_flow(fp, z, c, tot, num_layers=num_layers)
    return z[:, :, :T], tot[:, 0:1, :T - 1], tot[:, 1:2, :T - 1]


# ----------------------------------------------------------------------------
# Parameter init (synthetic, torch-like shapes) + one-time fused layout prep
# ----------------------------------------------------------------------------

def _init_conv(key, cout, cin, k, scale=0.3):
    kw, kb = jax.random.split(key)
    w = jax.random.normal(kw, (cout, cin, k), jnp.float32) * (scale / math.sqrt(cin * k))
    b = jax.random.normal(kb, (cout,), jnp.float32) * 0.01
    return {"w": w, "b": b}


def _init_resblock(key, R, G, S, Cc, K, scale=0.3):
    ks = jax.random.split(key, 6)

    def nrm(kk, shape, fan_in):
        return jax.random.normal(kk, shape, jnp.float32) * (scale / math.sqrt(fan_in))

    zeros = lambda n: jnp.zeros((n,), jnp.float32)  # noqa: E731
    return {
        "wf": nrm(ks[0], (G, R, K), R * K), "bf": zeros(G),
        "wg": nrm(ks[1], (G, R, K), R * K), "bg": zeros(G),
        "wfc": nrm(ks[2], (G, Cc), Cc), "bfc": zeros(G),
        "wgc": nrm(ks[3], (G, Cc), Cc), "bgc": zeros(G),
        "wr": nrm(ks[4], (R, G), G), "br": zeros(R),
        "ws": nrm(ks[5], (S, G), G), "bs": zeros(S),
    }


def init_params(key, *, num_blocks_iaf, num_layers, in_channels, front_channels,
                residual_channels, gate_channels, skip_channels, kernel_size,
                cout_channels):
    R, G, S, Cc = residual_channels, gate_channels, skip_channels, cout_channels
    keys = jax.random.split(key, len(num_blocks_iaf) + 1)
    flows = []
    for fi, nb in enumerate(num_blocks_iaf):
        n_res = nb * num_layers
        sub = jax.random.split(keys[fi], 3 + n_res)
        flows.append({
            "front": _init_conv(sub[0], R, 1, front_channels),      # Conv(1, R, Kf)
            "layers": [_init_resblock(sub[3 + li], R, G, S, Cc, kernel_size)
                       for li in range(n_res)],
            "final1": _init_conv(sub[1], S, S, 1),                  # Conv(S, S, 1)
            "final2": _init_conv(sub[2], 2, S, 1),                  # Conv(S, 2, 1)
        })
    down_z = _init_conv(keys[-1], 1, in_channels, 1)                # Conv(Cin, 1, 1)
    return {"flows": flows, "down_z": down_z}


def prepare_params(raw, matmul_dtype=jnp.float32):
    """Fold per-layer weights into the fused per-flow layout (done ONCE).

    MXU operand weights are stored in `matmul_dtype` (bf16 recommended on
    v5e/v6e/v7x); biases and all accumulation stay f32.
    """
    md = jnp.dtype(matmul_dtype)
    flows = []
    for flow in raw["flows"]:
        K = flow["layers"][0]["wf"].shape[2]
        wfg, bfg, wrs, brs = [], [], [], []
        for lp in flow["layers"]:
            wf_flat = jnp.concatenate(
                [lp["wf"][:, :, k] for k in range(K)] + [lp["wfc"]], axis=1)
            wg_flat = jnp.concatenate(
                [lp["wg"][:, :, k] for k in range(K)] + [lp["wgc"]], axis=1)
            wfg.append(jnp.concatenate([wf_flat, wg_flat], axis=0))   # (2G, K*R+Cc)
            bfg.append(jnp.concatenate([lp["bf"] + lp["bfc"],
                                        lp["bg"] + lp["bgc"]])[:, None])
            wrs.append(jnp.concatenate([lp["wr"], lp["ws"]], axis=0))  # (R+S, G)
            brs.append(jnp.concatenate([lp["br"], lp["bs"]])[:, None])
        f2w, f2b = flow["final2"]["w"], flow["final2"]["b"]
        flows.append({
            "front_w": flow["front"]["w"][:, 0, :].astype(md),       # (R, Kf)
            "front_b": flow["front"]["b"][:, None],                  # (R, 1)
            "wfg": jnp.stack(wfg).astype(md), "bfg": jnp.stack(bfg),
            "wrs": jnp.stack(wrs).astype(md), "brs": jnp.stack(brs),
            "w1": flow["final1"]["w"][:, :, 0].astype(md),
            "b1": flow["final1"]["b"][:, None],
            "w2": f2w[:, :, 0].astype(md),                           # (2, S) fused mu/logs head
            "b2": f2b[:, None],                                      # (2, 1)
        })
    down_z = {"w": raw["down_z"]["w"][:, :, 0], "b": raw["down_z"]["b"][:, None]}
    return {"flows": flows, "down_z": down_z}


# ----------------------------------------------------------------------------
# Pure-JAX reference (mirrors the PyTorch module) for correctness checking
# ----------------------------------------------------------------------------

_HI = jax.lax.Precision.HIGHEST


def _ref_pointwise(x, w, b):
    return jnp.einsum("oc,bct->bot", w, x, precision=_HI) + b[None, :, None]


def _ref_causal_conv(x, w, b, dilation=1):
    k = w.shape[-1]
    pad = dilation * (k - 1)
    xp = jnp.pad(x, ((0, 0), (0, 0), (pad, 0)))
    y = jax.lax.conv_general_dilated(
        xp, w, window_strides=(1,), padding="VALID", rhs_dilation=(dilation,),
        dimension_numbers=("NCH", "OIH", "NCH"), precision=_HI)
    return y + b[None, :, None]


def _ref_flow(flow, x, c, num_layers):
    h = jax.nn.relu(_ref_causal_conv(x, flow["front"]["w"], flow["front"]["b"]))
    skip = 0.0
    for i, lp in enumerate(flow["layers"]):
        d = 2 ** (i % num_layers)
        hf = _ref_causal_conv(h, lp["wf"], lp["bf"], d) + _ref_pointwise(c, lp["wfc"], lp["bfc"])
        hg = _ref_causal_conv(h, lp["wg"], lp["bg"], d) + _ref_pointwise(c, lp["wgc"], lp["bgc"])
        out = jnp.tanh(hf) * jax.nn.sigmoid(hg)
        h = (h + _ref_pointwise(out, lp["wr"], lp["br"])) * _SQRT_HALF
        skip = skip + _ref_pointwise(out, lp["ws"], lp["bs"])
    o = jax.nn.relu(skip)
    o = jax.nn.relu(_ref_pointwise(o, flow["final1"]["w"][:, :, 0], flow["final1"]["b"]))
    return _ref_pointwise(o, flow["final2"]["w"][:, :, 0], flow["final2"]["b"])


def reference_forward(raw, z, c, *, num_layers):
    if z.shape[1] != 1:
        z = _ref_pointwise(z, raw["down_z"]["w"][:, :, 0], raw["down_z"]["b"])
    mu_tot, logs_tot = 0.0, 0.0
    for flow in raw["flows"]:
        ml = _ref_flow(flow, z, c, num_layers)
        mu, logs = ml[:, 0:1, :-1], ml[:, 1:2, :-1]
        mu_tot = mu_tot * jnp.exp(logs) + mu
        logs_tot = logs_tot + logs
        z = z[:, :, 1:] * jnp.exp(logs) + mu
        z = jnp.pad(z, ((0, 0), (0, 0), (1, 0)))
    return z, mu_tot, logs_tot


# ----------------------------------------------------------------------------
# Demo
# ----------------------------------------------------------------------------

if __name__ == "__main__":
    cfg = dict(
        num_blocks_iaf=[1, 1],      # 2 flows (small version of [1]*6)
        num_layers=3,               # dilations 1, 2, 4 per flow
        in_channels=2,              # exercises down_z
        front_channels=4,           # front conv kernel size
        residual_channels=16,
        gate_channels=32,
        skip_channels=16,
        kernel_size=3,
        cout_channels=32,           # conditioning channels seen by ResBlocks
    )
    B, T = 2, 96

    key = jax.random.PRNGKey(0)
    k_p, k_z, k_c = jax.random.split(key, 3)
    raw = init_params(k_p, **cfg)
    z = jax.random.normal(k_z, (B, cfg["in_channels"], T), jnp.float32)
    c = jax.random.normal(k_c, (B, cfg["cout_channels"], T), jnp.float32) * 0.1

    _roll_mode()                    # resolve the pltpu.roll direction once

    fwd = jax.jit(partial(wavenet_iaf_forward, num_layers=cfg["num_layers"]))

    # --- f32 run, checked against the pure-JAX reference of the torch module
    params_f32 = prepare_params(raw, matmul_dtype=jnp.float32)
    z_out, mu_tot, logs_tot = fwd(params_f32, z, c)
    jax.block_until_ready((z_out, mu_tot, logs_tot))

    z_ref, mu_ref, logs_ref = jax.jit(
        partial(reference_forward, num_layers=cfg["num_layers"]))(raw, z, c)
    np.testing.assert_allclose(np.asarray(z_out), np.asarray(z_ref), rtol=5e-3, atol=5e-3)
    np.testing.assert_allclose(np.asarray(mu_tot), np.asarray(mu_ref), rtol=5e-3, atol=5e-3)
    np.testing.assert_allclose(np.asarray(logs_tot), np.asarray(logs_ref), rtol=5e-3, atol=5e-3)

    # --- bf16 MXU-operand run (fast path on v5e/v6e/v7x): shape/finite checks
    params_bf16 = prepare_params(raw, matmul_dtype=jnp.bfloat16)
    z_b, mu_b, logs_b = fwd(params_bf16, z, c)
    jax.block_until_ready((z_b, mu_b, logs_b))

    assert z_out.shape == (B, 1, T) and z_b.shape == (B, 1, T)
    assert mu_tot.shape == (B, 1, T - 1) and logs_tot.shape == (B, 1, T - 1)
    assert bool(jnp.all(jnp.isfinite(z_b)))
    assert bool(jnp.all(jnp.isfinite(mu_b)))
    assert bool(jnp.all(jnp.isfinite(logs_b)))
    print("KERNEL_OK")
</pallas_src>

<mosaic_0001>
module attributes {stable_mosaic.version = 11 : i64} {
  func.func @probe(%arg0: memref<1x256xf32, #tpu.memory_space<vmem>>, %arg1: memref<1x256xf32, #tpu.memory_space<vmem>>) attributes {dimension_semantics = [], scalar_prefetch = 0 : i64, scratch_operands = 0 : i64, tpu.core_type = #tpu.core_type<tc>} {
    %c0 = arith.constant 0 : index
    %c0_0 = arith.constant 0 : index
    %0 = vector.load %arg0[%c0, %c0_0] : memref<1x256xf32, #tpu.memory_space<vmem>>, vector<1x256xf32>
    %c1_i32 = arith.constant 1 : i32
    %1 = tpu.dynamic_rotate %0 by %c1_i32 dim 1 : vector<1x256xf32>, i32 -> vector<1x256xf32>
    %c0_1 = arith.constant 0 : index
    %c0_2 = arith.constant 0 : index
    %2 = vector.load %arg1[%c0_1, %c0_2] : memref<1x256xf32, #tpu.memory_space<vmem>>, vector<1x256xf32>
    tpu.vector_store %arg1[%c0_1, %c0_2], %1 {strides = array<i32>} : memref<1x256xf32, #tpu.memory_space<vmem>>, vector<1x256xf32>,
    return
  }
}

module attributes {stable_mosaic.version = 11 : i64} {
  func.func @_flow_kernel(%arg0: i32, %arg1: memref<1x1x128xf32, #tpu.memory_space<vmem>>, %arg2: memref<1x32x128xf32, #tpu.memory_space<vmem>>, %arg3: memref<1x2x128xf32, #tpu.memory_space<vmem>>, %arg4: memref<16x4xf32, #tpu.memory_space<vmem>>, %arg5: memref<16x1xf32, #tpu.memory_space<vmem>>, %arg6: memref<3x64x80xf32, #tpu.memory_space<vmem>>, %arg7: memref<3x64x1xf32, #tpu.memory_space<vmem>>, %arg8: memref<3x32x32xf32, #tpu.memory_space<vmem>>, %arg9: memref<3x32x1xf32, #tpu.memory_space<vmem>>, %arg10: memref<16x16xf32, #tpu.memory_space<vmem>>, %arg11: memref<16x1xf32, #tpu.memory_space<vmem>>, %arg12: memref<2x16xf32, #tpu.memory_space<vmem>>, %arg13: memref<2x1xf32, #tpu.memory_space<vmem>>, %arg14: memref<1x1x128xf32, #tpu.memory_space<vmem>>, %arg15: memref<1x2x128xf32, #tpu.memory_space<vmem>>, %arg16: memref<80x128xf32, #tpu.memory_space<vmem>>) attributes {dimension_semantics = [#tpu.dimension_semantics<parallel>], iteration_bounds = array<i64: 2>, scalar_prefetch = 0 : i64, scratch_operands = 1 : i64, tpu.core_type = #tpu.core_type<tc>, window_params = [{transform_indices = @transform_0, window_bounds = array<i64: 1, 1, 128>}, {transform_indices = @transform_1, window_bounds = array<i64: 1, 32, 128>}, {transform_indices = @transform_2, window_bounds = array<i64: 1, 2, 128>}, {pipeline_mode = #tpu.pipeline_mode<synchronous>, transform_indices = @transform_3, window_bounds = array<i64: 16, 4>}, {pipeline_mode = #tpu.pipeline_mode<synchronous>, transform_indices = @transform_4, window_bounds = array<i64: 16, 1>}, {pipeline_mode = #tpu.pipeline_mode<synchronous>, transform_indices = @transform_5, window_bounds = array<i64: 3, 64, 80>}, {pipeline_mode = #tpu.pipeline_mode<synchronous>, transform_indices = @transform_6, window_bounds = array<i64: 3, 64, 1>}, {pipeline_mode = #tpu.pipeline_mode<synchronous>, transform_indices = @transform_7, window_bounds = array<i64: 3, 32, 32>}, {pipeline_mode = #tpu.pipeline_mode<synchronous>, transform_indices = @transform_8, window_bounds = array<i64: 3, 32, 1>}, {pipeline_mode = #tpu.pipeline_mode<synchronous>, transform_indices = @transform_9, window_bounds = array<i64: 16, 16>}, {pipeline_mode = #tpu.pipeline_mode<synchronous>, transform_indices = @transform_10, window_bounds = array<i64: 16, 1>}, {pipeline_mode = #tpu.pipeline_mode<synchronous>, transform_indices = @transform_11, window_bounds = array<i64: 2, 16>}, {pipeline_mode = #tpu.pipeline_mode<synchronous>, transform_indices = @transform_12, window_bounds = array<i64: 2, 1>}, {transform_indices = @transform_13, window_bounds = array<i64: 1, 1, 128>}, {transform_indices = @transform_14, window_bounds = array<i64: 1, 2, 128>}]} {
    %c0 = arith.constant 0 : index
    %c0_0 = arith.constant 0 : index
    %c0_1 = arith.constant 0 : index
    %0 = vector.load %arg1[%c0, %c0_0, %c0_1] : memref<1x1x128xf32, #tpu.memory_space<vmem>>, vector<1x1x128xf32>
    %1 = vector.shape_cast %0 : vector<1x1x128xf32> to vector<1x128xf32>
    %2 = tpu.iota {dimensions = array<i32: 1>} : vector<1x128xi32>
    %cst = arith.constant 0.000000e+00 : f32
    %3 = vector.broadcast %cst : f32 to vector<1x3xf32>
    %4 = vector.extract_strided_slice %1 {offsets = [0, 0], sizes = [1, 125], strides = [1, 1]} : vector<1x128xf32> to vector<1x125xf32>
    %5 = tpu.concatenate %3, %4 in 1 : vector<1x3xf32>, vector<1x125xf32> -> vector<1x128xf32>
    %c0_2 = arith.constant 0 : index
    %c0_3 = arith.constant 0 : index
    %6 = vector.load %arg16[%c0_2, %c0_3] : memref<80x128xf32, #tpu.memory_space<vmem>>, vector<1x128xf32>
    tpu.vector_store %arg16[%c0_2, %c0_3], %5 {strides = array<i32>} : memref<80x128xf32, #tpu.memory_space<vmem>>, vector<1x128xf32>,
    %cst_4 = arith.constant 0.000000e+00 : f32
    %7 = vector.broadcast %cst_4 : f32 to vector<1x2xf32>
    %8 = vector.extract_strided_slice %1 {offsets = [0, 0], sizes = [1, 126], strides = [1, 1]} : vector<1x128xf32> to vector<1x126xf32>
    %9 = tpu.concatenate %7, %8 in 1 : vector<1x2xf32>, vector<1x126xf32> -> vector<1x128xf32>
    %c1 = arith.constant 1 : index
    %c0_5 = arith.constant 0 : index
    %10 = vector.load %arg16[%c1, %c0_5] : memref<80x128xf32, #tpu.memory_space<vmem>>, vector<1x128xf32>
    tpu.vector_store %arg16[%c1, %c0_5], %9 {strides = array<i32>} : memref<80x128xf32, #tpu.memory_space<vmem>>, vector<1x128xf32>,
    %cst_6 = arith.constant 0.000000e+00 : f32
    %11 = vector.broadcast %cst_6 : f32 to vector<1x1xf32>
    %12 = vector.extract_strided_slice %1 {offsets = [0, 0], sizes = [1, 127], strides = [1, 1]} : vector<1x128xf32> to vector<1x127xf32>
    %13 = tpu.concatenate %11, %12 in 1 : vector<1x1xf32>, vector<1x127xf32> -> vector<1x128xf32>
    %c2 = arith.constant 2 : index
    %c0_7 = arith.constant 0 : index
    %14 = vector.load %arg16[%c2, %c0_7] : memref<80x128xf32, #tpu.memory_space<vmem>>, vector<1x128xf32>
    tpu.vector_store %arg16[%c2, %c0_7], %13 {strides = array<i32>} : memref<80x128xf32, #tpu.memory_space<vmem>>, vector<1x128xf32>,
    %c3 = arith.constant 3 : index
    %c0_8 = arith.constant 0 : index
    %15 = vector.load %arg16[%c3, %c0_8] : memref<80x128xf32, #tpu.memory_space<vmem>>, vector<1x128xf32>
    tpu.vector_store %arg16[%c3, %c0_8], %1 {strides = array<i32>} : memref<80x128xf32, #tpu.memory_space<vmem>>, vector<1x128xf32>,
    %c0_9 = arith.constant 0 : index
    %c0_10 = arith.constant 0 : index
    %16 = vector.load %arg4[%c0_9, %c0_10] : memref<16x4xf32, #tpu.memory_space<vmem>>, vector<16x4xf32>
    %c0_11 = arith.constant 0 : index
    %c0_12 = arith.constant 0 : index
    %17 = vector.load %arg16[%c0_11, %c0_12] : memref<80x128xf32, #tpu.memory_space<vmem>>, vector<4x128xf32>
    %cst_13 = arith.constant dense<0.000000e+00> : vector<16x128xf32>
    %18 = tpu.matmul %16, %17, %cst_13 {dimension_numbers = #tpu.dot_dimension_numbers<[1], [0], [0], [1], [0, 0, 1, 1], [], []>} : vector<16x4xf32>, vector<4x128xf32>, vector<16x128xf32> -> vector<16x128xf32>
    %c0_14 = arith.constant 0 : index
    %c0_15 = arith.constant 0 : index
    %19 = vector.load %arg5[%c0_14, %c0_15] : memref<16x1xf32, #tpu.memory_space<vmem>>, vector<16x1xf32>
    %20 = vector.broadcast %19 : vector<16x1xf32> to vector<16x128xf32>
    %21 = arith.addf %18, %20 : vector<16x128xf32>
    %cst_16 = arith.constant 0.000000e+00 : f32
    %22 = vector.broadcast %cst_16 : f32 to vector<16x128xf32>
    %23 = arith.maximumf %21, %22 : vector<16x128xf32>
    %c0_17 = arith.constant 0 : index
    %c0_18 = arith.constant 0 : index
    %c0_19 = arith.constant 0 : index
    %24 = vector.load %arg2[%c0_17, %c0_18, %c0_19] : memref<1x32x128xf32, #tpu.memory_space<vmem>>, vector<1x32x128xf32>
    %25 = vector.shape_cast %24 : vector<1x32x128xf32> to vector<32x128xf32>
    %c48 = arith.constant 48 : index
    %c0_20 = arith.constant 0 : index
    %26 = vector.load %arg16[%c48, %c0_20] : memref<80x128xf32, #tpu.memory_space<vmem>>, vector<32x128xf32>
    tpu.vector_store %arg16[%c48, %c0_20], %25 {strides = array<i32>} : memref<80x128xf32, #tpu.memory_space<vmem>>, vector<32x128xf32>,
    %cst_21 = arith.constant 0.000000e+00 : f32
    %27 = vector.broadcast %cst_21 : f32 to vector<16x128xf32>
    %cst_22 = arith.constant 0.000000e+00 : f32
    %28 = vector.broadcast %cst_22 : f32 to vector<16x2xf32>
    %29 = vector.extract_strided_slice %23 {offsets = [0, 0], sizes = [16, 126], strides = [1, 1]} : vector<16x128xf32> to vector<16x126xf32>
    %30 = tpu.concatenate %28, %29 in 1 : vector<16x2xf32>, vector<16x126xf32> -> vector<16x128xf32>
    %c0_23 = arith.constant 0 : index
    %c0_24 = arith.constant 0 : index
    %31 = vector.load %arg16[%c0_23, %c0_24] : memref<80x128xf32, #tpu.memory_space<vmem>>, vector<16x128xf32>
    tpu.vector_store %arg16[%c0_23, %c0_24], %30 {strides = array<i32>} : memref<80x128xf32, #tpu.memory_space<vmem>>, vector<16x128xf32>,
    %cst_25 = arith.constant 0.000000e+00 : f32
    %32 = vector.broadcast %cst_25 : f32 to vector<16x1xf32>
    %33 = vector.extract_strided_slice %23 {offsets = [0, 0], sizes = [16, 127], strides = [1, 1]} : vector<16x128xf32> to vector<16x127xf32>
    %34 = tpu.concatenate %32, %33 in 1 : vector<16x1xf32>, vector<16x127xf32> -> vector<16x128xf32>
    %c16 = arith.constant 16 : index
    %c0_26 = arith.constant 0 : index
    %35 = vector.load %arg16[%c16, %c0_26] : memref<80x128xf32, #tpu.memory_space<vmem>>, vector<16x128xf32>
    tpu.vector_store %arg16[%c16, %c0_26], %34 {strides = array<i32>} : memref<80x128xf32, #tpu.memory_space<vmem>>, vector<16x128xf32>,
    %c32 = arith.constant 32 : index
    %c0_27 = arith.constant 0 : index
    %36 = vector.load %arg16[%c32, %c0_27] : memref<80x128xf32, #tpu.memory_space<vmem>>, vector<16x128xf32>
    tpu.vector_store %arg16[%c32, %c0_27], %23 {strides = array<i32>} : memref<80x128xf32, #tpu.memory_space<vmem>>, vector<16x128xf32>,
    %c0_28 = arith.constant 0 : index
    %c0_29 = arith.constant 0 : index
    %c0_30 = arith.constant 0 : index
    %37 = vector.load %arg6[%c0_28, %c0_29, %c0_30] : memref<3x64x80xf32, #tpu.memory_space<vmem>>, vector<1x64x80xf32>
    %38 = vector.shape_cast %37 : vector<1x64x80xf32> to vector<64x80xf32>
    %c0_31 = arith.constant 0 : index
    %c0_32 = arith.constant 0 : index
    %39 = vector.load %arg16[%c0_31, %c0_32] : memref<80x128xf32, #tpu.memory_space<vmem>>, vector<80x128xf32>
    %cst_33 = arith.constant dense<0.000000e+00> : vector<64x128xf32>
    %40 = tpu.matmul %38, %39, %cst_33 {dimension_numbers = #tpu.dot_dimension_numbers<[1], [0], [0], [1], [0, 0, 1, 1], [], []>} : vector<64x80xf32>, vector<80x128xf32>, vector<64x128xf32> -> vector<64x128xf32>
    %c0_34 = arith.constant 0 : index
    %c0_35 = arith.constant 0 : index
    %c0_36 = arith.constant 0 : index
    %41 = vector.load %arg7[%c0_34, %c0_35, %c0_36] : memref<3x64x1xf32, #tpu.memory_space<vmem>>, vector<1x64x1xf32>
    %42 = vector.shape_cast %41 : vector<1x64x1xf32> to vector<64x1xf32>
    %43 = vector.broadcast %42 : vector<64x1xf32> to vector<64x128xf32>
    %44 = arith.addf %40, %43 : vector<64x128xf32>
    %45 = vector.extract_strided_slice %44 {offsets = [0, 0], sizes = [32, 128], strides = [1, 1]} : vector<64x128xf32> to vector<32x128xf32>
    %46 = math.tanh %45 : vector<32x128xf32>
    %47 = vector.extract_strided_slice %44 {offsets = [32, 0], sizes = [32, 128], strides = [1, 1]} : vector<64x128xf32> to vector<32x128xf32>
    %48 = arith.negf %47 : vector<32x128xf32>
    %49 = math.exp %48 : vector<32x128xf32>
    %cst_37 = arith.constant 1.000000e+00 : f32
    %50 = vector.broadcast %cst_37 : f32 to vector<32x128xf32>
    %51 = arith.addf %50, %49 : vector<32x128xf32>
    %52 = arith.divf %50, %51 : vector<32x128xf32>
    %53 = arith.mulf %46, %52 : vector<32x128xf32>
    %c0_38 = arith.constant 0 : index
    %c0_39 = arith.constant 0 : index
    %c0_40 = arith.constant 0 : index
    %54 = vector.load %arg8[%c0_38, %c0_39, %c0_40] : memref<3x32x32xf32, #tpu.memory_space<vmem>>, vector<1x32x32xf32>
    %55 = vector.shape_cast %54 : vector<1x32x32xf32> to vector<32x32xf32>
    %cst_41 = arith.constant dense<0.000000e+00> : vector<32x128xf32>
    %56 = tpu.matmul %55, %53, %cst_41 {dimension_numbers = #tpu.dot_dimension_numbers<[1], [0], [0], [1], [0, 0, 1, 1], [], []>} : vector<32x32xf32>, vector<32x128xf32>, vector<32x128xf32> -> vector<32x128xf32>
    %c0_42 = arith.constant 0 : index
    %c0_43 = arith.constant 0 : index
    %c0_44 = arith.constant 0 : index
    %57 = vector.load %arg9[%c0_42, %c0_43, %c0_44] : memref<3x32x1xf32, #tpu.memory_space<vmem>>, vector<1x32x1xf32>
    %58 = vector.shape_cast %57 : vector<1x32x1xf32> to vector<32x1xf32>
    %59 = vector.broadcast %58 : vector<32x1xf32> to vector<32x128xf32>
    %60 = arith.addf %56, %59 : vector<32x128xf32>
    %61 = vector.extract_strided_slice %60 {offsets = [0, 0], sizes = [16, 128], strides = [1, 1]} : vector<32x128xf32> to vector<16x128xf32>
    %62 = arith.addf %23, %61 : vector<16x128xf32>
    %cst_45 = arith.constant 0.707106769 : f32
    %63 = vector.broadcast %cst_45 : f32 to vector<16x128xf32>
    %64 = arith.mulf %62, %63 : vector<16x128xf32>
    %65 = vector.extract_strided_slice %60 {offsets = [16, 0], sizes = [16, 128], strides = [1, 1]} : vector<32x128xf32> to vector<16x128xf32>
    %66 = arith.addf %27, %65 : vector<16x128xf32>
    %cst_46 = arith.constant 0.000000e+00 : f32
    %67 = vector.broadcast %cst_46 : f32 to vector<16x4xf32>
    %68 = vector.extract_strided_slice %64 {offsets = [0, 0], sizes = [16, 124], strides = [1, 1]} : vector<16x128xf32> to vector<16x124xf32>
    %69 = tpu.concatenate %67, %68 in 1 : vector<16x4xf32>, vector<16x124xf32> -> vector<16x128xf32>
    %c0_47 = arith.constant 0 : index
    %c0_48 = arith.constant 0 : index
    %70 = vector.load %arg16[%c0_47, %c0_48] : memref<80x128xf32, #tpu.memory_space<vmem>>, vector<16x128xf32>
    tpu.vector_store %arg16[%c0_47, %c0_48], %69 {strides = array<i32>} : memref<80x128xf32, #tpu.memory_space<vmem>>, vector<16x128xf32>,
    %cst_49 = arith.constant 0.000000e+00 : f32
    %71 = vector.broadcast %cst_49 : f32 to vector<16x2xf32>
    %72 = vector.extract_strided_slice %64 {offsets = [0, 0], sizes = [16, 126], strides = [1, 1]} : vector<16x128xf32> to vector<16x126xf32>
    %73 = tpu.concatenate %71, %72 in 1 : vector<16x2xf32>, vector<16x126xf32> -> vector<16x128xf32>
    %c16_50 = arith.constant 16 : index
    %c0_51 = arith.constant 0 : index
    %74 = vector.load %arg16[%c16_50, %c0_51] : memref<80x128xf32, #tpu.memory_space<vmem>>, vector<16x128xf32>
    tpu.vector_store %arg16[%c16_50, %c0_51], %73 {strides = array<i32>} : memref<80x128xf32, #tpu.memory_space<vmem>>, vector<16x128xf32>,
    %c32_52 = arith.constant 32 : index
    %c0_53 = arith.constant 0 : index
    %75 = vector.load %arg16[%c32_52, %c0_53] : memref<80x128xf32, #tpu.memory_space<vmem>>, vector<16x128xf32>
    tpu.vector_store %arg16[%c32_52, %c0_53], %64 {strides = array<i32>} : memref<80x128xf32, #tpu.memory_space<vmem>>, vector<16x128xf32>,
    %c1_54 = arith.constant 1 : index
    %c0_55 = arith.constant 0 : index
    %c0_56 = arith.constant 0 : index
    %76 = vector.load %arg6[%c1_54, %c0_55, %c0_56] : memref<3x64x80xf32, #tpu.memory_space<vmem>>, vector<1x64x80xf32>
    %77 = vector.shape_cast %76 : vector<1x64x80xf32> to vector<64x80xf32>
    %c0_57 = arith.constant 0 : index
    %c0_58 = arith.constant 0 : index
    %78 = vector.load %arg16[%c0_57, %c0_58] : memref<80x128xf32, #tpu.memory_space<vmem>>, vector<80x128xf32>
    %cst_59 = arith.constant dense<0.000000e+00> : vector<64x128xf32>
    %79 = tpu.matmul %77, %78, %cst_59 {dimension_numbers = #tpu.dot_dimension_numbers<[1], [0], [0], [1], [0, 0, 1, 1], [], []>} : vector<64x80xf32>, vector<80x128xf32>, vector<64x128xf32> -> vector<64x128xf32>
    %c1_60 = arith.constant 1 : index
    %c0_61 = arith.constant 0 : index
    %c0_62 = arith.constant 0 : index
    %80 = vector.load %arg7[%c1_60, %c0_61, %c0_62] : memref<3x64x1xf32, #tpu.memory_space<vmem>>, vector<1x64x1xf32>
    %81 = vector.shape_cast %80 : vector<1x64x1xf32> to vector<64x1xf32>
    %82 = vector.broadcast %81 : vector<64x1xf32> to vector<64x128xf32>
    %83 = arith.addf %79, %82 : vector<64x128xf32>
    %84 = vector.extract_strided_slice %83 {offsets = [0, 0], sizes = [32, 128], strides = [1, 1]} : vector<64x128xf32> to vector<32x128xf32>
    %85 = math.tanh %84 : vector<32x128xf32>
    %86 = vector.extract_strided_slice %83 {offsets = [32, 0], sizes = [32, 128], strides = [1, 1]} : vector<64x128xf32> to vector<32x128xf32>
    %87 = arith.negf %86 : vector<32x128xf32>
    %88 = math.exp %87 : vector<32x128xf32>
    %cst_63 = arith.constant 1.000000e+00 : f32
    %89 = vector.broadcast %cst_63 : f32 to vector<32x128xf32>
    %90 = arith.addf %89, %88 : vector<32x128xf32>
    %91 = arith.divf %89, %90 : vector<32x128xf32>
    %92 = arith.mulf %85, %91 : vector<32x128xf32>
    %c1_64 = arith.constant 1 : index
    %c0_65 = arith.constant 0 : index
    %c0_66 = arith.constant 0 : index
    %93 = vector.load %arg8[%c1_64, %c0_65, %c0_66] : memref<3x32x32xf32, #tpu.memory_space<vmem>>, vector<1x32x32xf32>
    %94 = vector.shape_cast %93 : vector<1x32x32xf32> to vector<32x32xf32>
    %cst_67 = arith.constant dense<0.000000e+00> : vector<32x128xf32>
    %95 = tpu.matmul %94, %92, %cst_67 {dimension_numbers = #tpu.dot_dimension_numbers<[1], [0], [0], [1], [0, 0, 1, 1], [], []>} : vector<32x32xf32>, vector<32x128xf32>, vector<32x128xf32> -> vector<32x128xf32>
    %c1_68 = arith.constant 1 : index
    %c0_69 = arith.constant 0 : index
    %c0_70 = arith.constant 0 : index
    %96 = vector.load %arg9[%c1_68, %c0_69, %c0_70] : memref<3x32x1xf32, #tpu.memory_space<vmem>>, vector<1x32x1xf32>
    %97 = vector.shape_cast %96 : vector<1x32x1xf32> to vector<32x1xf32>
    %98 = vector.broadcast %97 : vector<32x1xf32> to vector<32x128xf32>
    %99 = arith.addf %95, %98 : vector<32x128xf32>
    %100 = vector.extract_strided_slice %99 {offsets = [0, 0], sizes = [16, 128], strides = [1, 1]} : vector<32x128xf32> to vector<16x128xf32>
    %101 = arith.addf %64, %100 : vector<16x128xf32>
    %cst_71 = arith.constant 0.707106769 : f32
    %102 = vector.broadcast %cst_71 : f32 to vector<16x128xf32>
    %103 = arith.mulf %101, %102 : vector<16x128xf32>
    %104 = vector.extract_strided_slice %99 {offsets = [16, 0], sizes = [16, 128], strides = [1, 1]} : vector<32x128xf32> to vector<16x128xf32>
    %105 = arith.addf %66, %104 : vector<16x128xf32>
    %cst_72 = arith.constant 0.000000e+00 : f32
    %106 = vector.broadcast %cst_72 : f32 to vector<16x8xf32>
    %107 = vector.extract_strided_slice %103 {offsets = [0, 0], sizes = [16, 120], strides = [1, 1]} : vector<16x128xf32> to vector<16x120xf32>
    %108 = tpu.concatenate %106, %107 in 1 : vector<16x8xf32>, vector<16x120xf32> -> vector<16x128xf32>
    %c0_73 = arith.constant 0 : index
    %c0_74 = arith.constant 0 : index
    %109 = vector.load %arg16[%c0_73, %c0_74] : memref<80x128xf32, #tpu.memory_space<vmem>>, vector<16x128xf32>
    tpu.vector_store %arg16[%c0_73, %c0_74], %108 {strides = array<i32>} : memref<80x128xf32, #tpu.memory_space<vmem>>, vector<16x128xf32>,
    %cst_75 = arith.constant 0.000000e+00 : f32
    %110 = vector.broadcast %cst_75 : f32 to vector<16x4xf32>
    %111 = vector.extract_strided_slice %103 {offsets = [0, 0], sizes = [16, 124], strides = [1, 1]} : vector<16x128xf32> to vector<16x124xf32>
    %112 = tpu.concatenate %110, %111 in 1 : vector<16x4xf32>, vector<16x124xf32> -> vector<16x128xf32>
    %c16_76 = arith.constant 16 : index
    %c0_77 = arith.constant 0 : index
    %113 = vector.load %arg16[%c16_76, %c0_77] : memref<80x128xf32, #tpu.memory_space<vmem>>, vector<16x128xf32>
    tpu.vector_store %arg16[%c16_76, %c0_77], %112 {strides = array<i32>} : memref<80x128xf32, #tpu.memory_space<vmem>>, vector<16x128xf32>,
    %c32_78 = arith.constant 32 : index
    %c0_79 = arith.constant 0 : index
    %114 = vector.load %arg16[%c32_78, %c0_79] : memref<80x128xf32, #tpu.memory_space<vmem>>, vector<16x128xf32>
    tpu.vector_store %arg16[%c32_78, %c0_79], %103 {strides = array<i32>} : memref<80x128xf32, #tpu.memory_space<vmem>>, vector<16x128xf32>,
    %c2_80 = arith.constant 2 : index
    %c0_81 = arith.constant 0 : index
    %c0_82 = arith.constant 0 : index
    %115 = vector.load %arg6[%c2_80, %c0_81, %c0_82] : memref<3x64x80xf32, #tpu.memory_space<vmem>>, vector<1x64x80xf32>
    %116 = vector.shape_cast %115 : vector<1x64x80xf32> to vector<64x80xf32>
    %c0_83 = arith.constant 0 : index
    %c0_84 = arith.constant 0 : index
    %117 = vector.load %arg16[%c0_83, %c0_84] : memref<80x128xf32, #tpu.memory_space<vmem>>, vector<80x128xf32>
    %cst_85 = arith.constant dense<0.000000e+00> : vector<64x128xf32>
    %118 = tpu.matmul %116, %117, %cst_85 {dimension_numbers = #tpu.dot_dimension_numbers<[1], [0], [0], [1], [0, 0, 1, 1], [], []>} : vector<64x80xf32>, vector<80x128xf32>, vector<64x128xf32> -> vector<64x128xf32>
    %c2_86 = arith.constant 2 : index
    %c0_87 = arith.constant 0 : index
    %c0_88 = arith.constant 0 : index
    %119 = vector.load %arg7[%c2_86, %c0_87, %c0_88] : memref<3x64x1xf32, #tpu.memory_space<vmem>>, vector<1x64x1xf32>
    %120 = vector.shape_cast %119 : vector<1x64x1xf32> to vector<64x1xf32>
    %121 = vector.broadcast %120 : vector<64x1xf32> to vector<64x128xf32>
    %122 = arith.addf %118, %121 : vector<64x128xf32>
    %123 = vector.extract_strided_slice %122 {offsets = [0, 0], sizes = [32, 128], strides = [1, 1]} : vector<64x128xf32> to vector<32x128xf32>
    %124 = math.tanh %123 : vector<32x128xf32>
    %125 = vector.extract_strided_slice %122 {offsets = [32, 0], sizes = [32, 128], strides = [1, 1]} : vector<64x128xf32> to vector<32x128xf32>
    %126 = arith.negf %125 : vector<32x128xf32>
    %127 = math.exp %126 : vector<32x128xf32>
    %cst_89 = arith.constant 1.000000e+00 : f32
    %128 = vector.broadcast %cst_89 : f32 to vector<32x128xf32>
    %129 = arith.addf %128, %127 : vector<32x128xf32>
    %130 = arith.divf %128, %129 : vector<32x128xf32>
    %131 = arith.mulf %124, %130 : vector<32x128xf32>
    %c2_90 = arith.constant 2 : index
    %c0_91 = arith.constant 0 : index
    %c0_92 = arith.constant 0 : index
    %132 = vector.load %arg8[%c2_90, %c0_91, %c0_92] : memref<3x32x32xf32, #tpu.memory_space<vmem>>, vector<1x32x32xf32>
    %133 = vector.shape_cast %132 : vector<1x32x32xf32> to vector<32x32xf32>
    %cst_93 = arith.constant dense<0.000000e+00> : vector<32x128xf32>
    %134 = tpu.matmul %133, %131, %cst_93 {dimension_numbers = #tpu.dot_dimension_numbers<[1], [0], [0], [1], [0, 0, 1, 1], [], []>} : vector<32x32xf32>, vector<32x128xf32>, vector<32x128xf32> -> vector<32x128xf32>
    %c2_94 = arith.constant 2 : index
    %c0_95 = arith.constant 0 : index
    %c0_96 = arith.constant 0 : index
    %135 = vector.load %arg9[%c2_94, %c0_95, %c0_96] : memref<3x32x1xf32, #tpu.memory_space<vmem>>, vector<1x32x1xf32>
    %136 = vector.shape_cast %135 : vector<1x32x1xf32> to vector<32x1xf32>
    %137 = vector.broadcast %136 : vector<32x1xf32> to vector<32x128xf32>
    %138 = arith.addf %134, %137 : vector<32x128xf32>
    %139 = vector.extract_strided_slice %138 {offsets = [16, 0], sizes = [16, 128], strides = [1, 1]} : vector<32x128xf32> to vector<16x128xf32>
    %140 = arith.addf %105, %139 : vector<16x128xf32>
    %c0_97 = arith.constant 0 : index
    %c0_98 = arith.constant 0 : index
    %141 = vector.load %arg10[%c0_97, %c0_98] : memref<16x16xf32, #tpu.memory_space<vmem>>, vector<16x16xf32>
    %cst_99 = arith.constant 0.000000e+00 : f32
    %142 = vector.broadcast %cst_99 : f32 to vector<16x128xf32>
    %143 = arith.maximumf %140, %142 : vector<16x128xf32>
    %cst_100 = arith.constant dense<0.000000e+00> : vector<16x128xf32>
    %144 = tpu.matmul %141, %143, %cst_100 {dimension_numbers = #tpu.dot_dimension_numbers<[1], [0], [0], [1], [0, 0, 1, 1], [], []>} : vector<16x16xf32>, vector<16x128xf32>, vector<16x128xf32> -> vector<16x128xf32>
    %c0_101 = arith.constant 0 : index
    %c0_102 = arith.constant 0 : index
    %145 = vector.load %arg11[%c0_101, %c0_102] : memref<16x1xf32, #tpu.memory_space<vmem>>, vector<16x1xf32>
    %146 = vector.broadcast %145 : vector<16x1xf32> to vector<16x128xf32>
    %147 = arith.addf %144, %146 : vector<16x128xf32>
    %cst_103 = arith.constant 0.000000e+00 : f32
    %148 = vector.broadcast %cst_103 : f32 to vector<16x128xf32>
    %149 = arith.maximumf %147, %148 : vector<16x128xf32>
    %c0_104 = arith.constant 0 : index
    %c0_105 = arith.constant 0 : index
    %150 = vector.load %arg12[%c0_104, %c0_105] : memref<2x16xf32, #tpu.memory_space<vmem>>, vector<2x16xf32>
    %cst_106 = arith.constant dense<0.000000e+00> : vector<2x128xf32>
    %151 = tpu.matmul %150, %149, %cst_106 {dimension_numbers = #tpu.dot_dimension_numbers<[1], [0], [0], [1], [0, 0, 1, 1], [], []>} : vector<2x16xf32>, vector<16x128xf32>, vector<2x128xf32> -> vector<2x128xf32>
    %c0_107 = arith.constant 0 : index
    %c0_108 = arith.constant 0 : index
    %152 = vector.load %arg13[%c0_107, %c0_108] : memref<2x1xf32, #tpu.memory_space<vmem>>, vector<2x1xf32>
    %153 = vector.broadcast %152 : vector<2x1xf32> to vector<2x128xf32>
    %154 = arith.addf %151, %153 : vector<2x128xf32>
    %c0_109 = arith.constant 0 : index
    %c0_110 = arith.constant 0 : index
    %c0_111 = arith.constant 0 : index
    %155 = vector.load %arg3[%c0_109, %c0_110, %c0_111] : memref<1x2x128xf32, #tpu.memory_space<vmem>>, vector<1x2x128xf32>
    %156 = vector.shape_cast %155 : vector<1x2x128xf32> to vector<2x128xf32>
    %157 = vector.extract_strided_slice %154 {offsets = [1, 0], sizes = [1, 128], strides = [1, 1]} : vector<2x128xf32> to vector<1x128xf32>
    %158 = math.exp %157 : vector<1x128xf32>
    %159 = vector.extract_strided_slice %156 {offsets = [0, 0], sizes = [1, 128], strides = [1, 1]} : vector<2x128xf32> to vector<1x128xf32>
    %160 = arith.mulf %159, %158 : vector<1x128xf32>
    %161 = vector.extract_strided_slice %154 {offsets = [0, 0], sizes = [1, 128], strides = [1, 1]} : vector<2x128xf32> to vector<1x128xf32>
    %162 = arith.addf %160, %161 : vector<1x128xf32>
    %163 = vector.extract_strided_slice %156 {offsets = [1, 0], sizes = [1, 128], strides = [1, 1]} : vector<2x128xf32> to vector<1x128xf32>
    %164 = vector.extract_strided_slice %154 {offsets = [1, 0], sizes = [1, 128], strides = [1, 1]} : vector<2x128xf32> to vector<1x128xf32>
    %165 = arith.addf %163, %164 : vector<1x128xf32>
    %166 = tpu.concatenate %162, %165 in 0 : vector<1x128xf32>, vector<1x128xf32> -> vector<2x128xf32>
    %c0_112 = arith.constant 0 : index
    %c0_113 = arith.constant 0 : index
    %c0_114 = arith.constant 0 : index
    %167 = vector.load %arg15[%c0_112, %c0_113, %c0_114] : memref<1x2x128xf32, #tpu.memory_space<vmem>>, vector<1x2x128xf32>
    %168 = vector.shape_cast %167 : vector<1x2x128xf32> to vector<2x128xf32>
    %169 = vector.shape_cast %166 : vector<2x128xf32> to vector<1x2x128xf32>
    tpu.vector_store %arg15[%c0_112, %c0_113, %c0_114], %169 {strides = array<i32>} : memref<1x2x128xf32, #tpu.memory_space<vmem>>, vector<1x2x128xf32>,
    %cst_115 = arith.constant 0.000000e+00 : f32
    %170 = vector.broadcast %cst_115 : f32 to vector<2x1xf32>
    %171 = vector.extract_strided_slice %154 {offsets = [0, 0], sizes = [2, 127], strides = [1, 1]} : vector<2x128xf32> to vector<2x127xf32>
    %172 = tpu.concatenate %170, %171 in 1 : vector<2x1xf32>, vector<2x127xf32> -> vector<2x128xf32>
    %c1_i32 = arith.constant 1 : i32
    %173 = vector.broadcast %c1_i32 : i32 to vector<1x128xi32>
    %174 = arith.cmpi sge, %2, %173 : vector<1x128xi32>
    %175 = vector.extract_strided_slice %172 {offsets = [1, 0], sizes = [1, 128], strides = [1, 1]} : vector<2x128xf32> to vector<1x128xf32>
    %176 = math.exp %175 : vector<1x128xf32>
    %177 = arith.mulf %1, %176 : vector<1x128xf32>
    %178 = vector.extract_strided_slice %172 {offsets = [0, 0], sizes = [1, 128], strides = [1, 1]} : vector<2x128xf32> to vector<1x128xf32>
    %179 = arith.addf %177, %178 : vector<1x128xf32>
    %cst_116 = arith.constant 0.000000e+00 : f32
    %180 = vector.broadcast %cst_116 : f32 to vector<1x128xf32>
    %181 = arith.select %174, %179, %180 : vector<1x128xi1>, vector<1x128xf32>
    %c0_117 = arith.constant 0 : index
    %c0_118 = arith.constant 0 : index
    %c0_119 = arith.constant 0 : index
    %182 = vector.load %arg14[%c0_117, %c0_118, %c0_119] : memref<1x1x128xf32, #tpu.memory_space<vmem>>, vector<1x1x128xf32>
    %183 = vector.shape_cast %182 : vector<1x1x128xf32> to vector<1x128xf32>
    %184 = vector.shape_cast %181 : vector<1x128xf32> to vector<1x1x128xf32>
    tpu.vector_store %arg14[%c0_117, %c0_118, %c0_119], %184 {strides = array<i32>} : memref<1x1x128xf32, #tpu.memory_space<vmem>>, vector<1x1x128xf32>,
    return
  }
  func.func @transform_0(%arg0: i32) -> (i32, i32, i32) {
    %c0_i32 = arith.constant 0 : i32
    %c0_i32_0 = arith.constant 0 : i32
    %c0_i32_1 = arith.constant 0 : i32
    return %arg0, %c0_i32, %c0_i32_0 : i32, i32, i32
  }
  func.func @transform_1(%arg0: i32) -> (i32, i32, i32) {
    %c0_i32 = arith.constant 0 : i32
    %c0_i32_0 = arith.constant 0 : i32
    %c0_i32_1 = arith.constant 0 : i32
    return %arg0, %c0_i32, %c0_i32_0 : i32, i32, i32
  }
  func.func @transform_2(%arg0: i32) -> (i32, i32, i32) {
    %c0_i32 = arith.constant 0 : i32
    %c0_i32_0 = arith.constant 0 : i32
    %c0_i32_1 = arith.constant 0 : i32
    return %arg0, %c0_i32, %c0_i32_0 : i32, i32, i32
  }
  func.func @transform_3(%arg0: i32) -> (i32, i32) {
    %c0_i32 = arith.constant 0 : i32
    %c0_i32_0 = arith.constant 0 : i32
    %c0_i32_1 = arith.constant 0 : i32
    return %c0_i32, %c0_i32_0 : i32, i32
  }
  func.func @transform_4(%arg0: i32) -> (i32, i32) {
    %c0_i32 = arith.constant 0 : i32
    %c0_i32_0 = arith.constant 0 : i32
    %c0_i32_1 = arith.constant 0 : i32
    return %c0_i32, %c0_i32_0 : i32, i32
  }
  func.func @transform_5(%arg0: i32) -> (i32, i32, i32) {
    %c0_i32 = arith.constant 0 : i32
    %c0_i32_0 = arith.constant 0 : i32
    %c0_i32_1 = arith.constant 0 : i32
    %c0_i32_2 = arith.constant 0 : i32
    return %c0_i32, %c0_i32_0, %c0_i32_1 : i32, i32, i32
  }
  func.func @transform_6(%arg0: i32) -> (i32, i32, i32) {
    %c0_i32 = arith.constant 0 : i32
    %c0_i32_0 = arith.constant 0 : i32
    %c0_i32_1 = arith.constant 0 : i32
    %c0_i32_2 = arith.constant 0 : i32
    return %c0_i32, %c0_i32_0, %c0_i32_1 : i32, i32, i32
  }
  func.func @transform_7(%arg0: i32) -> (i32, i32, i32) {
    %c0_i32 = arith.constant 0 : i32
    %c0_i32_0 = arith.constant 0 : i32
    %c0_i32_1 = arith.constant 0 : i32
    %c0_i32_2 = arith.constant 0 : i32
    return %c0_i32, %c0_i32_0, %c0_i32_1 : i32, i32, i32
  }
  func.func @transform_8(%arg0: i32) -> (i32, i32, i32) {
    %c0_i32 = arith.constant 0 : i32
    %c0_i32_0 = arith.constant 0 : i32
    %c0_i32_1 = arith.constant 0 : i32
    %c0_i32_2 = arith.constant 0 : i32
    return %c0_i32, %c0_i32_0, %c0_i32_1 : i32, i32, i32
  }
  func.func @transform_9(%arg0: i32) -> (i32, i32) {
    %c0_i32 = arith.constant 0 : i32
    %c0_i32_0 = arith.constant 0 : i32
    %c0_i32_1 = arith.constant 0 : i32
    return %c0_i32, %c0_i32_0 : i32, i32
  }
  func.func @transform_10(%arg0: i32) -> (i32, i32) {
    %c0_i32 = arith.constant 0 : i32
    %c0_i32_0 = arith.constant 0 : i32
    %c0_i32_1 = arith.constant 0 : i32
    return %c0_i32, %c0_i32_0 : i32, i32
  }
  func.func @transform_11(%arg0: i32) -> (i32, i32) {
    %c0_i32 = arith.constant 0 : i32
    %c0_i32_0 = arith.constant 0 : i32
    %c0_i32_1 = arith.constant 0 : i32
    return %c0_i32, %c0_i32_0 : i32, i32
  }
  func.func @transform_12(%arg0: i32) -> (i32, i32) {
    %c0_i32 = arith.constant 0 : i32
    %c0_i32_0 = arith.constant 0 : i32
    %c0_i32_1 = arith.constant 0 : i32
    return %c0_i32, %c0_i32_0 : i32, i32
  }
  func.func @transform_13(%arg0: i32) -> (i32, i32, i32) {
    %c0_i32 = arith.constant 0 : i32
    %c0_i32_0 = arith.constant 0 : i32
    %c0_i32_1 = arith.constant 0 : i32
    return %arg0, %c0_i32, %c0_i32_0 : i32, i32, i32
  }
  func.func @transform_14(%arg0: i32) -> (i32, i32, i32) {
    %c0_i32 = arith.constant 0 : i32
    %c0_i32_0 = arith.constant 0 : i32
    %c0_i32_1 = arith.constant 0 : i32
    return %arg0, %c0_i32, %c0_i32_0 : i32, i32, i32
  }
}

module attributes {stable_mosaic.version = 11 : i64} {
  func.func @_conv1x1_kernel(%arg0: i32, %arg1: memref<1x2x128xf32, #tpu.memory_space<vmem>>, %arg2: memref<1x2xf32, #tpu.memory_space<vmem>>, %arg3: memref<1x1xf32, #tpu.memory_space<vmem>>, %arg4: memref<1x1x128xf32, #tpu.memory_space<vmem>>) attributes {dimension_semantics = [#tpu.dimension_semantics<parallel>], iteration_bounds = array<i64: 2>, scalar_prefetch = 0 : i64, scratch_operands = 0 : i64, tpu.core_type = #tpu.core_type<tc>, window_params = [{transform_indices = @transform_0, window_bounds = array<i64: 1, 2, 128>}, {pipeline_mode = #tpu.pipeline_mode<synchronous>, transform_indices = @transform_1, window_bounds = array<i64: 1, 2>}, {pipeline_mode = #tpu.pipeline_mode<synchronous>, transform_indices = @transform_2, window_bounds = array<i64: 1, 1>}, {transform_indices = @transform_3, window_bounds = array<i64: 1, 1, 128>}]} {
    %c0 = arith.constant 0 : index
    %c0_0 = arith.constant 0 : index
    %c0_1 = arith.constant 0 : index
    %0 = vector.load %arg1[%c0, %c0_0, %c0_1] : memref<1x2x128xf32, #tpu.memory_space<vmem>>, vector<1x2x128xf32>
    %1 = vector.shape_cast %0 : vector<1x2x128xf32> to vector<2x128xf32>
    %c0_2 = arith.constant 0 : index
    %c0_3 = arith.constant 0 : index
    %2 = vector.load %arg2[%c0_2, %c0_3] : memref<1x2xf32, #tpu.memory_space<vmem>>, vector<1x2xf32>
    %cst = arith.constant dense<0.000000e+00> : vector<1x128xf32>
    %3 = tpu.matmul %2, %1, %cst {dimension_numbers = #tpu.dot_dimension_numbers<[1], [0], [0], [1], [0, 0, 1, 1], [], []>} : vector<1x2xf32>, vector<2x128xf32>, vector<1x128xf32> -> vector<1x128xf32>
    %c0_4 = arith.constant 0 : index
    %c0_5 = arith.constant 0 : index
    %4 = vector.load %arg3[%c0_4, %c0_5] : memref<1x1xf32, #tpu.memory_space<vmem>>, vector<1x1xf32>
    %5 = vector.broadcast %4 : vector<1x1xf32> to vector<1x128xf32>
    %6 = arith.addf %3, %5 : vector<1x128xf32>
    %c0_6 = arith.constant 0 : index
    %c0_7 = arith.constant 0 : index
    %c0_8 = arith.constant 0 : index
    %7 = vector.load %arg4[%c0_6, %c0_7, %c0_8] : memref<1x1x128xf32, #tpu.memory_space<vmem>>, vector<1x1x128xf32>
    %8 = vector.shape_cast %7 : vector<1x1x128xf32> to vector<1x128xf32>
    %9 = vector.shape_cast %6 : vector<1x128xf32> to vector<1x1x128xf32>
    tpu.vector_store %arg4[%c0_6, %c0_7, %c0_8], %9 {strides = array<i32>} : memref<1x1x128xf32, #tpu.memory_space<vmem>>, vector<1x1x128xf32>,
    return
  }
  func.func @transform_0(%arg0: i32) -> (i32, i32, i32) {
    %c0_i32 = arith.constant 0 : i32
    %c0_i32_0 = arith.constant 0 : i32
    %c0_i32_1 = arith.constant 0 : i32
    return %arg0, %c0_i32, %c0_i32_0 : i32, i32, i32
  }
  func.func @transform_1(%arg0: i32) -> (i32, i32) {
    %c0_i32 = arith.constant 0 : i32
    %c0_i32_0 = arith.constant 0 : i32
    %c0_i32_1 = arith.constant 0 : i32
    return %c0_i32, %c0_i32_0 : i32, i32
  }
  func.func @transform_2(%arg0: i32) -> (i32, i32) {
    %c0_i32 = arith.constant 0 : i32
    %c0_i32_0 = arith.constant 0 : i32
    %c0_i32_1 = arith.constant 0 : i32
    return %c0_i32, %c0_i32_0 : i32, i32
  }
  func.func @transform_3(%arg0: i32) -> (i32, i32, i32) {
    %c0_i32 = arith.constant 0 : i32
    %c0_i32_0 = arith.constant 0 : i32
    %c0_i32_1 = arith.constant 0 : i32
    return %arg0, %c0_i32, %c0_i32_0 : i32, i32, i32
  }
}

</mosaic_0001>

<llo_original>
// kernel: tpu_custom_call.1
$region0: #{tpu_custom_call.1}
  #allocation0 [shape = 'u32[]', space=smem, size = 0x4, offset = 0x4, fixed_abs, tag = 'smem constant byte address 0x4 - core index']
  #allocation1 [shape = 'u32[144,128]{1,0:T(1,128)}', space=vmem, size = 0x12000, scoped, tag = 'internal scratch']
  %s0 = inlined_call_operand.hbm [shape: f32[1,256], index: 0, kind: input, shape index: {}]
  %s1 = inlined_call_operand.hbm [shape: f32[1,256], index: 1, kind: output, shape index: {}]
  %s2 = sld [smem:[#allocation0]]
  $region18: #{tpu_custom_call.1} parent=0
    _
  %s4 = ssub.s32 1, %s2
  %s5 = scalar_select 0, %s4, %s2
  $region1: #{tpu_custom_call.1} parent=0
    #allocation2 [shape = 'u8[1024]{0}', space=vmem, size = 0x400, scoped, tag = 'input window, operand 0, single buffered']
    #allocation3 [shape = 's32[1]{0}', space=sflag, size = 0x4, scoped, tag = 'scoped memory for tpu_custom_call.1']
    #allocation4 [shape = 's32[1]{0}', space=sflag, size = 0x4, scoped, tag = 'scoped memory for tpu_custom_call.1']
    #allocation5 [shape = 'u8[1024]{0}', space=vmem, size = 0x400, scoped, tag = 'output window, operand 0, single buffered']
    %6 = vsyncpa [#allocation3], 0
    %7 = vsyncpa [#allocation4], 0
    // Predicated region
    $region2: #{tpu_custom_call.1} parent=1 // pred_check
      _
    $region3: #{tpu_custom_call.1} parent=1 // pred_check_branch
      %9 = sbr.rel (0) target = $region5
    $region4: #{tpu_custom_call.1} parent=1 // pred_region
      %s11 = ssub.s32 32, 32
      %12 = vsyncadd [#allocation3], %s11
      %s14 = sshll.u32 [#allocation2], 4
      %s15 = int_to_ptr.vmem [resolvable:$true] %s14
      %17 = dma.hbm_to_vmem [thread:$0]  %s0, 32, %s15, [#allocation3]
    $region5: #{tpu_custom_call.1} parent=1 // pred_fallthru
      _
    // Predicated region
    $region6: #{tpu_custom_call.1} parent=1 // pred_check
      _
    $region7: #{tpu_custom_call.1} parent=1 // pred_check_branch
      %19 = sbr.rel (0) target = $region9
    $region8: #{tpu_custom_call.1} parent=1 // pred_region
      %20 = dma.done [#allocation3], 32
    $region9: #{tpu_custom_call.1} parent=1 // pred_fallthru
      _
    %v21 = vld [vmem:[#allocation2] sm:$0x3]
    %v23 = vlaneseq
    %v24 = vshrl.u32 %v23, 7
    %v25 = vsub.s32 0, %v24
    %v26 = vrot.slane %v21, %v25
    %v27 = vlaneseq
    %v28 = vshrl.u32 %v27, 7
    %v29 = vsub.s32 1, %v28
    %v30 = vrot.slane %v21, %v29
    %33 = vrot.lane.b32.xlu0 %v26, 1
    %v34 = vpop.permute.xlu0 %33
    %35 = vrot.lane.b32.xlu0 %v30, 1
    %v36 = vpop.permute.xlu0 %35
    %v37 = vlaneseq
    %v38 = vand.u32 %v37, 127
    %vm39 = vcmp.lt.s32.totalorder %v38, 1
    %v40 = vsel %vm39, %v34, %v36
    %v41 = vsel %vm39, %v36, %v34
    %v44 = vcombine.low %v41, %v40
    %v46 = vunpack.c.l.s4 1966171168
    %v47 = vunpack.c.0.s8 %v46
    %v48 = vlaneseq
    %v49 = vshrl.u32 %v48, 7
    %v50 = vsub.s32 %v47, %v49
    %v51 = vrot.slane %v44, %v50
    %v53 = vunpack.c.l.s4 1966171168
    %v54 = vunpack.c.0.s8 %v53
    %v55 = vlaneseq
    %v56 = vshrl.u32 %v55, 7
    %v57 = vsub.s32 %v54, %v56
    %v58 = vrot.slane %v51, %v57
    %v60 = vlaneseq
    %vm61 = vcmp.ge.s32.totalorder %v60, 0
    %vm62 = vcmp.lt.s32.totalorder %v60, 256
    %vm63 = vmand %vm61, %vm62
    %64 = vst.msk [vmem:[#allocation5] sm:$0x3] %vm63, %v58
    // Predicated region
    $region10: #{tpu_custom_call.1} parent=1 // pred_check
      _
    $region11: #{tpu_custom_call.1} parent=1 // pred_check_branch
      %66 = sbr.rel (0) target = $region13
    $region12: #{tpu_custom_call.1} parent=1 // pred_region
      %s68 = ssub.s32 32, 32
      %69 = vsyncadd [#allocation4], %s68
      %s71 = sshll.u32 [#allocation5], 4
      %s72 = int_to_ptr.vmem [resolvable:$true] %s71
      %74 = dma.vmem_to_hbm [thread:$0]  %s72, 32, %s1, [#allocation4]
    $region13: #{tpu_custom_call.1} parent=1 // pred_fallthru
      _
    // Predicated region
    $region14: #{tpu_custom_call.1} parent=1 // pred_check
      _
    $region15: #{tpu_custom_call.1} parent=1 // pred_check_branch
      %76 = sbr.rel (0) target = $region17
    $region16: #{tpu_custom_call.1} parent=1 // pred_region
      %77 = dma.done [#allocation4], 32
    $region17: #{tpu_custom_call.1} parent=1 // pred_fallthru
      _
    %78 = vsyncpa [#allocation3], 1
    %79 = vsyncpa [#allocation4], 1

// kernel: wavenet_iaf_forward.3
$region0: #{wavenet_iaf_forward.3}
  #allocation0 [shape = 'u32[]', space=smem, size = 0x4, offset = 0x4, fixed_abs, tag = 'smem constant byte address 0x4 - core index']
  #allocation1 [shape = 'u32[144,128]{1,0:T(1,128)}', space=vmem, size = 0x12000, scoped, tag = 'internal scratch']
  #allocation2 [shape = 'f32[1,1]{1,0:T(1,128)S(1)}', space=vmem, size = 0x200, scoped, tag = 'scoped memory for wavenet_iaf_forward.3']
  %s0 = inlined_call_operand.vmem [shape: f32[2,2,128], index: 0, kind: input, shape index: {}]
  %s1 = inlined_call_operand.vmem [shape: f32[1,2], index: 1, kind: input, shape index: {}]
  %s2 = inlined_call_operand.<no memory space> [shape: f32[1,1], index: 2, kind: input, shape index: {}]
  %s3 = inlined_call_operand.vmem [shape: f32[2,1,128], index: 3, kind: output, shape index: {}]
  %s4 = sld [smem:[#allocation0]]
  $region45: #{wavenet_iaf_forward.3} parent=0
    _
  %s6 = ssub.s32 1, %s4
  %s7 = scalar_select 0, %s6, %s4
  %v8 = vstv %s2
  %9 = vst [vmem:[#allocation2] sm:$0x1] %v8
  loop: start=0, step=1, limit=4
  $region2: #{wavenet_iaf_forward.3} parent=0 // loop_pre_header
    _
  $region3: #{wavenet_iaf_forward.3} parent=0 // loop_header
    %s11 = sphi 0, %s15
    %p12 = scmp.ge.s32.totalorder %s11, 4
    %s21 = sphi 0, %s23
    %s24 = sphi 0, %s21
    %s25 = sphi 0, %s24
    %s41 = sphi 0, %s25
    %s45 = sphi 0, %s45
    %s47 = sphi 0, %s45
    %s48 = sphi 0, %s47
    %s62 = sphi 0, %s48
    %s66 = sphi 0, %s66
    %s68 = sphi 0, %s66
    %s69 = sphi 0, %s68
    %s83 = sphi 0, %s69
    %s89 = sphi 0, %s91
    %s92 = sphi 0, %s89
    %s93 = sphi 0, %s92
    %s109 = sphi 0, %s93
  $region4: #{wavenet_iaf_forward.3} parent=0 // loop_header_branch
    %14 = sbr.rel (%p12) target = $region8
  $region5: #{wavenet_iaf_forward.3} parent=0 // loop_body
    %s16 = ssub.s32 %s11, 1
    %s17 = ssub.s32 %s11, 2
    %s18 = sadd.s32 %s11, 1
    %s19 = ssub.s32 %s11, %s18
    %p20 = scmp.eq.s32.totalorder %s19, 0
    %s22 = sadd.s32 %s21, 1
    %s23 = scalar_select %p20, %s21, %s22
    %p26 = pneg %p20
    %p27 = scmp.eq.s32.totalorder %s11, 1
    %p28 = por %p26, %p27
    %p29 = scmp.ne.s32.totalorder %s21, %s24
    %p30 = scmp.eq.s32.totalorder %s11, 0
    %p31 = por %p29, %p30
    %p32 = scmp.ne.s32.totalorder %s21, %s24
    %p33 = scmp.eq.s32.totalorder %s16, 1
    %p34 = por %p32, %p33
    %p35 = scmp.ne.s32.totalorder %s24, %s25
    %p36 = scmp.eq.s32.totalorder %s16, 0
    %p37 = por %p35, %p36
    %p38 = scmp.ne.s32.totalorder %s24, %s25
    %p39 = scmp.eq.s32.totalorder %s17, 1
    %p40 = por %p38, %p39
    %p42 = scmp.ne.s32.totalorder %s25, %s41
    %p43 = scmp.eq.s32.totalorder %s17, 0
    %p44 = por %p42, %p43
    %s46 = sadd.s32 %s45, 1
    %p49 = scmp.eq.s32.totalorder %s11, 1
    %p50 = scmp.ne.s32.totalorder %s45, %s47
    %p51 = scmp.eq.s32.totalorder %s11, 0
    %p52 = por %p50, %p51
    %p53 = scmp.ne.s32.totalorder %s45, %s47
    %p54 = scmp.eq.s32.totalorder %s16, 1
    %p55 = por %p53, %p54
    %p56 = scmp.ne.s32.totalorder %s47, %s48
    %p57 = scmp.eq.s32.totalorder %s16, 0
    %p58 = por %p56, %p57
    %p59 = scmp.ne.s32.totalorder %s47, %s48
    %p60 = scmp.eq.s32.totalorder %s17, 1
    %p61 = por %p59, %p60
    %p63 = scmp.ne.s32.totalorder %s48, %s62
    %p64 = scmp.eq.s32.totalorder %s17, 0
    %p65 = por %p63, %p64
    %s67 = sadd.s32 %s66, 1
    %p70 = scmp.eq.s32.totalorder %s11, 1
    %p71 = scmp.ne.s32.totalorder %s66, %s68
    %p72 = scmp.eq.s32.totalorder %s11, 0
    %p73 = por %p71, %p72
    %p74 = scmp.ne.s32.totalorder %s66, %s68
    %p75 = scmp.eq.s32.totalorder %s16, 1
    %p76 = por %p74, %p75
    %p77 = scmp.ne.s32.totalorder %s68, %s69
    %p78 = scmp.eq.s32.totalorder %s16, 0
    %p79 = por %p77, %p78
    %p80 = scmp.ne.s32.totalorder %s68, %s69
    %p81 = scmp.eq.s32.totalorder %s17, 1
    %p82 = por %p80, %p81
    %p84 = scmp.ne.s32.totalorder %s69, %s83
    %p85 = scmp.eq.s32.totalorder %s17, 0
    %p86 = por %p84, %p85
    %s87 = ssub.s32 %s11, %s18
    %p88 = scmp.eq.s32.totalorder %s87, 0
    %s90 = sadd.s32 %s89, 1
    %s91 = scalar_select %p88, %s89, %s90
    %p94 = pneg %p88
    %p95 = scmp.eq.s32.totalorder %s11, 1
    %p96 = por %p94, %p95
    %p97 = scmp.ne.s32.totalorder %s89, %s92
    %p98 = scmp.eq.s32.totalorder %s11, 0
    %p99 = por %p97, %p98
    %p100 = scmp.ne.s32.totalorder %s89, %s92
    %p101 = scmp.eq.s32.totalorder %s16, 1
    %p102 = por %p100, %p101
    %p103 = scmp.ne.s32.totalorder %s92, %s93
    %p104 = scmp.eq.s32.totalorder %s16, 0
    %p105 = por %p103, %p104
    %p106 = scmp.ne.s32.totalorder %s92, %s93
    %p107 = scmp.eq.s32.totalorder %s17, 1
    %p108 = por %p106, %p107
    %p110 = scmp.ne.s32.totalorder %s93, %s109
    %p111 = scmp.eq.s32.totalorder %s17, 0
    %p112 = por %p110, %p111
    %p113 = scmp.le.s32.totalorder 1, %s11
    %p114 = scmp.lt.s32.totalorder %s11, 3
    %p115 = pnand %p113, %p114
    %p116 = pneg %p115
    // Predicated region
    $region9: #{wavenet_iaf_forward.3} parent=5 // pred_check
      _
    $region10: #{wavenet_iaf_forward.3} parent=5 // pred_check_branch
      %118 = sbr.rel (%p115) target = $region12
    $region11: #{wavenet_iaf_forward.3} parent=5 // pred_region
      %s119 = ssub.s32 %s11, 1
      // Predicated region
      $region13: #{wavenet_iaf_forward.3} parent=11 // pred_check
        %p120 = pneg %p58
      $region14: #{wavenet_iaf_forward.3} parent=11 // pred_check_branch
        %122 = sbr.rel (%p120) target = $region16
      $region15: #{wavenet_iaf_forward.3} parent=11 // pred_region
        _
      $region16: #{wavenet_iaf_forward.3} parent=11 // pred_fallthru
        _
      // Predicated region
      $region17: #{wavenet_iaf_forward.3} parent=11 // pred_check
        %p123 = pneg %p79
      $region18: #{wavenet_iaf_forward.3} parent=11 // pred_check_branch
        %125 = sbr.rel (%p123) target = $region20
      $region19: #{wavenet_iaf_forward.3} parent=11 // pred_region
        _
      $region20: #{wavenet_iaf_forward.3} parent=11 // pred_fallthru
        _
    $region12: #{wavenet_iaf_forward.3} parent=5 // pred_fallthru
      _
    %p126 = scmp.lt.s32.totalorder %s11, 2
    // Predicated region
    $region21: #{wavenet_iaf_forward.3} parent=5 // pred_check
      %p127 = pneg %p126
    $region22: #{wavenet_iaf_forward.3} parent=5 // pred_check_branch
      %129 = sbr.rel (%p127) target = $region24
    $region23: #{wavenet_iaf_forward.3} parent=5 // pred_region
      // Predicated region
      $region25: #{wavenet_iaf_forward.3} parent=23 // pred_check
        %p130 = pneg %p31
      $region26: #{wavenet_iaf_forward.3} parent=23 // pred_check_branch
        %132 = sbr.rel (%p130) target = $region28
      $region27: #{wavenet_iaf_forward.3} parent=23 // pred_region
        %p133 = scmp.lt.s32.totalorder %s11, 1
        %s134 = scalar_select %p133, %s11, 1
        %s135 = smul.addr %s134, 2
        %s136 = scalar_lea.vmem %s0, %s135
      $region28: #{wavenet_iaf_forward.3} parent=23 // pred_fallthru
        _
    $region24: #{wavenet_iaf_forward.3} parent=5 // pred_fallthru
      _
    %p137 = scmp.le.s32.totalorder 1, %s11
    %p138 = scmp.lt.s32.totalorder %s11, 3
    %p139 = pnand %p137, %p138
    %p140 = pneg %p139
    // Predicated region
    $region29: #{wavenet_iaf_forward.3} parent=5 // pred_check
      _
    $region30: #{wavenet_iaf_forward.3} parent=5 // pred_check_branch
      %142 = sbr.rel (%p139) target = $region32
    $region31: #{wavenet_iaf_forward.3} parent=5 // pred_region
      %s143 = ssub.s32 %s11, 1
      %p144 = scmp.lt.s32.totalorder %s16, 1
      %s145 = scalar_select %p144, %s16, 1
      %s146 = smul.addr %s145, 2
      %s147 = scalar_lea.vmem %s0, %s146
      %p148 = pneg %p37
      %p149 = pneg %p34
      %p150 = pneg %p58
      %p151 = pneg %p55
      %p152 = pneg %p79
      %p153 = pneg %p76
      %p154 = pneg %p105
      %p155 = pneg %p102
      %p156 = scmp.lt.s32.totalorder %s16, 1
      %s157 = scalar_select %p156, %s16, 1
      %s158 = scalar_lea.vmem %s3, %s157
      %p159 = scmp.lt.s32.totalorder %s16, 1
      %s160 = scalar_select %p159, %s16, 1
      %s161 = smul.addr %s160, 2
      %s162 = scalar_lea.vmem %s0, %s161
      %p163 = scmp.lt.s32.totalorder %s16, 1
      %s164 = scalar_select %p163, %s16, 1
      %s165 = scalar_lea.vmem %s3, %s164
      %v166 = vld [vmem:[%s162] sm:$0x3]
      %v167 = vld [vmem:[%s1] sm:$0x1]
      %v168 = vld [vmem:[#allocation2] sm:$0x1]
      %170 = vset.pattern.permute.xlu0 0
      %171 = vperm.xlu0 %170, %v168
      %v172 = vpop.permute.xlu0 %171
      %v174 = vlaneseq
      %v175 = vshrl.u32 %v174, 7
      %v176 = vsub.s32 0, %v175
      %v177 = vrot.slane %v172, %v176
      %vm178 = vcmask 15360
      %v180 = vsel %vm178, %v167, 0
      %vm182 = vcmask 1041408
      %v184 = vsel %vm182, %v166, 0
      %186 = vmatprep.subr.mxu0 0.0
      %187 = vmatpush1.msra.mxu0 %v184
      %188 = vmatprep.subr.mxu0 0.0
      %189 = vmatpush1.msra.mxu0 0.0
      %190 = vmatprep.subr.mxu0 0.0
      %191 = vmatpush1.msra.mxu0 0.0
      %192 = vmatprep.subr.mxu0 0.0
      %193 = vmatpush1.msra.mxu0 0.0
      %194 = vmatprep.subr.mxu0 0.0
      %195 = vmatpush1.msra.mxu0 0.0
      %196 = vmatprep.subr.mxu0 0.0
      %197 = vmatpush1.msra.mxu0 0.0
      %198 = vmatprep.subr.mxu0 0.0
      %199 = vmatpush1.msra.mxu0 0.0
      %200 = vmatprep.subr.mxu0 0.0
      %201 = vmatpush1.msra.mxu0 0.0
      %202 = vmatprep.subr.mxu0 0.0
      %203 = vmatpush1.msra.mxu0 0.0
      %204 = vmatprep.subr.mxu0 0.0
      %205 = vmatpush1.msra.mxu0 0.0
      %206 = vmatprep.subr.mxu0 0.0
      %207 = vmatpush1.msra.mxu0 0.0
      %208 = vmatprep.subr.mxu0 0.0
      %209 = vmatpush1.msra.mxu0 0.0
      %210 = vmatprep.subr.mxu0 0.0
      %211 = vmatpush1.msra.mxu0 0.0
      %212 = vmatprep.subr.mxu0 0.0
      %213 = vmatpush1.msra.mxu0 0.0
      %214 = vmatprep.subr.mxu0 0.0
      %215 = vmatpush1.msra.mxu0 0.0
      %216 = vmatprep.subr.mxu0 0.0
      %217 = vmatpush1.msra.mxu0 0.0
      %218 = vmatprep.subr.mxu0 0.0
      %219 = vmatpush1.msra.mxu0 0.0
      %220 = vmatprep.subr.mxu0 0.0
      %221 = vmatpush1.msra.mxu0 0.0
      %222 = vmatprep.subr.mxu0 0.0
      %223 = vmatpush1.msra.mxu0 0.0
      %224 = vmatprep.subr.mxu0 0.0
      %225 = vmatpush1.msra.mxu0 0.0
      %226 = vmatprep.subr.mxu0 0.0
      %227 = vmatpush1.msra.mxu0 0.0
      %228 = vmatprep.subr.mxu0 0.0
      %229 = vmatpush1.msra.mxu0 0.0
      %230 = vmatprep.subr.mxu0 0.0
      %231 = vmatpush1.msra.mxu0 0.0
      %232 = vmatprep.subr.mxu0 0.0
      %233 = vmatpush1.msra.mxu0 0.0
      %234 = vmatprep.subr.mxu0 0.0
      %235 = vmatpush1.msra.mxu0 0.0
      %236 = vmatprep.subr.mxu0 0.0
      %237 = vmatpush1.msra.mxu0 0.0
      %238 = vmatprep.subr.mxu0 0.0
      %239 = vmatpush1.msra.mxu0 0.0
      %240 = vmatprep.subr.mxu0 0.0
      %241 = vmatpush1.msra.mxu0 0.0
      %242 = vmatprep.subr.mxu0 0.0
      %243 = vmatpush1.msra.mxu0 0.0
      %244 = vmatprep.subr.mxu0 0.0
      %245 = vmatpush1.msra.mxu0 0.0
      %246 = vmatprep.subr.mxu0 0.0
      %247 = vmatpush1.msra.mxu0 0.0
      %248 = vmatprep.subr.mxu0 0.0
      %249 = vmatpush1.msra.mxu0 0.0
      %250 = vmatprep.mubr.f32.mxu0 0.0
      %251 = vmatmul.mubr.f32.gmra.mrb[0].mxu0 %v180
      %v252 = vpop.f32.mrb[0].mxu0
      %v253 = vadd.f32 %v177, %v252
      %v254 = vpop.f32.mrb[0].mxu0
      %255 = vdwg.mxu0
      %256 = vst [vmem:[%s165] sm:$0x1] %v253
      %p257 = scmp.lt.s32.totalorder %s16, 1
      %s258 = scalar_select %p257, %s16, 1
      %s259 = scalar_lea.vmem %s3, %s258
      // Predicated region
      $region33: #{wavenet_iaf_forward.3} parent=31 // pred_check
        %p260 = pneg %p102
      $region34: #{wavenet_iaf_forward.3} parent=31 // pred_check_branch
        %262 = sbr.rel (%p260) target = $region36
      $region35: #{wavenet_iaf_forward.3} parent=31 // pred_region
        _
      $region36: #{wavenet_iaf_forward.3} parent=31 // pred_fallthru
        _
    $region32: #{wavenet_iaf_forward.3} parent=5 // pred_fallthru
      _
    %p263 = scmp.le.s32.totalorder 2, %s11
    // Predicated region
    $region37: #{wavenet_iaf_forward.3} parent=5 // pred_check
      %p264 = pneg %p263
    $region38: #{wavenet_iaf_forward.3} parent=5 // pred_check_branch
      %266 = sbr.rel (%p264) target = $region40
    $region39: #{wavenet_iaf_forward.3} parent=5 // pred_region
      %s267 = ssub.s32 %s11, 2
      // Predicated region
      $region41: #{wavenet_iaf_forward.3} parent=39 // pred_check
        %p268 = pneg %p108
      $region42: #{wavenet_iaf_forward.3} parent=39 // pred_check_branch
        %270 = sbr.rel (%p268) target = $region44
      $region43: #{wavenet_iaf_forward.3} parent=39 // pred_region
        %p271 = scmp.lt.s32.totalorder %s17, 1
        %s272 = scalar_select %p271, %s17, 1
        %s273 = scalar_lea.vmem %s3, %s272
      $region44: #{wavenet_iaf_forward.3} parent=39 // pred_fallthru
        _
    $region40: #{wavenet_iaf_forward.3} parent=5 // pred_fallthru
      _
  $region6: #{wavenet_iaf_forward.3} parent=0 // loop_footer
    %s15 = sadd.s32 1, %s11
  $region7: #{wavenet_iaf_forward.3} parent=0 // loop_footer_branch
    %10 = sbr.rel target = $region3
  $region8: #{wavenet_iaf_forward.3} parent=0 // loop_exit
    _

// kernel: wavenet_iaf_forward.4
$region0: #{wavenet_iaf_forward.4}
  #allocation0 [shape = 'u32[]', space=smem, size = 0x4, offset = 0x4, fixed_abs, tag = 'smem constant byte address 0x4 - core index']
  #allocation1 [shape = 'u32[144,128]{1,0:T(1,128)}', space=vmem, size = 0x12000, scoped, tag = 'internal scratch']
  #allocation2 [shape = 'f32[80,128]{1,0:T(8,128)}', space=vmem, size = 0xa000, scoped, tag = 'scratch operand']
  %s0 = inlined_call_operand.vmem [shape: f32[2,1,128], index: 0, kind: input, shape index: {}, may-alias: {0,13}]
  %s1 = inlined_call_operand.vmem [shape: f32[2,32,128], index: 1, kind: input, shape index: {}]
  %s2 = inlined_call_operand.vmem [shape: f32[2,2,128], index: 2, kind: input, shape index: {}, may-alias: {2,14}]
  %s3 = inlined_call_operand.vmem [shape: f32[16,4], index: 3, kind: input, shape index: {}]
  %s4 = inlined_call_operand.vmem [shape: f32[16,1], index: 4, kind: input, shape index: {}]
  %s5 = inlined_call_operand.vmem [shape: f32[3,64,80], index: 5, kind: input, shape index: {}]
  %s6 = inlined_call_operand.vmem [shape: f32[3,64,1], index: 6, kind: input, shape index: {}]
  %s7 = inlined_call_operand.vmem [shape: f32[3,32,32], index: 7, kind: input, shape index: {}]
  %s8 = inlined_call_operand.vmem [shape: f32[3,32,1], index: 8, kind: input, shape index: {}]
  %s9 = inlined_call_operand.vmem [shape: f32[16,16], index: 9, kind: input, shape index: {}]
  %s10 = inlined_call_operand.vmem [shape: f32[16,1], index: 10, kind: input, shape index: {}]
  %s11 = inlined_call_operand.vmem [shape: f32[2,16], index: 11, kind: input, shape index: {}]
  %s12 = inlined_call_operand.vmem [shape: f32[2,1], index: 12, kind: input, shape index: {}]
  %s13 = inlined_call_operand.vmem [shape: f32[2,1,128], index: 13, kind: output, shape index: {0}, may-alias: {0,13}]
  %s14 = inlined_call_operand.vmem [shape: f32[2,2,128], index: 14, kind: output, shape index: {1}, may-alias: {2,14}]
  %15 = xla_tuple %s13, %s14
  %s16 = sld [smem:[#allocation0]]
  $region93: #{wavenet_iaf_forward.4} parent=0
    _
  %s18 = ssub.s32 1, %s16
  %s19 = scalar_select 0, %s18, %s16
  loop: start=0, step=1, limit=4
  $region2: #{wavenet_iaf_forward.4} parent=0 // loop_pre_header
    _
  $region3: #{wavenet_iaf_forward.4} parent=0 // loop_header
    %s21 = sphi 0, %s25
    %p22 = scmp.ge.s32.totalorder %s21, 4
    %s31 = sphi 0, %s33
    %s34 = sphi 0, %s31
    %s35 = sphi 0, %s34
    %s51 = sphi 0, %s35
    %s57 = sphi 0, %s59
    %s60 = sphi 0, %s57
    %s61 = sphi 0, %s60
    %s77 = sphi 0, %s61
    %s83 = sphi 0, %s85
    %s86 = sphi 0, %s83
    %s87 = sphi 0, %s86
    %s103 = sphi 0, %s87
    %s107 = sphi 0, %s107
    %s109 = sphi 0, %s107
    %s110 = sphi 0, %s109
    %s124 = sphi 0, %s110
    %s128 = sphi 0, %s128
    %s130 = sphi 0, %s128
    %s131 = sphi 0, %s130
    %s145 = sphi 0, %s131
    %s149 = sphi 0, %s149
    %s151 = sphi 0, %s149
    %s152 = sphi 0, %s151
    %s166 = sphi 0, %s152
    %s170 = sphi 0, %s170
    %s172 = sphi 0, %s170
    %s173 = sphi 0, %s172
    %s187 = sphi 0, %s173
    %s191 = sphi 0, %s191
    %s193 = sphi 0, %s191
    %s194 = sphi 0, %s193
    %s208 = sphi 0, %s194
    %s212 = sphi 0, %s212
    %s214 = sphi 0, %s212
    %s215 = sphi 0, %s214
    %s229 = sphi 0, %s215
    %s233 = sphi 0, %s233
    %s235 = sphi 0, %s233
    %s236 = sphi 0, %s235
    %s250 = sphi 0, %s236
    %s254 = sphi 0, %s254
    %s256 = sphi 0, %s254
    %s257 = sphi 0, %s256
    %s271 = sphi 0, %s257
    %s275 = sphi 0, %s275
    %s277 = sphi 0, %s275
    %s278 = sphi 0, %s277
    %s292 = sphi 0, %s278
    %s296 = sphi 0, %s296
    %s298 = sphi 0, %s296
    %s299 = sphi 0, %s298
    %s313 = sphi 0, %s299
    %s319 = sphi 0, %s321
    %s322 = sphi 0, %s319
    %s323 = sphi 0, %s322
    %s339 = sphi 0, %s323
    %s345 = sphi 0, %s347
    %s348 = sphi 0, %s345
    %s349 = sphi 0, %s348
    %s365 = sphi 0, %s349
  $region4: #{wavenet_iaf_forward.4} parent=0 // loop_header_branch
    %24 = sbr.rel (%p22) target = $region8
  $region5: #{wavenet_iaf_forward.4} parent=0 // loop_body
    %s26 = ssub.s32 %s21, 1
    %s27 = ssub.s32 %s21, 2
    %s28 = sadd.s32 %s21, 1
    %s29 = ssub.s32 %s21, %s28
    %p30 = scmp.eq.s32.totalorder %s29, 0
    %s32 = sadd.s32 %s31, 1
    %s33 = scalar_select %p30, %s31, %s32
    %p36 = pneg %p30
    %p37 = scmp.eq.s32.totalorder %s21, 1
    %p38 = por %p36, %p37
    %p39 = scmp.ne.s32.totalorder %s31, %s34
    %p40 = scmp.eq.s32.totalorder %s21, 0
    %p41 = por %p39, %p40
    %p42 = scmp.ne.s32.totalorder %s31, %s34
    %p43 = scmp.eq.s32.totalorder %s26, 1
    %p44 = por %p42, %p43
    %p45 = scmp.ne.s32.totalorder %s34, %s35
    %p46 = scmp.eq.s32.totalorder %s26, 0
    %p47 = por %p45, %p46
    %p48 = scmp.ne.s32.totalorder %s34, %s35
    %p49 = scmp.eq.s32.totalorder %s27, 1
    %p50 = por %p48, %p49
    %p52 = scmp.ne.s32.totalorder %s35, %s51
    %p53 = scmp.eq.s32.totalorder %s27, 0
    %p54 = por %p52, %p53
    %s55 = ssub.s32 %s21, %s28
    %p56 = scmp.eq.s32.totalorder %s55, 0
    %s58 = sadd.s32 %s57, 1
    %s59 = scalar_select %p56, %s57, %s58
    %p62 = pneg %p56
    %p63 = scmp.eq.s32.totalorder %s21, 1
    %p64 = por %p62, %p63
    %p65 = scmp.ne.s32.totalorder %s57, %s60
    %p66 = scmp.eq.s32.totalorder %s21, 0
    %p67 = por %p65, %p66
    %p68 = scmp.ne.s32.totalorder %s57, %s60
    %p69 = scmp.eq.s32.totalorder %s26, 1
    %p70 = por %p68, %p69
    %p71 = scmp.ne.s32.totalorder %s60, %s61
    %p72 = scmp.eq.s32.totalorder %s26, 0
    %p73 = por %p71, %p72
    %p74 = scmp.ne.s32.totalorder %s60, %s61
    %p75 = scmp.eq.s32.totalorder %s27, 1
    %p76 = por %p74, %p75
    %p78 = scmp.ne.s32.totalorder %s61, %s77
    %p79 = scmp.eq.s32.totalorder %s27, 0
    %p80 = por %p78, %p79
    %s81 = ssub.s32 %s21, %s28
    %p82 = scmp.eq.s32.totalorder %s81, 0
    %s84 = sadd.s32 %s83, 1
    %s85 = scalar_select %p82, %s83, %s84
    %p88 = pneg %p82
    %p89 = scmp.eq.s32.totalorder %s21, 1
    %p90 = por %p88, %p89
    %p91 = scmp.ne.s32.totalorder %s83, %s86
    %p92 = scmp.eq.s32.totalorder %s21, 0
    %p93 = por %p91, %p92
    %p94 = scmp.ne.s32.totalorder %s83, %s86
    %p95 = scmp.eq.s32.totalorder %s26, 1
    %p96 = por %p94, %p95
    %p97 = scmp.ne.s32.totalorder %s86, %s87
    %p98 = scmp.eq.s32.totalorder %s26, 0
    %p99 = por %p97, %p98
    %p100 = scmp.ne.s32.totalorder %s86, %s87
    %p101 = scmp.eq.s32.totalorder %s27, 1
    %p102 = por %p100, %p101
    %p104 = scmp.ne.s32.totalorder %s87, %s103
    %p105 = scmp.eq.s32.totalorder %s27, 0
    %p106 = por %p104, %p105
    %s108 = sadd.s32 %s107, 1
    %p111 = scmp.eq.s32.totalorder %s21, 1
    %p112 = scmp.ne.s32.totalorder %s107, %s109
    %p113 = scmp.eq.s32.totalorder %s21, 0
    %p114 = por %p112, %p113
    %p115 = scmp.ne.s32.totalorder %s107, %s109
    %p116 = scmp.eq.s32.totalorder %s26, 1
    %p117 = por %p115, %p116
    %p118 = scmp.ne.s32.totalorder %s109, %s110
    %p119 = scmp.eq.s32.totalorder %s26, 0
    %p120 = por %p118, %p119
    %p121 = scmp.ne.s32.totalorder %s109, %s110
    %p122 = scmp.eq.s32.totalorder %s27, 1
    %p123 = por %p121, %p122
    %p125 = scmp.ne.s32.totalorder %s110, %s124
    %p126 = scmp.eq.s32.totalorder %s27, 0
    %p127 = por %p125, %p126
    %s129 = sadd.s32 %s128, 1
    %p132 = scmp.eq.s32.totalorder %s21, 1
    %p133 = scmp.ne.s32.totalorder %s128, %s130
    %p134 = scmp.eq.s32.totalorder %s21, 0
    %p135 = por %p133, %p134
    %p136 = scmp.ne.s32.totalorder %s128, %s130
    %p137 = scmp.eq.s32.totalorder %s26, 1
    %p138 = por %p136, %p137
    %p139 = scmp.ne.s32.totalorder %s130, %s131
    %p140 = scmp.eq.s32.totalorder %s26, 0
    %p141 = por %p139, %p140
    %p142 = scmp.ne.s32.totalorder %s130, %s131
    %p143 = scmp.eq.s32.totalorder %s27, 1
    %p144 = por %p142, %p143
    %p146 = scmp.ne.s32.totalorder %s131, %s145
    %p147 = scmp.eq.s32.totalorder %s27, 0
    %p148 = por %p146, %p147
    %s150 = sadd.s32 %s149, 1
    %p153 = scmp.eq.s32.totalorder %s21, 1
    %p154 = scmp.ne.s32.totalorder %s149, %s151
    %p155 = scmp.eq.s32.totalorder %s21, 0
    %p156 = por %p154, %p155
    %p157 = scmp.ne.s32.totalorder %s149, %s151
    %p158 = scmp.eq.s32.totalorder %s26, 1
    %p159 = por %p157, %p158
    %p160 = scmp.ne.s32.totalorder %s151, %s152
    %p161 = scmp.eq.s32.totalorder %s26, 0
    %p162 = por %p160, %p161
    %p163 = scmp.ne.s32.totalorder %s151, %s152
    %p164 = scmp.eq.s32.totalorder %s27, 1
    %p165 = por %p163, %p164
    %p167 = scmp.ne.s32.totalorder %s152, %s166
    %p168 = scmp.eq.s32.totalorder %s27, 0
    %p169 = por %p167, %p168
    %s171 = sadd.s32 %s170, 1
    %p174 = scmp.eq.s32.totalorder %s21, 1
    %p175 = scmp.ne.s32.totalorder %s170, %s172
    %p176 = scmp.eq.s32.totalorder %s21, 0
    %p177 = por %p175, %p176
    %p178 = scmp.ne.s32.totalorder %s170, %s172
    %p179 = scmp.eq.s32.totalorder %s26, 1
    %p180 = por %p178, %p179
    %p181 = scmp.ne.s32.totalorder %s172, %s173
    %p182 = scmp.eq.s32.totalorder %s26, 0
    %p183 = por %p181, %p182
    %p184 = scmp.ne.s32.totalorder %s172, %s173
    %p185 = scmp.eq.s32.totalorder %s27, 1
    %p186 = por %p184, %p185
    %p188 = scmp.ne.s32.totalorder %s173, %s187
    %p189 = scmp.eq.s32.totalorder %s27, 0
    %p190 = por %p188, %p189
    %s192 = sadd.s32 %s191, 1
    %p195 = scmp.eq.s32.totalorder %s21, 1
    %p196 = scmp.ne.s32.totalorder %s191, %s193
    %p197 = scmp.eq.s32.totalorder %s21, 0
    %p198 = por %p196, %p197
    %p199 = scmp.ne.s32.totalorder %s191, %s193
    %p200 = scmp.eq.s32.totalorder %s26, 1
    %p201 = por %p199, %p200
    %p202 = scmp.ne.s32.totalorder %s193, %s194
    %p203 = scmp.eq.s32.totalorder %s26, 0
    %p204 = por %p202, %p203
    %p205 = scmp.ne.s32.totalorder %s193, %s194
    %p206 = scmp.eq.s32.totalorder %s27, 1
    %p207 = por %p205, %p206
    %p209 = scmp.ne.s32.totalorder %s194, %s208
    %p210 = scmp.eq.s32.totalorder %s27, 0
    %p211 = por %p209, %p210
    %s213 = sadd.s32 %s212, 1
    %p216 = scmp.eq.s32.totalorder %s21, 1
    %p217 = scmp.ne.s32.totalorder %s212, %s214
    %p218 = scmp.eq.s32.totalorder %s21, 0
    %p219 = por %p217, %p218
    %p220 = scmp.ne.s32.totalorder %s212, %s214
    %p221 = scmp.eq.s32.totalorder %s26, 1
    %p222 = por %p220, %p221
    %p223 = scmp.ne.s32.totalorder %s214, %s215
    %p224 = scmp.eq.s32.totalorder %s26, 0
    %p225 = por %p223, %p224
    %p226 = scmp.ne.s32.totalorder %s214, %s215
    %p227 = scmp.eq.s32.totalorder %s27, 1
    %p228 = por %p226, %p227
    %p230 = scmp.ne.s32.totalorder %s215, %s229
    %p231 = scmp.eq.s32.totalorder %s27, 0
    %p232 = por %p230, %p231
    %s234 = sadd.s32 %s233, 1
    %p237 = scmp.eq.s32.totalorder %s21, 1
    %p238 = scmp.ne.s32.totalorder %s233, %s235
    %p239 = scmp.eq.s32.totalorder %s21, 0
    %p240 = por %p238, %p239
    %p241 = scmp.ne.s32.totalorder %s233, %s235
    %p242 = scmp.eq.s32.totalorder %s26, 1
    %p243 = por %p241, %p242
    %p244 = scmp.ne.s32.totalorder %s235, %s236
    %p245 = scmp.eq.s32.totalorder %s26, 0
    %p246 = por %p244, %p245
    %p247 = scmp.ne.s32.totalorder %s235, %s236
    %p248 = scmp.eq.s32.totalorder %s27, 1
    %p249 = por %p247, %p248
    %p251 = scmp.ne.s32.totalorder %s236, %s250
    %p252 = scmp.eq.s32.totalorder %s27, 0
    %p253 = por %p251, %p252
    %s255 = sadd.s32 %s254, 1
    %p258 = scmp.eq.s32.totalorder %s21, 1
    %p259 = scmp.ne.s32.totalorder %s254, %s256
    %p260 = scmp.eq.s32.totalorder %s21, 0
    %p261 = por %p259, %p260
    %p262 = scmp.ne.s32.totalorder %s254, %s256
    %p263 = scmp.eq.s32.totalorder %s26, 1
    %p264 = por %p262, %p263
    %p265 = scmp.ne.s32.totalorder %s256, %s257
    %p266 = scmp.eq.s32.totalorder %s26, 0
    %p267 = por %p265, %p266
    %p268 = scmp.ne.s32.totalorder %s256, %s257
    %p269 = scmp.eq.s32.totalorder %s27, 1
    %p270 = por %p268, %p269
    %p272 = scmp.ne.s32.totalorder %s257, %s271
    %p273 = scmp.eq.s32.totalorder %s27, 0
    %p274 = por %p272, %p273
    %s276 = sadd.s32 %s275, 1
    %p279 = scmp.eq.s32.totalorder %s21, 1
    %p280 = scmp.ne.s32.totalorder %s275, %s277
    %p281 = scmp.eq.s32.totalorder %s21, 0
    %p282 = por %p280, %p281
    %p283 = scmp.ne.s32.totalorder %s275, %s277
    %p284 = scmp.eq.s32.totalorder %s26, 1
    %p285 = por %p283, %p284
    %p286 = scmp.ne.s32.totalorder %s277, %s278
    %p287 = scmp.eq.s32.totalorder %s26, 0
    %p288 = por %p286, %p287
    %p289 = scmp.ne.s32.totalorder %s277, %s278
    %p290 = scmp.eq.s32.totalorder %s27, 1
    %p291 = por %p289, %p290
    %p293 = scmp.ne.s32.totalorder %s278, %s292
    %p294 = scmp.eq.s32.totalorder %s27, 0
    %p295 = por %p293, %p294
    %s297 = sadd.s32 %s296, 1
    %p300 = scmp.eq.s32.totalorder %s21, 1
    %p301 = scmp.ne.s32.totalorder %s296, %s298
    %p302 = scmp.eq.s32.totalorder %s21, 0
    %p303 = por %p301, %p302
    %p304 = scmp.ne.s32.totalorder %s296, %s298
    %p305 = scmp.eq.s32.totalorder %s26, 1
    %p306 = por %p304, %p305
    %p307 = scmp.ne.s32.totalorder %s298, %s299
    %p308 = scmp.eq.s32.totalorder %s26, 0
    %p309 = por %p307, %p308
    %p310 = scmp.ne.s32.totalorder %s298, %s299
    %p311 = scmp.eq.s32.totalorder %s27, 1
    %p312 = por %p310, %p311
    %p314 = scmp.ne.s32.totalorder %s299, %s313
    %p315 = scmp.eq.s32.totalorder %s27, 0
    %p316 = por %p314, %p315
    %s317 = ssub.s32 %s21, %s28
    %p318 = scmp.eq.s32.totalorder %s317, 0
    %s320 = sadd.s32 %s319, 1
    %s321 = scalar_select %p318, %s319, %s320
    %p324 = pneg %p318
    %p325 = scmp.eq.s32.totalorder %s21, 1
    %p326 = por %p324, %p325
    %p327 = scmp.ne.s32.totalorder %s319, %s322
    %p328 = scmp.eq.s32.totalorder %s21, 0
    %p329 = por %p327, %p328
    %p330 = scmp.ne.s32.totalorder %s319, %s322
    %p331 = scmp.eq.s32.totalorder %s26, 1
    %p332 = por %p330, %p331
    %p333 = scmp.ne.s32.totalorder %s322, %s323
    %p334 = scmp.eq.s32.totalorder %s26, 0
    %p335 = por %p333, %p334
    %p336 = scmp.ne.s32.totalorder %s322, %s323
    %p337 = scmp.eq.s32.totalorder %s27, 1
    %p338 = por %p336, %p337
    %p340 = scmp.ne.s32.totalorder %s323, %s339
    %p341 = scmp.eq.s32.totalorder %s27, 0
    %p342 = por %p340, %p341
    %s343 = ssub.s32 %s21, %s28
    %p344 = scmp.eq.s32.totalorder %s343, 0
    %s346 = sadd.s32 %s345, 1
    %s347 = scalar_select %p344, %s345, %s346
    %p350 = pneg %p344
    %p351 = scmp.eq.s32.totalorder %s21, 1
    %p352 = por %p350, %p351
    %p353 = scmp.ne.s32.totalorder %s345, %s348
    %p354 = scmp.eq.s32.totalorder %s21, 0
    %p355 = por %p353, %p354
    %p356 = scmp.ne.s32.totalorder %s345, %s348
    %p357 = scmp.eq.s32.totalorder %s26, 1
    %p358 = por %p356, %p357
    %p359 = scmp.ne.s32.totalorder %s348, %s349
    %p360 = scmp.eq.s32.totalorder %s26, 0
    %p361 = por %p359, %p360
    %p362 = scmp.ne.s32.totalorder %s348, %s349
    %p363 = scmp.eq.s32.totalorder %s27, 1
    %p364 = por %p362, %p363
    %p366 = scmp.ne.s32.totalorder %s349, %s365
    %p367 = scmp.eq.s32.totalorder %s27, 0
    %p368 = por %p366, %p367
    %p369 = scmp.le.s32.totalorder 1, %s21
    %p370 = scmp.lt.s32.totalorder %s21, 3
    %p371 = pnand %p369, %p370
    %p372 = pneg %p371
    // Predicated region
    $region9: #{wavenet_iaf_forward.4} parent=5 // pred_check
      _
    $region10: #{wavenet_iaf_forward.4} parent=5 // pred_check_branch
      %374 = sbr.rel (%p371) target = $region12
    $region11: #{wavenet_iaf_forward.4} parent=5 // pred_region
      %s375 = ssub.s32 %s21, 1
      // Predicated region
      $region13: #{wavenet_iaf_forward.4} parent=11 // pred_check
        %p376 = pneg %p120
      $region14: #{wavenet_iaf_forward.4} parent=11 // pred_check_branch
        %378 = sbr.rel (%p376) target = $region16
      $region15: #{wavenet_iaf_forward.4} parent=11 // pred_region
        _
      $region16: #{wavenet_iaf_forward.4} parent=11 // pred_fallthru
        _
      // Predicated region
      $region17: #{wavenet_iaf_forward.4} parent=11 // pred_check
        %p379 = pneg %p141
      $region18: #{wavenet_iaf_forward.4} parent=11 // pred_check_branch
        %381 = sbr.rel (%p379) target = $region20
      $region19: #{wavenet_iaf_forward.4} parent=11 // pred_region
        _
      $region20: #{wavenet_iaf_forward.4} parent=11 // pred_fallthru
        _
      // Predicated region
      $region21: #{wavenet_iaf_forward.4} parent=11 // pred_check
        %p382 = pneg %p162
      $region22: #{wavenet_iaf_forward.4} parent=11 // pred_check_branch
        %384 = sbr.rel (%p382) target = $region24
      $region23: #{wavenet_iaf_forward.4} parent=11 // pred_region
        _
      $region24: #{wavenet_iaf_forward.4} parent=11 // pred_fallthru
        _
      // Predicated region
      $region25: #{wavenet_iaf_forward.4} parent=11 // pred_check
        %p385 = pneg %p183
      $region26: #{wavenet_iaf_forward.4} parent=11 // pred_check_branch
        %387 = sbr.rel (%p385) target = $region28
      $region27: #{wavenet_iaf_forward.4} parent=11 // pred_region
        _
      $region28: #{wavenet_iaf_forward.4} parent=11 // pred_fallthru
        _
      // Predicated region
      $region29: #{wavenet_iaf_forward.4} parent=11 // pred_check
        %p388 = pneg %p204
      $region30: #{wavenet_iaf_forward.4} parent=11 // pred_check_branch
        %390 = sbr.rel (%p388) target = $region32
      $region31: #{wavenet_iaf_forward.4} parent=11 // pred_region
        _
      $region32: #{wavenet_iaf_forward.4} parent=11 // pred_fallthru
        _
      // Predicated region
      $region33: #{wavenet_iaf_forward.4} parent=11 // pred_check
        %p391 = pneg %p225
      $region34: #{wavenet_iaf_forward.4} parent=11 // pred_check_branch
        %393 = sbr.rel (%p391) target = $region36
      $region35: #{wavenet_iaf_forward.4} parent=11 // pred_region
        _
      $region36: #{wavenet_iaf_forward.4} parent=11 // pred_fallthru
        _
      // Predicated region
      $region37: #{wavenet_iaf_forward.4} parent=11 // pred_check
        %p394 = pneg %p246
      $region38: #{wavenet_iaf_forward.4} parent=11 // pred_check_branch
        %396 = sbr.rel (%p394) target = $region40
      $region39: #{wavenet_iaf_forward.4} parent=11 // pred_region
        _
      $region40: #{wavenet_iaf_forward.4} parent=11 // pred_fallthru
        _
      // Predicated region
      $region41: #{wavenet_iaf_forward.4} parent=11 // pred_check
        %p397 = pneg %p267
      $region42: #{wavenet_iaf_forward.4} parent=11 // pred_check_branch
        %399 = sbr.rel (%p397) target = $region44
      $region43: #{wavenet_iaf_forward.4} parent=11 // pred_region
        _
      $region44: #{wavenet_iaf_forward.4} parent=11 // pred_fallthru
        _
      // Predicated region
      $region45: #{wavenet_iaf_forward.4} parent=11 // pred_check
        %p400 = pneg %p288
      $region46: #{wavenet_iaf_forward.4} parent=11 // pred_check_branch
        %402 = sbr.rel (%p400) target = $region48
      $region47: #{wavenet_iaf_forward.4} parent=11 // pred_region
        _
      $region48: #{wavenet_iaf_forward.4} parent=11 // pred_fallthru
        _
      // Predicated region
      $region49: #{wavenet_iaf_forward.4} parent=11 // pred_check
        %p403 = pneg %p309
      $region50: #{wavenet_iaf_forward.4} parent=11 // pred_check_branch
        %405 = sbr.rel (%p403) target = $region52
      $region51: #{wavenet_iaf_forward.4} parent=11 // pred_region
        _
      $region52: #{wavenet_iaf_forward.4} parent=11 // pred_fallthru
        _
    $region12: #{wavenet_iaf_forward.4} parent=5 // pred_fallthru
      _
    %p406 = scmp.lt.s32.totalorder %s21, 2
    // Predicated region
    $region53: #{wavenet_iaf_forward.4} parent=5 // pred_check
      %p407 = pneg %p406
    $region54: #{wavenet_iaf_forward.4} parent=5 // pred_check_branch
      %409 = sbr.rel (%p407) target = $region56
    $region55: #{wavenet_iaf_forward.4} parent=5 // pred_region
      // Predicated region
      $region57: #{wavenet_iaf_forward.4} parent=55 // pred_check
        %p410 = pneg %p41
      $region58: #{wavenet_iaf_forward.4} parent=55 // pred_check_branch
        %412 = sbr.rel (%p410) target = $region60
      $region59: #{wavenet_iaf_forward.4} parent=55 // pred_region
        %p413 = scmp.lt.s32.totalorder %s21, 1
        %s414 = scalar_select %p413, %s21, 1
        %s415 = scalar_lea.vmem %s0, %s414
      $region60: #{wavenet_iaf_forward.4} parent=55 // pred_fallthru
        _
      // Predicated region
      $region61: #{wavenet_iaf_forward.4} parent=55 // pred_check
        %p416 = pneg %p67
      $region62: #{wavenet_iaf_forward.4} parent=55 // pred_check_branch
        %418 = sbr.rel (%p416) target = $region64
      $region63: #{wavenet_iaf_forward.4} parent=55 // pred_region
        %p419 = scmp.lt.s32.totalorder %s21, 1
        %s420 = scalar_select %p419, %s21, 1
        %s421 = smul.addr %s420, 4
        %s422 = smul.addr %s421, 8
        %s423 = scalar_lea.vmem %s1, %s422
      $region64: #{wavenet_iaf_forward.4} parent=55 // pred_fallthru
        _
      // Predicated region
      $region65: #{wavenet_iaf_forward.4} parent=55 // pred_check
        %p424 = pneg %p93
      $region66: #{wavenet_iaf_forward.4} parent=55 // pred_check_branch
        %426 = sbr.rel (%p424) target = $region68
      $region67: #{wavenet_iaf_forward.4} parent=55 // pred_region
        %p427 = scmp.lt.s32.totalorder %s21, 1
        %s428 = scalar_select %p427, %s21, 1
        %s429 = smul.addr %s428, 2
        %s430 = scalar_lea.vmem %s2, %s429
      $region68: #{wavenet_iaf_forward.4} parent=55 // pred_fallthru
        _
    $region56: #{wavenet_iaf_forward.4} parent=5 // pred_fallthru
      _
    %p431 = scmp.le.s32.totalorder 1, %s21
    %p432 = scmp.lt.s32.totalorder %s21, 3
    %p433 = pnand %p431, %p432
    %p434 = pneg %p433
    // Predicated region
    $region69: #{wavenet_iaf_forward.4} parent=5 // pred_check
      _
    $region70: #{wavenet_iaf_forward.4} parent=5 // pred_check_branch
      %436 = sbr.rel (%p433) target = $region72
    $region71: #{wavenet_iaf_forward.4} parent=5 // pred_region
      %s437 = ssub.s32 %s21, 1
      %p438 = scmp.lt.s32.totalorder %s26, 1
      %s439 = scalar_select %p438, %s26, 1
      %s440 = scalar_lea.vmem %s0, %s439
      %p441 = pneg %p47
      %p442 = pneg %p44
      %p443 = scmp.lt.s32.totalorder %s26, 1
      %s444 = scalar_select %p443, %s26, 1
      %s445 = smul.addr %s444, 4
      %s446 = smul.addr %s445, 8
      %s447 = scalar_lea.vmem %s1, %s446
      %p448 = pneg %p73
      %p449 = pneg %p70
      %p450 = scmp.lt.s32.totalorder %s26, 1
      %s451 = scalar_select %p450, %s26, 1
      %s452 = smul.addr %s451, 2
      %s453 = scalar_lea.vmem %s2, %s452
      %p454 = pneg %p99
      %p455 = pneg %p96
      %p456 = pneg %p120
      %p457 = pneg %p117
      %p458 = pneg %p141
      %p459 = pneg %p138
      %p460 = pneg %p162
      %p461 = pneg %p159
      %p462 = pneg %p183
      %p463 = pneg %p180
      %p464 = pneg %p204
      %p465 = pneg %p201
      %p466 = pneg %p225
      %p467 = pneg %p222
      %p468 = pneg %p246
      %p469 = pneg %p243
      %p470 = pneg %p267
      %p471 = pneg %p264
      %p472 = pneg %p288
      %p473 = pneg %p285
      %p474 = pneg %p309
      %p475 = pneg %p306
      %p476 = pneg %p335
      %p477 = pneg %p332
      %p478 = scmp.lt.s32.totalorder %s26, 1
      %s479 = scalar_select %p478, %s26, 1
      %s480 = scalar_lea.vmem %s13, %s479
      %p481 = pneg %p361
      %p482 = pneg %p358
      %p483 = scmp.lt.s32.totalorder %s26, 1
      %s484 = scalar_select %p483, %s26, 1
      %s485 = smul.addr %s484, 2
      %s486 = scalar_lea.vmem %s14, %s485
      %p487 = scmp.lt.s32.totalorder %s26, 1
      %s488 = scalar_select %p487, %s26, 1
      %s489 = scalar_lea.vmem %s0, %s488
      %p490 = scmp.lt.s32.totalorder %s26, 1
      %s491 = scalar_select %p490, %s26, 1
      %s492 = smul.addr %s491, 4
      %s493 = smul.addr %s492, 8
      %s494 = scalar_lea.vmem %s1, %s493
      %p495 = scmp.lt.s32.totalorder %s26, 1
      %s496 = scalar_select %p495, %s26, 1
      %s497 = smul.addr %s496, 2
      %s498 = scalar_lea.vmem %s2, %s497
      %p499 = scmp.lt.s32.totalorder %s26, 1
      %s500 = scalar_select %p499, %s26, 1
      %s501 = scalar_lea.vmem %s13, %s500
      %p502 = scmp.lt.s32.totalorder %s26, 1
      %s503 = scalar_select %p502, %s26, 1
      %s504 = smul.addr %s503, 2
      %s505 = scalar_lea.vmem %s14, %s504
      %v506 = vld [vmem:[%s489] sm:$0x1]
      %v507 = vlaneseq
      %v508 = vand.u32 %v507, 127
      %v510 = vlaneseq
      %v511 = vshrl.u32 %v510, 7
      %v512 = vsub.s32 0, %v511
      %v513 = vrot.slane %v506, %v512
      %514 = vrot.lane.b32.xlu0 %v513, 3
      %v515 = vpop.permute.xlu0 %514
      %vm517 = vcmask 23552
      %v518 = vsel %vm517, 0.0, %v515
      %519 = vst [vmem:[#allocation2] sm:$0x1] %v518
      %520 = vrot.lane.b32.xlu0 %v513, 2
      %v521 = vpop.permute.xlu0 %520
      %vm523 = vcmask 15360
      %v524 = vsel %vm523, 0.0, %v521
      %525 = vst [vmem:[#allocation2 + $0x1] sm:$0x1] %v524
      %526 = vrot.lane.b32.xlu0 %v513, 1
      %v527 = vpop.permute.xlu0 %526
      %vm529 = vcmask 7168
      %v530 = vsel %vm529, 0.0, %v527
      %531 = vst [vmem:[#allocation2 + $0x2] sm:$0x1] %v530
      %532 = vst [vmem:[#allocation2 + $0x3] sm:$0x1] %v506
      %v533 = vld [vmem:[%s3] sm:$0xff]
      %v534 = vld [vmem:[%s3 + $0x8] sm:$0xff]
      %v535 = vld [vmem:[#allocation2] sm:$0xf]
      %v536 = vld [vmem:[%s4] sm:$0xff]
      %v537 = vld [vmem:[%s4 + $0x8] sm:$0xff]
      %539 = vset.pattern.permute.xlu0 0
      %540 = vperm.xlu0 %539, %v536
      %v541 = vpop.permute.xlu0 %540
      %544 = vset.pattern.permute.xlu0 0
      %545 = vperm.xlu0 %544, %v537
      %v546 = vpop.permute.xlu0 %545
      %vm548 = vcmask 31744
      %v550 = vsel %vm548, %v533, 0
      %v553 = vsel %vm548, %v534, 0
      %vm555 = vcmask 1043456
      %v557 = vsel %vm555, %v535, 0
      %559 = vmatprep.subr.mxu0 0.0
      %560 = vmatpush1.msra.mxu0 %v557
      %561 = vmatprep.subr.mxu0 0.0
      %562 = vmatpush1.msra.mxu0 0.0
      %563 = vmatprep.subr.mxu0 0.0
      %564 = vmatpush1.msra.mxu0 0.0
      %565 = vmatprep.subr.mxu0 0.0
      %566 = vmatpush1.msra.mxu0 0.0
      %567 = vmatprep.subr.mxu0 0.0
      %568 = vmatpush1.msra.mxu0 0.0
      %569 = vmatprep.subr.mxu0 0.0
      %570 = vmatpush1.msra.mxu0 0.0
      %571 = vmatprep.subr.mxu0 0.0
      %572 = vmatpush1.msra.mxu0 0.0
      %573 = vmatprep.subr.mxu0 0.0
      %574 = vmatpush1.msra.mxu0 0.0
      %575 = vmatprep.subr.mxu0 0.0
      %576 = vmatpush1.msra.mxu0 0.0
      %577 = vmatprep.subr.mxu0 0.0
      %578 = vmatpush1.msra.mxu0 0.0
      %579 = vmatprep.subr.mxu0 0.0
      %580 = vmatpush1.msra.mxu0 0.0
      %581 = vmatprep.subr.mxu0 0.0
      %582 = vmatpush1.msra.mxu0 0.0
      %583 = vmatprep.subr.mxu0 0.0
      %584 = vmatpush1.msra.mxu0 0.0
      %585 = vmatprep.subr.mxu0 0.0
      %586 = vmatpush1.msra.mxu0 0.0
      %587 = vmatprep.subr.mxu0 0.0
      %588 = vmatpush1.msra.mxu0 0.0
      %589 = vmatprep.subr.mxu0 0.0
      %590 = vmatpush1.msra.mxu0 0.0
      %591 = vmatprep.subr.mxu0 0.0
      %592 = vmatpush1.msra.mxu0 0.0
      %593 = vmatprep.subr.mxu0 0.0
      %594 = vmatpush1.msra.mxu0 0.0
      %595 = vmatprep.subr.mxu0 0.0
      %596 = vmatpush1.msra.mxu0 0.0
      %597 = vmatprep.subr.mxu0 0.0
      %598 = vmatpush1.msra.mxu0 0.0
      %599 = vmatprep.subr.mxu0 0.0
      %600 = vmatpush1.msra.mxu0 0.0
      %601 = vmatprep.subr.mxu0 0.0
      %602 = vmatpush1.msra.mxu0 0.0
      %603 = vmatprep.subr.mxu0 0.0
      %604 = vmatpush1.msra.mxu0 0.0
      %605 = vmatprep.subr.mxu0 0.0
      %606 = vmatpush1.msra.mxu0 0.0
      %607 = vmatprep.subr.mxu0 0.0
      %608 = vmatpush1.msra.mxu0 0.0
      %609 = vmatprep.subr.mxu0 0.0
      %610 = vmatpush1.msra.mxu0 0.0
      %611 = vmatprep.subr.mxu0 0.0
      %612 = vmatpush1.msra.mxu0 0.0
      %613 = vmatprep.subr.mxu0 0.0
      %614 = vmatpush1.msra.mxu0 0.0
      %615 = vmatprep.subr.mxu0 0.0
      %616 = vmatpush1.msra.mxu0 0.0
      %617 = vmatprep.subr.mxu0 0.0
      %618 = vmatpush1.msra.mxu0 0.0
      %619 = vmatprep.subr.mxu0 0.0
      %620 = vmatpush1.msra.mxu0 0.0
      %621 = vmatprep.subr.mxu0 0.0
      %622 = vmatpush1.msra.mxu0 0.0
      %623 = vmatprep.mubr.f32.mxu0 0.0
      %624 = vmatmul.mubr.f32.gmra.mrb[0].mxu0 %v550
      %v625 = vpop.f32.mrb[0].mxu0
      %v626 = vadd.f32 %v541, %v625
      %v627 = vpop.f32.mrb[0].mxu0
      %628 = vmatprep.mubr.f32.mxu0 0.0
      %629 = vmatmul.mubr.f32.gmra.mrb[0].mxu0 %v553
      %v630 = vpop.f32.mrb[0].mxu0
      %v631 = vadd.f32 %v546, %v630
      %v632 = vpop.f32.mrb[0].mxu0
      %633 = vdwg.mxu0
      %v634 = vmax.f32 %v626, 0.0
      %v635 = vmax.f32 %v631, 0.0
      %v636 = vld [vmem:[%s494] sm:$0xff]
      %v637 = vld [vmem:[%s494 + $0x8] sm:$0xff]
      %v638 = vld [vmem:[%s494 + $0x10] sm:$0xff]
      %v639 = vld [vmem:[%s494 + $0x18] sm:$0xff]
      %640 = vst [vmem:[#allocation2 + $0x30] sm:$0xff] %v636
      %641 = vst [vmem:[#allocation2 + $0x38] sm:$0xff] %v637
      %642 = vst [vmem:[#allocation2 + $0x40] sm:$0xff] %v638
      %643 = vst [vmem:[#allocation2 + $0x48] sm:$0xff] %v639
      %646 = vrot.lane.b32.xlu0 %v634, 2
      %v647 = vpop.permute.xlu0 %646
      %648 = vrot.lane.b32.xlu0 %v635, 2
      %v649 = vpop.permute.xlu0 %648
      %v652 = vsel %vm523, 0.0, %v647
      %v653 = vsel %vm523, 0.0, %v649
      %654 = vst [vmem:[#allocation2] sm:$0xff] %v652
      %655 = vst [vmem:[#allocation2 + $0x8] sm:$0xff] %v653
      %656 = vrot.lane.b32.xlu0 %v634, 1
      %v657 = vpop.permute.xlu0 %656
      %658 = vrot.lane.b32.xlu0 %v635, 1
      %v659 = vpop.permute.xlu0 %658
      %v662 = vsel %vm529, 0.0, %v657
      %v663 = vsel %vm529, 0.0, %v659
      %664 = vst [vmem:[#allocation2 + $0x10] sm:$0xff] %v662
      %665 = vst [vmem:[#allocation2 + $0x18] sm:$0xff] %v663
      %666 = vst [vmem:[#allocation2 + $0x20] sm:$0xff] %v634
      %667 = vst [vmem:[#allocation2 + $0x28] sm:$0xff] %v635
      %v668 = vld [vmem:[%s5] sm:$0xff]
      %v669 = vld [vmem:[%s5 + $0x8] sm:$0xff]
      %v670 = vld [vmem:[%s5 + $0x10] sm:$0xff]
      %v671 = vld [vmem:[%s5 + $0x18] sm:$0xff]
      %v672 = vld [vmem:[%s5 + $0x20] sm:$0xff]
      %v673 = vld [vmem:[%s5 + $0x28] sm:$0xff]
      %v674 = vld [vmem:[%s5 + $0x30] sm:$0xff]
      %v675 = vld [vmem:[%s5 + $0x38] sm:$0xff]
      %v676 = vld [vmem:[#allocation2] sm:$0xff]
      %v677 = vld [vmem:[#allocation2 + $0x8] sm:$0xff]
      %v678 = vld [vmem:[#allocation2 + $0x10] sm:$0xff]
      %v679 = vld [vmem:[#allocation2 + $0x18] sm:$0xff]
      %v680 = vld [vmem:[#allocation2 + $0x20] sm:$0xff]
      %v681 = vld [vmem:[#allocation2 + $0x28] sm:$0xff]
      %v682 = vld [vmem:[#allocation2 + $0x30] sm:$0xff]
      %v683 = vld [vmem:[#allocation2 + $0x38] sm:$0xff]
      %v684 = vld [vmem:[#allocation2 + $0x40] sm:$0xff]
      %v685 = vld [vmem:[#allocation2 + $0x48] sm:$0xff]
      %v686 = vld [vmem:[%s6] sm:$0xff]
      %v687 = vld [vmem:[%s6 + $0x8] sm:$0xff]
      %v688 = vld [vmem:[%s6 + $0x10] sm:$0xff]
      %v689 = vld [vmem:[%s6 + $0x18] sm:$0xff]
      %v690 = vld [vmem:[%s6 + $0x20] sm:$0xff]
      %v691 = vld [vmem:[%s6 + $0x28] sm:$0xff]
      %v692 = vld [vmem:[%s6 + $0x30] sm:$0xff]
      %v693 = vld [vmem:[%s6 + $0x38] sm:$0xff]
      %695 = vset.pattern.permute.xlu0 0
      %696 = vperm.xlu0 %695, %v686
      %v697 = vpop.permute.xlu0 %696
      %700 = vset.pattern.permute.xlu0 0
      %701 = vperm.xlu0 %700, %v687
      %v702 = vpop.permute.xlu0 %701
      %705 = vset.pattern.permute.xlu0 0
      %706 = vperm.xlu0 %705, %v688
      %v707 = vpop.permute.xlu0 %706
      %710 = vset.pattern.permute.xlu0 0
      %711 = vperm.xlu0 %710, %v689
      %v712 = vpop.permute.xlu0 %711
      %715 = vset.pattern.permute.xlu0 0
      %716 = vperm.xlu0 %715, %v690
      %v717 = vpop.permute.xlu0 %716
      %720 = vset.pattern.permute.xlu0 0
      %721 = vperm.xlu0 %720, %v691
      %v722 = vpop.permute.xlu0 %721
      %725 = vset.pattern.permute.xlu0 0
      %726 = vperm.xlu0 %725, %v692
      %v727 = vpop.permute.xlu0 %726
      %730 = vset.pattern.permute.xlu0 0
      %731 = vperm.xlu0 %730, %v693
      %v732 = vpop.permute.xlu0 %731
      %vm734 = vcmask 654336
      %v736 = vsel %vm734, %v668, 0
      %v739 = vsel %vm734, %v669, 0
      %v742 = vsel %vm734, %v670, 0
      %v745 = vsel %vm734, %v671, 0
      %v748 = vsel %vm734, %v672, 0
      %v751 = vsel %vm734, %v673, 0
      %v754 = vsel %vm734, %v674, 0
      %v757 = vsel %vm734, %v675, 0
      %759 = vmatprep.subr.mxu0 0.0
      %760 = vmatpush1.msra.mxu0 %v676
      %761 = vmatprep.subr.mxu0 0.0
      %762 = vmatpush1.msra.mxu0 %v677
      %763 = vmatprep.subr.mxu0 0.0
      %764 = vmatpush1.msra.mxu0 %v678
      %765 = vmatprep.subr.mxu0 0.0
      %766 = vmatpush1.msra.mxu0 %v679
      %767 = vmatprep.subr.mxu0 0.0
      %768 = vmatpush1.msra.mxu0 %v680
      %769 = vmatprep.subr.mxu0 0.0
      %770 = vmatpush1.msra.mxu0 %v681
      %771 = vmatprep.subr.mxu0 0.0
      %772 = vmatpush1.msra.mxu0 %v682
      %773 = vmatprep.subr.mxu0 0.0
      %774 = vmatpush1.msra.mxu0 %v683
      %775 = vmatprep.subr.mxu0 0.0
      %776 = vmatpush1.msra.mxu0 %v684
      %777 = vmatprep.subr.mxu0 0.0
      %778 = vmatpush1.msra.mxu0 %v685
      %779 = vmatprep.subr.mxu0 0.0
      %780 = vmatpush1.msra.mxu0 0.0
      %781 = vmatprep.subr.mxu0 0.0
      %782 = vmatpush1.msra.mxu0 0.0
      %783 = vmatprep.subr.mxu0 0.0
      %784 = vmatpush1.msra.mxu0 0.0
      %785 = vmatprep.subr.mxu0 0.0
      %786 = vmatpush1.msra.mxu0 0.0
      %787 = vmatprep.subr.mxu0 0.0
      %788 = vmatpush1.msra.mxu0 0.0
      %789 = vmatprep.subr.mxu0 0.0
      %790 = vmatpush1.msra.mxu0 0.0
      %791 = vmatprep.subr.mxu0 0.0
      %792 = vmatpush1.msra.mxu0 0.0
      %793 = vmatprep.subr.mxu0 0.0
      %794 = vmatpush1.msra.mxu0 0.0
      %795 = vmatprep.subr.mxu0 0.0
      %796 = vmatpush1.msra.mxu0 0.0
      %797 = vmatprep.subr.mxu0 0.0
      %798 = vmatpush1.msra.mxu0 0.0
      %799 = vmatprep.subr.mxu0 0.0
      %800 = vmatpush1.msra.mxu0 0.0
      %801 = vmatprep.subr.mxu0 0.0
      %802 = vmatpush1.msra.mxu0 0.0
      %803 = vmatprep.subr.mxu0 0.0
      %804 = vmatpush1.msra.mxu0 0.0
      %805 = vmatprep.subr.mxu0 0.0
      %806 = vmatpush1.msra.mxu0 0.0
      %807 = vmatprep.subr.mxu0 0.0
      %808 = vmatpush1.msra.mxu0 0.0
      %809 = vmatprep.subr.mxu0 0.0
      %810 = vmatpush1.msra.mxu0 0.0
      %811 = vmatprep.subr.mxu0 0.0
      %812 = vmatpush1.msra.mxu0 0.0
      %813 = vmatprep.subr.mxu0 0.0
      %814 = vmatpush1.msra.mxu0 0.0
      %815 = vmatprep.subr.mxu0 0.0
      %816 = vmatpush1.msra.mxu0 0.0
      %817 = vmatprep.subr.mxu0 0.0
      %818 = vmatpush1.msra.mxu0 0.0
      %819 = vmatprep.subr.mxu0 0.0
      %820 = vmatpush1.msra.mxu0 0.0
      %821 = vmatprep.subr.mxu0 0.0
      %822 = vmatpush1.msra.mxu0 0.0
      %823 = vmatprep.mubr.f32.mxu0 0.0
      %824 = vmatmul.mubr.f32.gmra.mrb[0].mxu0 %v736
      %v825 = vpop.f32.mrb[0].mxu0
      %v826 = vadd.f32 %v697, %v825
      %v827 = vpop.f32.mrb[0].mxu0
      %828 = vmatprep.mubr.f32.mxu0 0.0
      %829 = vmatmul.mubr.f32.gmra.mrb[0].mxu0 %v739
      %v830 = vpop.f32.mrb[0].mxu0
      %v831 = vadd.f32 %v702, %v830
      %v832 = vpop.f32.mrb[0].mxu0
      %833 = vmatprep.mubr.f32.mxu0 0.0
      %834 = vmatmul.mubr.f32.gmra.mrb[0].mxu0 %v742
      %v835 = vpop.f32.mrb[0].mxu0
      %v836 = vadd.f32 %v707, %v835
      %v837 = vpop.f32.mrb[0].mxu0
      %838 = vmatprep.mubr.f32.mxu0 0.0
      %839 = vmatmul.mubr.f32.gmra.mrb[0].mxu0 %v745
      %v840 = vpop.f32.mrb[0].mxu0
      %v841 = vadd.f32 %v712, %v840
      %v842 = vpop.f32.mrb[0].mxu0
      %843 = vmatprep.mubr.f32.mxu0 0.0
      %844 = vmatmul.mubr.f32.gmra.mrb[0].mxu0 %v748
      %v845 = vpop.f32.mrb[0].mxu0
      %v846 = vadd.f32 %v717, %v845
      %v847 = vpop.f32.mrb[0].mxu0
      %848 = vmatprep.mubr.f32.mxu0 0.0
      %849 = vmatmul.mubr.f32.gmra.mrb[0].mxu0 %v751
      %v850 = vpop.f32.mrb[0].mxu0
      %v851 = vadd.f32 %v722, %v850
      %v852 = vpop.f32.mrb[0].mxu0
      %853 = vmatprep.mubr.f32.mxu0 0.0
      %854 = vmatmul.mubr.f32.gmra.mrb[0].mxu0 %v754
      %v855 = vpop.f32.mrb[0].mxu0
      %v856 = vadd.f32 %v727, %v855
      %v857 = vpop.f32.mrb[0].mxu0
      %858 = vmatprep.mubr.f32.mxu0 0.0
      %859 = vmatmul.mubr.f32.gmra.mrb[0].mxu0 %v757
      %v860 = vpop.f32.mrb[0].mxu0
      %v861 = vadd.f32 %v732, %v860
      %v862 = vpop.f32.mrb[0].mxu0
      %863 = vdwg.mxu0
      %v864 = vtanh.pop %v826
      %v865 = vtanh.pop %v831
      %v866 = vtanh.pop %v836
      %v867 = vtanh.pop %v841
      %v868 = vxor.u32 %v846, 2147483648
      %v869 = vxor.u32 %v851, 2147483648
      %v870 = vxor.u32 %v856, 2147483648
      %v871 = vxor.u32 %v861, 2147483648
      %v872 = vmul.f32 %v868, 1.442695
      %v873 = vpow.pop %v872
      %v874 = vmul.f32 %v869, 1.442695
      %v875 = vpow.pop %v874
      %v876 = vmul.f32 %v870, 1.442695
      %v877 = vpow.pop %v876
      %v878 = vmul.f32 %v871, 1.442695
      %v879 = vpow.pop %v878
      %v880 = vadd.f32 %v873, 1.0
      %v881 = vadd.f32 %v875, 1.0
      %v882 = vadd.f32 %v877, 1.0
      %v883 = vadd.f32 %v879, 1.0
      %v884 = vrcp.pop %v880
      %v885 = vmul.f32 1.0, %v884
      %v886 = vrcp.pop %v881
      %v887 = vmul.f32 1.0, %v886
      %v888 = vrcp.pop %v882
      %v889 = vmul.f32 1.0, %v888
      %v890 = vrcp.pop %v883
      %v891 = vmul.f32 1.0, %v890
      %v892 = vmul.f32 %v864, %v885
      %v893 = vmul.f32 %v865, %v887
      %v894 = vmul.f32 %v866, %v889
      %v895 = vmul.f32 %v867, %v891
      %v896 = vld [vmem:[%s7] sm:$0xff]
      %v897 = vld [vmem:[%s7 + $0x8] sm:$0xff]
      %v898 = vld [vmem:[%s7 + $0x10] sm:$0xff]
      %v899 = vld [vmem:[%s7 + $0x18] sm:$0xff]
      %v900 = vld [vmem:[%s8] sm:$0xff]
      %v901 = vld [vmem:[%s8 + $0x8] sm:$0xff]
      %v902 = vld [vmem:[%s8 + $0x10] sm:$0xff]
      %v903 = vld [vmem:[%s8 + $0x18] sm:$0xff]
      %905 = vset.pattern.permute.xlu0 0
      %906 = vperm.xlu0 %905, %v900
      %v907 = vpop.permute.xlu0 %906
      %910 = vset.pattern.permute.xlu0 0
      %911 = vperm.xlu0 %910, %v901
      %v912 = vpop.permute.xlu0 %911
      %915 = vset.pattern.permute.xlu0 0
      %916 = vperm.xlu0 %915, %v902
      %v917 = vpop.permute.xlu0 %916
      %920 = vset.pattern.permute.xlu0 0
      %921 = vperm.xlu0 %920, %v903
      %v922 = vpop.permute.xlu0 %921
      %vm924 = vcmask 261120
      %v926 = vsel %vm924, %v896, 0
      %v929 = vsel %vm924, %v897, 0
      %v932 = vsel %vm924, %v898, 0
      %v935 = vsel %vm924, %v899, 0
      %937 = vmatprep.subr.mxu0 0.0
      %938 = vmatpush1.msra.mxu0 %v892
      %939 = vmatprep.subr.mxu0 0.0
      %940 = vmatpush1.msra.mxu0 %v893
      %941 = vmatprep.subr.mxu0 0.0
      %942 = vmatpush1.msra.mxu0 %v894
      %943 = vmatprep.subr.mxu0 0.0
      %944 = vmatpush1.msra.mxu0 %v895
      %945 = vmatprep.subr.mxu0 0.0
      %946 = vmatpush1.msra.mxu0 0.0
      %947 = vmatprep.subr.mxu0 0.0
      %948 = vmatpush1.msra.mxu0 0.0
      %949 = vmatprep.subr.mxu0 0.0
      %950 = vmatpush1.msra.mxu0 0.0
      %951 = vmatprep.subr.mxu0 0.0
      %952 = vmatpush1.msra.mxu0 0.0
      %953 = vmatprep.subr.mxu0 0.0
      %954 = vmatpush1.msra.mxu0 0.0
      %955 = vmatprep.subr.mxu0 0.0
      %956 = vmatpush1.msra.mxu0 0.0
      %957 = vmatprep.subr.mxu0 0.0
      %958 = vmatpush1.msra.mxu0 0.0
      %959 = vmatprep.subr.mxu0 0.0
      %960 = vmatpush1.msra.mxu0 0.0
      %961 = vmatprep.subr.mxu0 0.0
      %962 = vmatpush1.msra.mxu0 0.0
      %963 = vmatprep.subr.mxu0 0.0
      %964 = vmatpush1.msra.mxu0 0.0
      %965 = vmatprep.subr.mxu0 0.0
      %966 = vmatpush1.msra.mxu0 0.0
      %967 = vmatprep.subr.mxu0 0.0
      %968 = vmatpush1.msra.mxu0 0.0
      %969 = vmatprep.subr.mxu0 0.0
      %970 = vmatpush1.msra.mxu0 0.0
      %971 = vmatprep.subr.mxu0 0.0
      %972 = vmatpush1.msra.mxu0 0.0
      %973 = vmatprep.subr.mxu0 0.0
      %974 = vmatpush1.msra.mxu0 0.0
      %975 = vmatprep.subr.mxu0 0.0
      %976 = vmatpush1.msra.mxu0 0.0
      %977 = vmatprep.subr.mxu0 0.0
      %978 = vmatpush1.msra.mxu0 0.0
      %979 = vmatprep.subr.mxu0 0.0
      %980 = vmatpush1.msra.mxu0 0.0
      %981 = vmatprep.subr.mxu0 0.0
      %982 = vmatpush1.msra.mxu0 0.0
      %983 = vmatprep.subr.mxu0 0.0
      %984 = vmatpush1.msra.mxu0 0.0
      %985 = vmatprep.subr.mxu0 0.0
      %986 = vmatpush1.msra.mxu0 0.0
      %987 = vmatprep.subr.mxu0 0.0
      %988 = vmatpush1.msra.mxu0 0.0
      %989 = vmatprep.subr.mxu0 0.0
      %990 = vmatpush1.msra.mxu0 0.0
      %991 = vmatprep.subr.mxu0 0.0
      %992 = vmatpush1.msra.mxu0 0.0
      %993 = vmatprep.subr.mxu0 0.0
      %994 = vmatpush1.msra.mxu0 0.0
      %995 = vmatprep.subr.mxu0 0.0
      %996 = vmatpush1.msra.mxu0 0.0
      %997 = vmatprep.subr.mxu0 0.0
      %998 = vmatpush1.msra.mxu0 0.0
      %999 = vmatprep.subr.mxu0 0.0
      %1000 = vmatpush1.msra.mxu0 0.0
      %1001 = vmatprep.mubr.f32.mxu0 0.0
      %1002 = vmatmul.mubr.f32.gmra.mrb[0].mxu0 %v926
      %v1003 = vpop.f32.mrb[0].mxu0
      %v1004 = vadd.f32 %v907, %v1003
      %v1005 = vpop.f32.mrb[0].mxu0
      %1006 = vmatprep.mubr.f32.mxu0 0.0
      %1007 = vmatmul.mubr.f32.gmra.mrb[0].mxu0 %v929
      %v1008 = vpop.f32.mrb[0].mxu0
      %v1009 = vadd.f32 %v912, %v1008
      %v1010 = vpop.f32.mrb[0].mxu0
      %1011 = vmatprep.mubr.f32.mxu0 0.0
      %1012 = vmatmul.mubr.f32.gmra.mrb[0].mxu0 %v932
      %v1013 = vpop.f32.mrb[0].mxu0
      %v1014 = vadd.f32 %v917, %v1013
      %v1015 = vpop.f32.mrb[0].mxu0
      %1016 = vmatprep.mubr.f32.mxu0 0.0
      %1017 = vmatmul.mubr.f32.gmra.mrb[0].mxu0 %v935
      %v1018 = vpop.f32.mrb[0].mxu0
      %v1019 = vadd.f32 %v922, %v1018
      %v1020 = vpop.f32.mrb[0].mxu0
      %1021 = vdwg.mxu0
      %v1022 = vadd.f32 %v634, %v1004
      %v1023 = vadd.f32 %v635, %v1009
      %v1024 = vmul.f32 %v1022, 0.70710677
      %v1025 = vmul.f32 %v1023, 0.70710677
      %v1026 = vadd.f32 %v1014, 0.0
      %v1027 = vadd.f32 %v1019, 0.0
      %1030 = vrot.lane.b32.xlu0 %v1024, 4
      %v1031 = vpop.permute.xlu0 %1030
      %1032 = vrot.lane.b32.xlu0 %v1025, 4
      %v1033 = vpop.permute.xlu0 %1032
      %v1036 = vsel %vm548, 0.0, %v1031
      %v1037 = vsel %vm548, 0.0, %v1033
      %1038 = vst [vmem:[#allocation2] sm:$0xff] %v1036
      %1039 = vst [vmem:[#allocation2 + $0x8] sm:$0xff] %v1037
      %1040 = vrot.lane.b32.xlu0 %v1024, 2
      %v1041 = vpop.permute.xlu0 %1040
      %1042 = vrot.lane.b32.xlu0 %v1025, 2
      %v1043 = vpop.permute.xlu0 %1042
      %v1046 = vsel %vm523, 0.0, %v1041
      %v1047 = vsel %vm523, 0.0, %v1043
      %1048 = vst [vmem:[#allocation2 + $0x10] sm:$0xff] %v1046
      %1049 = vst [vmem:[#allocation2 + $0x18] sm:$0xff] %v1047
      %1050 = vst [vmem:[#allocation2 + $0x20] sm:$0xff] %v1024
      %1051 = vst [vmem:[#allocation2 + $0x28] sm:$0xff] %v1025
      %s1052 = scalar_lea.vmem %s5, 64
      %v1053 = vld [vmem:[%s1052] sm:$0xff]
      %v1054 = vld [vmem:[%s1052 + $0x8] sm:$0xff]
      %v1055 = vld [vmem:[%s1052 + $0x10] sm:$0xff]
      %v1056 = vld [vmem:[%s1052 + $0x18] sm:$0xff]
      %v1057 = vld [vmem:[%s1052 + $0x20] sm:$0xff]
      %v1058 = vld [vmem:[%s1052 + $0x28] sm:$0xff]
      %v1059 = vld [vmem:[%s1052 + $0x30] sm:$0xff]
      %v1060 = vld [vmem:[%s1052 + $0x38] sm:$0xff]
      %v1061 = vld [vmem:[#allocation2] sm:$0xff]
      %v1062 = vld [vmem:[#allocation2 + $0x8] sm:$0xff]
      %v1063 = vld [vmem:[#allocation2 + $0x10] sm:$0xff]
      %v1064 = vld [vmem:[#allocation2 + $0x18] sm:$0xff]
      %v1065 = vld [vmem:[#allocation2 + $0x20] sm:$0xff]
      %v1066 = vld [vmem:[#allocation2 + $0x28] sm:$0xff]
      %v1067 = vld [vmem:[#allocation2 + $0x30] sm:$0xff]
      %v1068 = vld [vmem:[#allocation2 + $0x38] sm:$0xff]
      %v1069 = vld [vmem:[#allocation2 + $0x40] sm:$0xff]
      %v1070 = vld [vmem:[#allocation2 + $0x48] sm:$0xff]
      %s1071 = scalar_lea.vmem %s6, 64
      %v1072 = vld [vmem:[%s1071] sm:$0xff]
      %v1073 = vld [vmem:[%s1071 + $0x8] sm:$0xff]
      %v1074 = vld [vmem:[%s1071 + $0x10] sm:$0xff]
      %v1075 = vld [vmem:[%s1071 + $0x18] sm:$0xff]
      %v1076 = vld [vmem:[%s1071 + $0x20] sm:$0xff]
      %v1077 = vld [vmem:[%s1071 + $0x28] sm:$0xff]
      %v1078 = vld [vmem:[%s1071 + $0x30] sm:$0xff]
      %v1079 = vld [vmem:[%s1071 + $0x38] sm:$0xff]
      %1081 = vset.pattern.permute.xlu0 0
      %1082 = vperm.xlu0 %1081, %v1072
      %v1083 = vpop.permute.xlu0 %1082
      %1086 = vset.pattern.permute.xlu0 0
      %1087 = vperm.xlu0 %1086, %v1073
      %v1088 = vpop.permute.xlu0 %1087
      %1091 = vset.pattern.permute.xlu0 0
      %1092 = vperm.xlu0 %1091, %v1074
      %v1093 = vpop.permute.xlu0 %1092
      %1096 = vset.pattern.permute.xlu0 0
      %1097 = vperm.xlu0 %1096, %v1075
      %v1098 = vpop.permute.xlu0 %1097
      %1101 = vset.pattern.permute.xlu0 0
      %1102 = vperm.xlu0 %1101, %v1076
      %v1103 = vpop.permute.xlu0 %1102
      %1106 = vset.pattern.permute.xlu0 0
      %1107 = vperm.xlu0 %1106, %v1077
      %v1108 = vpop.permute.xlu0 %1107
      %1111 = vset.pattern.permute.xlu0 0
      %1112 = vperm.xlu0 %1111, %v1078
      %v1113 = vpop.permute.xlu0 %1112
      %1116 = vset.pattern.permute.xlu0 0
      %1117 = vperm.xlu0 %1116, %v1079
      %v1118 = vpop.permute.xlu0 %1117
      %v1121 = vsel %vm734, %v1053, 0
      %v1124 = vsel %vm734, %v1054, 0
      %v1127 = vsel %vm734, %v1055, 0
      %v1130 = vsel %vm734, %v1056, 0
      %v1133 = vsel %vm734, %v1057, 0
      %v1136 = vsel %vm734, %v1058, 0
      %v1139 = vsel %vm734, %v1059, 0
      %v1142 = vsel %vm734, %v1060, 0
      %1144 = vmatprep.subr.mxu0 0.0
      %1145 = vmatpush1.msra.mxu0 %v1061
      %1146 = vmatprep.subr.mxu0 0.0
      %1147 = vmatpush1.msra.mxu0 %v1062
      %1148 = vmatprep.subr.mxu0 0.0
      %1149 = vmatpush1.msra.mxu0 %v1063
      %1150 = vmatprep.subr.mxu0 0.0
      %1151 = vmatpush1.msra.mxu0 %v1064
      %1152 = vmatprep.subr.mxu0 0.0
      %1153 = vmatpush1.msra.mxu0 %v1065
      %1154 = vmatprep.subr.mxu0 0.0
      %1155 = vmatpush1.msra.mxu0 %v1066
      %1156 = vmatprep.subr.mxu0 0.0
      %1157 = vmatpush1.msra.mxu0 %v1067
      %1158 = vmatprep.subr.mxu0 0.0
      %1159 = vmatpush1.msra.mxu0 %v1068
      %1160 = vmatprep.subr.mxu0 0.0
      %1161 = vmatpush1.msra.mxu0 %v1069
      %1162 = vmatprep.subr.mxu0 0.0
      %1163 = vmatpush1.msra.mxu0 %v1070
      %1164 = vmatprep.subr.mxu0 0.0
      %1165 = vmatpush1.msra.mxu0 0.0
      %1166 = vmatprep.subr.mxu0 0.0
      %1167 = vmatpush1.msra.mxu0 0.0
      %1168 = vmatprep.subr.mxu0 0.0
      %1169 = vmatpush1.msra.mxu0 0.0
      %1170 = vmatprep.subr.mxu0 0.0
      %1171 = vmatpush1.msra.mxu0 0.0
      %1172 = vmatprep.subr.mxu0 0.0
      %1173 = vmatpush1.msra.mxu0 0.0
      %1174 = vmatprep.subr.mxu0 0.0
      %1175 = vmatpush1.msra.mxu0 0.0
      %1176 = vmatprep.subr.mxu0 0.0
      %1177 = vmatpush1.msra.mxu0 0.0
      %1178 = vmatprep.subr.mxu0 0.0
      %1179 = vmatpush1.msra.mxu0 0.0
      %1180 = vmatprep.subr.mxu0 0.0
      %1181 = vmatpush1.msra.mxu0 0.0
      %1182 = vmatprep.subr.mxu0 0.0
      %1183 = vmatpush1.msra.mxu0 0.0
      %1184 = vmatprep.subr.mxu0 0.0
      %1185 = vmatpush1.msra.mxu0 0.0
      %1186 = vmatprep.subr.mxu0 0.0
      %1187 = vmatpush1.msra.mxu0 0.0
      %1188 = vmatprep.subr.mxu0 0.0
      %1189 = vmatpush1.msra.mxu0 0.0
      %1190 = vmatprep.subr.mxu0 0.0
      %1191 = vmatpush1.msra.mxu0 0.0
      %1192 = vmatprep.subr.mxu0 0.0
      %1193 = vmatpush1.msra.mxu0 0.0
      %1194 = vmatprep.subr.mxu0 0.0
      %1195 = vmatpush1.msra.mxu0 0.0
      %1196 = vmatprep.subr.mxu0 0.0
      %1197 = vmatpush1.msra.mxu0 0.0
      %1198 = vmatprep.subr.mxu0 0.0
      %1199 = vmatpush1.msra.mxu0 0.0
      %1200 = vmatprep.subr.mxu0 0.0
      %1201 = vmatpush1.msra.mxu0 0.0
      %1202 = vmatprep.subr.mxu0 0.0
      %1203 = vmatpush1.msra.mxu0 0.0
      %1204 = vmatprep.subr.mxu0 0.0
      %1205 = vmatpush1.msra.mxu0 0.0
      %1206 = vmatprep.subr.mxu0 0.0
      %1207 = vmatpush1.msra.mxu0 0.0
      %1208 = vmatprep.mubr.f32.mxu0 0.0
      %1209 = vmatmul.mubr.f32.gmra.mrb[0].mxu0 %v1121
      %v1210 = vpop.f32.mrb[0].mxu0
      %v1211 = vadd.f32 %v1083, %v1210
      %v1212 = vpop.f32.mrb[0].mxu0
      %1213 = vmatprep.mubr.f32.mxu0 0.0
      %1214 = vmatmul.mubr.f32.gmra.mrb[0].mxu0 %v1124
      %v1215 = vpop.f32.mrb[0].mxu0
      %v1216 = vadd.f32 %v1088, %v1215
      %v1217 = vpop.f32.mrb[0].mxu0
      %1218 = vmatprep.mubr.f32.mxu0 0.0
      %1219 = vmatmul.mubr.f32.gmra.mrb[0].mxu0 %v1127
      %v1220 = vpop.f32.mrb[0].mxu0
      %v1221 = vadd.f32 %v1093, %v1220
      %v1222 = vpop.f32.mrb[0].mxu0
      %1223 = vmatprep.mubr.f32.mxu0 0.0
      %1224 = vmatmul.mubr.f32.gmra.mrb[0].mxu0 %v1130
      %v1225 = vpop.f32.mrb[0].mxu0
      %v1226 = vadd.f32 %v1098, %v1225
      %v1227 = vpop.f32.mrb[0].mxu0
      %1228 = vmatprep.mubr.f32.mxu0 0.0
      %1229 = vmatmul.mubr.f32.gmra.mrb[0].mxu0 %v1133
      %v1230 = vpop.f32.mrb[0].mxu0
      %v1231 = vadd.f32 %v1103, %v1230
      %v1232 = vpop.f32.mrb[0].mxu0
      %1233 = vmatprep.mubr.f32.mxu0 0.0
      %1234 = vmatmul.mubr.f32.gmra.mrb[0].mxu0 %v1136
      %v1235 = vpop.f32.mrb[0].mxu0
      %v1236 = vadd.f32 %v1108, %v1235
      %v1237 = vpop.f32.mrb[0].mxu0
      %1238 = vmatprep.mubr.f32.mxu0 0.0
      %1239 = vmatmul.mubr.f32.gmra.mrb[0].mxu0 %v1139
      %v1240 = vpop.f32.mrb[0].mxu0
      %v1241 = vadd.f32 %v1113, %v1240
      %v1242 = vpop.f32.mrb[0].mxu0
      %1243 = vmatprep.mubr.f32.mxu0 0.0
      %1244 = vmatmul.mubr.f32.gmra.mrb[0].mxu0 %v1142
      %v1245 = vpop.f32.mrb[0].mxu0
      %v1246 = vadd.f32 %v1118, %v1245
      %v1247 = vpop.f32.mrb[0].mxu0
      %1248 = vdwg.mxu0
      %v1249 = vtanh.pop %v1211
      %v1250 = vtanh.pop %v1216
      %v1251 = vtanh.pop %v1221
      %v1252 = vtanh.pop %v1226
      %v1253 = vxor.u32 %v1231, 2147483648
      %v1254 = vxor.u32 %v1236, 2147483648
      %v1255 = vxor.u32 %v1241, 2147483648
      %v1256 = vxor.u32 %v1246, 2147483648
      %v1257 = vmul.f32 %v1253, 1.442695
      %v1258 = vpow.pop %v1257
      %v1259 = vmul.f32 %v1254, 1.442695
      %v1260 = vpow.pop %v1259
      %v1261 = vmul.f32 %v1255, 1.442695
      %v1262 = vpow.pop %v1261
      %v1263 = vmul.f32 %v1256, 1.442695
      %v1264 = vpow.pop %v1263
      %v1265 = vadd.f32 %v1258, 1.0
      %v1266 = vadd.f32 %v1260, 1.0
      %v1267 = vadd.f32 %v1262, 1.0
      %v1268 = vadd.f32 %v1264, 1.0
      %v1269 = vrcp.pop %v1265
      %v1270 = vmul.f32 1.0, %v1269
      %v1271 = vrcp.pop %v1266
      %v1272 = vmul.f32 1.0, %v1271
      %v1273 = vrcp.pop %v1267
      %v1274 = vmul.f32 1.0, %v1273
      %v1275 = vrcp.pop %v1268
      %v1276 = vmul.f32 1.0, %v1275
      %v1277 = vmul.f32 %v1249, %v1270
      %v1278 = vmul.f32 %v1250, %v1272
      %v1279 = vmul.f32 %v1251, %v1274
      %v1280 = vmul.f32 %v1252, %v1276
      %s1281 = scalar_lea.vmem %s7, 32
      %v1282 = vld [vmem:[%s1281] sm:$0xff]
      %v1283 = vld [vmem:[%s1281 + $0x8] sm:$0xff]
      %v1284 = vld [vmem:[%s1281 + $0x10] sm:$0xff]
      %v1285 = vld [vmem:[%s1281 + $0x18] sm:$0xff]
      %s1286 = scalar_lea.vmem %s8, 32
      %v1287 = vld [vmem:[%s1286] sm:$0xff]
      %v1288 = vld [vmem:[%s1286 + $0x8] sm:$0xff]
      %v1289 = vld [vmem:[%s1286 + $0x10] sm:$0xff]
      %v1290 = vld [vmem:[%s1286 + $0x18] sm:$0xff]
      %1292 = vset.pattern.permute.xlu0 0
      %1293 = vperm.xlu0 %1292, %v1287
      %v1294 = vpop.permute.xlu0 %1293
      %1297 = vset.pattern.permute.xlu0 0
      %1298 = vperm.xlu0 %1297, %v1288
      %v1299 = vpop.permute.xlu0 %1298
      %1302 = vset.pattern.permute.xlu0 0
      %1303 = vperm.xlu0 %1302, %v1289
      %v1304 = vpop.permute.xlu0 %1303
      %1307 = vset.pattern.permute.xlu0 0
      %1308 = vperm.xlu0 %1307, %v1290
      %v1309 = vpop.permute.xlu0 %1308
      %v1312 = vsel %vm924, %v1282, 0
      %v1315 = vsel %vm924, %v1283, 0
      %v1318 = vsel %vm924, %v1284, 0
      %v1321 = vsel %vm924, %v1285, 0
      %1323 = vmatprep.subr.mxu0 0.0
      %1324 = vmatpush1.msra.mxu0 %v1277
      %1325 = vmatprep.subr.mxu0 0.0
      %1326 = vmatpush1.msra.mxu0 %v1278
      %1327 = vmatprep.subr.mxu0 0.0
      %1328 = vmatpush1.msra.mxu0 %v1279
      %1329 = vmatprep.subr.mxu0 0.0
      %1330 = vmatpush1.msra.mxu0 %v1280
      %1331 = vmatprep.subr.mxu0 0.0
      %1332 = vmatpush1.msra.mxu0 0.0
      %1333 = vmatprep.subr.mxu0 0.0
      %1334 = vmatpush1.msra.mxu0 0.0
      %1335 = vmatprep.subr.mxu0 0.0
      %1336 = vmatpush1.msra.mxu0 0.0
      %1337 = vmatprep.subr.mxu0 0.0
      %1338 = vmatpush1.msra.mxu0 0.0
      %1339 = vmatprep.subr.mxu0 0.0
      %1340 = vmatpush1.msra.mxu0 0.0
      %1341 = vmatprep.subr.mxu0 0.0
      %1342 = vmatpush1.msra.mxu0 0.0
      %1343 = vmatprep.subr.mxu0 0.0
      %1344 = vmatpush1.msra.mxu0 0.0
      %1345 = vmatprep.subr.mxu0 0.0
      %1346 = vmatpush1.msra.mxu0 0.0
      %1347 = vmatprep.subr.mxu0 0.0
      %1348 = vmatpush1.msra.mxu0 0.0
      %1349 = vmatprep.subr.mxu0 0.0
      %1350 = vmatpush1.msra.mxu0 0.0
      %1351 = vmatprep.subr.mxu0 0.0
      %1352 = vmatpush1.msra.mxu0 0.0
      %1353 = vmatprep.subr.mxu0 0.0
      %1354 = vmatpush1.msra.mxu0 0.0
      %1355 = vmatprep.subr.mxu0 0.0
      %1356 = vmatpush1.msra.mxu0 0.0
      %1357 = vmatprep.subr.mxu0 0.0
      %1358 = vmatpush1.msra.mxu0 0.0
      %1359 = vmatprep.subr.mxu0 0.0
      %1360 = vmatpush1.msra.mxu0 0.0
      %1361 = vmatprep.subr.mxu0 0.0
      %1362 = vmatpush1.msra.mxu0 0.0
      %1363 = vmatprep.subr.mxu0 0.0
      %1364 = vmatpush1.msra.mxu0 0.0
      %1365 = vmatprep.subr.mxu0 0.0
      %1366 = vmatpush1.msra.mxu0 0.0
      %1367 = vmatprep.subr.mxu0 0.0
      %1368 = vmatpush1.msra.mxu0 0.0
      %1369 = vmatprep.subr.mxu0 0.0
      %1370 = vmatpush1.msra.mxu0 0.0
      %1371 = vmatprep.subr.mxu0 0.0
      %1372 = vmatpush1.msra.mxu0 0.0
      %1373 = vmatprep.subr.mxu0 0.0
      %1374 = vmatpush1.msra.mxu0 0.0
      %1375 = vmatprep.subr.mxu0 0.0
      %1376 = vmatpush1.msra.mxu0 0.0
      %1377 = vmatprep.subr.mxu0 0.0
      %1378 = vmatpush1.msra.mxu0 0.0
      %1379 = vmatprep.subr.mxu0 0.0
      %1380 = vmatpush1.msra.mxu0 0.0
      %1381 = vmatprep.subr.mxu0 0.0
      %1382 = vmatpush1.msra.mxu0 0.0
      %1383 = vmatprep.subr.mxu0 0.0
      %1384 = vmatpush1.msra.mxu0 0.0
      %1385 = vmatprep.subr.mxu0 0.0
      %1386 = vmatpush1.msra.mxu0 0.0
      %1387 = vmatprep.mubr.f32.mxu0 0.0
      %1388 = vmatmul.mubr.f32.gmra.mrb[0].mxu0 %v1312
      %v1389 = vpop.f32.mrb[0].mxu0
      %v1390 = vadd.f32 %v1294, %v1389
      %v1391 = vpop.f32.mrb[0].mxu0
      %1392 = vmatprep.mubr.f32.mxu0 0.0
      %1393 = vmatmul.mubr.f32.gmra.mrb[0].mxu0 %v1315
      %v1394 = vpop.f32.mrb[0].mxu0
      %v1395 = vadd.f32 %v1299, %v1394
      %v1396 = vpop.f32.mrb[0].mxu0
      %1397 = vmatprep.mubr.f32.mxu0 0.0
      %1398 = vmatmul.mubr.f32.gmra.mrb[0].mxu0 %v1318
      %v1399 = vpop.f32.mrb[0].mxu0
      %v1400 = vadd.f32 %v1304, %v1399
      %v1401 = vpop.f32.mrb[0].mxu0
      %1402 = vmatprep.mubr.f32.mxu0 0.0
      %1403 = vmatmul.mubr.f32.gmra.mrb[0].mxu0 %v1321
      %v1404 = vpop.f32.mrb[0].mxu0
      %v1405 = vadd.f32 %v1309, %v1404
      %v1406 = vpop.f32.mrb[0].mxu0
      %1407 = vdwg.mxu0
      %v1408 = vadd.f32 %v1024, %v1390
      %v1409 = vadd.f32 %v1025, %v1395
      %v1410 = vmul.f32 %v1408, 0.70710677
      %v1411 = vmul.f32 %v1409, 0.70710677
      %v1412 = vadd.f32 %v1026, %v1400
      %v1413 = vadd.f32 %v1027, %v1405
      %1416 = vrot.lane.b32.xlu0 %v1410, 8
      %v1417 = vpop.permute.xlu0 %1416
      %1418 = vrot.lane.b32.xlu0 %v1411, 8
      %v1419 = vpop.permute.xlu0 %1418
      %vm1422 = vcmask 64512
      %v1423 = vsel %vm1422, 0.0, %v1417
      %v1424 = vsel %vm1422, 0.0, %v1419
      %1425 = vst [vmem:[#allocation2] sm:$0xff] %v1423
      %1426 = vst [vmem:[#allocation2 + $0x8] sm:$0xff] %v1424
      %1427 = vrot.lane.b32.xlu0 %v1410, 4
      %v1428 = vpop.permute.xlu0 %1427
      %1429 = vrot.lane.b32.xlu0 %v1411, 4
      %v1430 = vpop.permute.xlu0 %1429
      %v1433 = vsel %vm548, 0.0, %v1428
      %v1434 = vsel %vm548, 0.0, %v1430
      %1435 = vst [vmem:[#allocation2 + $0x10] sm:$0xff] %v1433
      %1436 = vst [vmem:[#allocation2 + $0x18] sm:$0xff] %v1434
      %1437 = vst [vmem:[#allocation2 + $0x20] sm:$0xff] %v1410
      %1438 = vst [vmem:[#allocation2 + $0x28] sm:$0xff] %v1411
      %s1439 = scalar_lea.vmem %s5, 128
      %v1440 = vld [vmem:[%s1439] sm:$0xff]
      %v1441 = vld [vmem:[%s1439 + $0x8] sm:$0xff]
      %v1442 = vld [vmem:[%s1439 + $0x10] sm:$0xff]
      %v1443 = vld [vmem:[%s1439 + $0x18] sm:$0xff]
      %v1444 = vld [vmem:[%s1439 + $0x20] sm:$0xff]
      %v1445 = vld [vmem:[%s1439 + $0x28] sm:$0xff]
      %v1446 = vld [vmem:[%s1439 + $0x30] sm:$0xff]
      %v1447 = vld [vmem:[%s1439 + $0x38] sm:$0xff]
      %v1448 = vld [vmem:[#allocation2] sm:$0xff]
      %v1449 = vld [vmem:[#allocation2 + $0x8] sm:$0xff]
      %v1450 = vld [vmem:[#allocation2 + $0x10] sm:$0xff]
      %v1451 = vld [vmem:[#allocation2 + $0x18] sm:$0xff]
      %v1452 = vld [vmem:[#allocation2 + $0x20] sm:$0xff]
      %v1453 = vld [vmem:[#allocation2 + $0x28] sm:$0xff]
      %v1454 = vld [vmem:[#allocation2 + $0x30] sm:$0xff]
      %v1455 = vld [vmem:[#allocation2 + $0x38] sm:$0xff]
      %v1456 = vld [vmem:[#allocation2 + $0x40] sm:$0xff]
      %v1457 = vld [vmem:[#allocation2 + $0x48] sm:$0xff]
      %s1458 = scalar_lea.vmem %s6, 128
      %v1459 = vld [vmem:[%s1458] sm:$0xff]
      %v1460 = vld [vmem:[%s1458 + $0x8] sm:$0xff]
      %v1461 = vld [vmem:[%s1458 + $0x10] sm:$0xff]
      %v1462 = vld [vmem:[%s1458 + $0x18] sm:$0xff]
      %v1463 = vld [vmem:[%s1458 + $0x20] sm:$0xff]
      %v1464 = vld [vmem:[%s1458 + $0x28] sm:$0xff]
      %v1465 = vld [vmem:[%s1458 + $0x30] sm:$0xff]
      %v1466 = vld [vmem:[%s1458 + $0x38] sm:$0xff]
      %1468 = vset.pattern.permute.xlu0 0
      %1469 = vperm.xlu0 %1468, %v1459
      %v1470 = vpop.permute.xlu0 %1469
      %1473 = vset.pattern.permute.xlu0 0
      %1474 = vperm.xlu0 %1473, %v1460
      %v1475 = vpop.permute.xlu0 %1474
      %1478 = vset.pattern.permute.xlu0 0
      %1479 = vperm.xlu0 %1478, %v1461
      %v1480 = vpop.permute.xlu0 %1479
      %1483 = vset.pattern.permute.xlu0 0
      %1484 = vperm.xlu0 %1483, %v1462
      %v1485 = vpop.permute.xlu0 %1484
      %1488 = vset.pattern.permute.xlu0 0
      %1489 = vperm.xlu0 %1488, %v1463
      %v1490 = vpop.permute.xlu0 %1489
      %1493 = vset.pattern.permute.xlu0 0
      %1494 = vperm.xlu0 %1493, %v1464
      %v1495 = vpop.permute.xlu0 %1494
      %1498 = vset.pattern.permute.xlu0 0
      %1499 = vperm.xlu0 %1498, %v1465
      %v1500 = vpop.permute.xlu0 %1499
      %1503 = vset.pattern.permute.xlu0 0
      %1504 = vperm.xlu0 %1503, %v1466
      %v1505 = vpop.permute.xlu0 %1504
      %v1508 = vsel %vm734, %v1440, 0
      %v1511 = vsel %vm734, %v1441, 0
      %v1514 = vsel %vm734, %v1442, 0
      %v1517 = vsel %vm734, %v1443, 0
      %v1520 = vsel %vm734, %v1444, 0
      %v1523 = vsel %vm734, %v1445, 0
      %v1526 = vsel %vm734, %v1446, 0
      %v1529 = vsel %vm734, %v1447, 0
      %1531 = vmatprep.subr.mxu0 0.0
      %1532 = vmatpush1.msra.mxu0 %v1448
      %1533 = vmatprep.subr.mxu0 0.0
      %1534 = vmatpush1.msra.mxu0 %v1449
      %1535 = vmatprep.subr.mxu0 0.0
      %1536 = vmatpush1.msra.mxu0 %v1450
      %1537 = vmatprep.subr.mxu0 0.0
      %1538 = vmatpush1.msra.mxu0 %v1451
      %1539 = vmatprep.subr.mxu0 0.0
      %1540 = vmatpush1.msra.mxu0 %v1452
      %1541 = vmatprep.subr.mxu0 0.0
      %1542 = vmatpush1.msra.mxu0 %v1453
      %1543 = vmatprep.subr.mxu0 0.0
      %1544 = vmatpush1.msra.mxu0 %v1454
      %1545 = vmatprep.subr.mxu0 0.0
      %1546 = vmatpush1.msra.mxu0 %v1455
      %1547 = vmatprep.subr.mxu0 0.0
      %1548 = vmatpush1.msra.mxu0 %v1456
      %1549 = vmatprep.subr.mxu0 0.0
      %1550 = vmatpush1.msra.mxu0 %v1457
      %1551 = vmatprep.subr.mxu0 0.0
      %1552 = vmatpush1.msra.mxu0 0.0
      %1553 = vmatprep.subr.mxu0 0.0
      %1554 = vmatpush1.msra.mxu0 0.0
      %1555 = vmatprep.subr.mxu0 0.0
      %1556 = vmatpush1.msra.mxu0 0.0
      %1557 = vmatprep.subr.mxu0 0.0
      %1558 = vmatpush1.msra.mxu0 0.0
      %1559 = vmatprep.subr.mxu0 0.0
      %1560 = vmatpush1.msra.mxu0 0.0
      %1561 = vmatprep.subr.mxu0 0.0
      %1562 = vmatpush1.msra.mxu0 0.0
      %1563 = vmatprep.subr.mxu0 0.0
      %1564 = vmatpush1.msra.mxu0 0.0
      %1565 = vmatprep.subr.mxu0 0.0
      %1566 = vmatpush1.msra.mxu0 0.0
      %1567 = vmatprep.subr.mxu0 0.0
      %1568 = vmatpush1.msra.mxu0 0.0
      %1569 = vmatprep.subr.mxu0 0.0
      %1570 = vmatpush1.msra.mxu0 0.0
      %1571 = vmatprep.subr.mxu0 0.0
      %1572 = vmatpush1.msra.mxu0 0.0
      %1573 = vmatprep.subr.mxu0 0.0
      %1574 = vmatpush1.msra.mxu0 0.0
      %1575 = vmatprep.subr.mxu0 0.0
      %1576 = vmatpush1.msra.mxu0 0.0
      %1577 = vmatprep.subr.mxu0 0.0
      %1578 = vmatpush1.msra.mxu0 0.0
      %1579 = vmatprep.subr.mxu0 0.0
      %1580 = vmatpush1.msra.mxu0 0.0
      %1581 = vmatprep.subr.mxu0 0.0
      %1582 = vmatpush1.msra.mxu0 0.0
      %1583 = vmatprep.subr.mxu0 0.0
      %1584 = vmatpush1.msra.mxu0 0.0
      %1585 = vmatprep.subr.mxu0 0.0
      %1586 = vmatpush1.msra.mxu0 0.0
      %1587 = vmatprep.subr.mxu0 0.0
      %1588 = vmatpush1.msra.mxu0 0.0
      %1589 = vmatprep.subr.mxu0 0.0
      %1590 = vmatpush1.msra.mxu0 0.0
      %1591 = vmatprep.subr.mxu0 0.0
      %1592 = vmatpush1.msra.mxu0 0.0
      %1593 = vmatprep.subr.mxu0 0.0
      %1594 = vmatpush1.msra.mxu0 0.0
      %1595 = vmatprep.mubr.f32.mxu0 0.0
      %1596 = vmatmul.mubr.f32.gmra.mrb[0].mxu0 %v1508
      %v1597 = vpop.f32.mrb[0].mxu0
      %v1598 = vadd.f32 %v1470, %v1597
      %v1599 = vpop.f32.mrb[0].mxu0
      %1600 = vmatprep.mubr.f32.mxu0 0.0
      %1601 = vmatmul.mubr.f32.gmra.mrb[0].mxu0 %v1511
      %v1602 = vpop.f32.mrb[0].mxu0
      %v1603 = vadd.f32 %v1475, %v1602
      %v1604 = vpop.f32.mrb[0].mxu0
      %1605 = vmatprep.mubr.f32.mxu0 0.0
      %1606 = vmatmul.mubr.f32.gmra.mrb[0].mxu0 %v1514
      %v1607 = vpop.f32.mrb[0].mxu0
      %v1608 = vadd.f32 %v1480, %v1607
      %v1609 = vpop.f32.mrb[0].mxu0
      %1610 = vmatprep.mubr.f32.mxu0 0.0
      %1611 = vmatmul.mubr.f32.gmra.mrb[0].mxu0 %v1517
      %v1612 = vpop.f32.mrb[0].mxu0
      %v1613 = vadd.f32 %v1485, %v1612
      %v1614 = vpop.f32.mrb[0].mxu0
      %1615 = vmatprep.mubr.f32.mxu0 0.0
      %1616 = vmatmul.mubr.f32.gmra.mrb[0].mxu0 %v1520
      %v1617 = vpop.f32.mrb[0].mxu0
      %v1618 = vadd.f32 %v1490, %v1617
      %v1619 = vpop.f32.mrb[0].mxu0
      %1620 = vmatprep.mubr.f32.mxu0 0.0
      %1621 = vmatmul.mubr.f32.gmra.mrb[0].mxu0 %v1523
      %v1622 = vpop.f32.mrb[0].mxu0
      %v1623 = vadd.f32 %v1495, %v1622
      %v1624 = vpop.f32.mrb[0].mxu0
      %1625 = vmatprep.mubr.f32.mxu0 0.0
      %1626 = vmatmul.mubr.f32.gmra.mrb[0].mxu0 %v1526
      %v1627 = vpop.f32.mrb[0].mxu0
      %v1628 = vadd.f32 %v1500, %v1627
      %v1629 = vpop.f32.mrb[0].mxu0
      %1630 = vmatprep.mubr.f32.mxu0 0.0
      %1631 = vmatmul.mubr.f32.gmra.mrb[0].mxu0 %v1529
      %v1632 = vpop.f32.mrb[0].mxu0
      %v1633 = vadd.f32 %v1505, %v1632
      %v1634 = vpop.f32.mrb[0].mxu0
      %1635 = vdwg.mxu0
      %v1636 = vtanh.pop %v1598
      %v1637 = vtanh.pop %v1603
      %v1638 = vtanh.pop %v1608
      %v1639 = vtanh.pop %v1613
      %v1640 = vxor.u32 %v1618, 2147483648
      %v1641 = vxor.u32 %v1623, 2147483648
      %v1642 = vxor.u32 %v1628, 2147483648
      %v1643 = vxor.u32 %v1633, 2147483648
      %v1644 = vmul.f32 %v1640, 1.442695
      %v1645 = vpow.pop %v1644
      %v1646 = vmul.f32 %v1641, 1.442695
      %v1647 = vpow.pop %v1646
      %v1648 = vmul.f32 %v1642, 1.442695
      %v1649 = vpow.pop %v1648
      %v1650 = vmul.f32 %v1643, 1.442695
      %v1651 = vpow.pop %v1650
      %v1652 = vadd.f32 %v1645, 1.0
      %v1653 = vadd.f32 %v1647, 1.0
      %v1654 = vadd.f32 %v1649, 1.0
      %v1655 = vadd.f32 %v1651, 1.0
      %v1656 = vrcp.pop %v1652
      %v1657 = vmul.f32 1.0, %v1656
      %v1658 = vrcp.pop %v1653
      %v1659 = vmul.f32 1.0, %v1658
      %v1660 = vrcp.pop %v1654
      %v1661 = vmul.f32 1.0, %v1660
      %v1662 = vrcp.pop %v1655
      %v1663 = vmul.f32 1.0, %v1662
      %v1664 = vmul.f32 %v1636, %v1657
      %v1665 = vmul.f32 %v1637, %v1659
      %v1666 = vmul.f32 %v1638, %v1661
      %v1667 = vmul.f32 %v1639, %v1663
      %s1668 = scalar_lea.vmem %s7, 64
      %v1669 = vld [vmem:[%s1668] sm:$0xff]
      %v1670 = vld [vmem:[%s1668 + $0x8] sm:$0xff]
      %v1671 = vld [vmem:[%s1668 + $0x10] sm:$0xff]
      %v1672 = vld [vmem:[%s1668 + $0x18] sm:$0xff]
      %s1673 = scalar_lea.vmem %s8, 64
      %v1674 = vld [vmem:[%s1673] sm:$0xff]
      %v1675 = vld [vmem:[%s1673 + $0x8] sm:$0xff]
      %v1676 = vld [vmem:[%s1673 + $0x10] sm:$0xff]
      %v1677 = vld [vmem:[%s1673 + $0x18] sm:$0xff]
      %1679 = vset.pattern.permute.xlu0 0
      %1680 = vperm.xlu0 %1679, %v1674
      %v1681 = vpop.permute.xlu0 %1680
      %1683 = vset.pattern.permute.xlu0 0
      %1684 = vperm.xlu0 %1683, %v1675
      %v1685 = vpop.permute.xlu0 %1684
      %1687 = vset.pattern.permute.xlu0 0
      %1688 = vperm.xlu0 %1687, %v1676
      %v1689 = vpop.permute.xlu0 %1688
      %1692 = vset.pattern.permute.xlu0 0
      %1693 = vperm.xlu0 %1692, %v1677
      %v1694 = vpop.permute.xlu0 %1693
      %v1697 = vsel %vm924, %v1669, 0
      %v1700 = vsel %vm924, %v1670, 0
      %v1703 = vsel %vm924, %v1671, 0
      %v1706 = vsel %vm924, %v1672, 0
      %1708 = vmatprep.subr.mxu0 0.0
      %1709 = vmatpush1.msra.mxu0 %v1664
      %1710 = vmatprep.subr.mxu0 0.0
      %1711 = vmatpush1.msra.mxu0 %v1665
      %1712 = vmatprep.subr.mxu0 0.0
      %1713 = vmatpush1.msra.mxu0 %v1666
      %1714 = vmatprep.subr.mxu0 0.0
      %1715 = vmatpush1.msra.mxu0 %v1667
      %1716 = vmatprep.subr.mxu0 0.0
      %1717 = vmatpush1.msra.mxu0 0.0
      %1718 = vmatprep.subr.mxu0 0.0
      %1719 = vmatpush1.msra.mxu0 0.0
      %1720 = vmatprep.subr.mxu0 0.0
      %1721 = vmatpush1.msra.mxu0 0.0
      %1722 = vmatprep.subr.mxu0 0.0
      %1723 = vmatpush1.msra.mxu0 0.0
      %1724 = vmatprep.subr.mxu0 0.0
      %1725 = vmatpush1.msra.mxu0 0.0
      %1726 = vmatprep.subr.mxu0 0.0
      %1727 = vmatpush1.msra.mxu0 0.0
      %1728 = vmatprep.subr.mxu0 0.0
      %1729 = vmatpush1.msra.mxu0 0.0
      %1730 = vmatprep.subr.mxu0 0.0
      %1731 = vmatpush1.msra.mxu0 0.0
      %1732 = vmatprep.subr.mxu0 0.0
      %1733 = vmatpush1.msra.mxu0 0.0
      %1734 = vmatprep.subr.mxu0 0.0
      %1735 = vmatpush1.msra.mxu0 0.0
      %1736 = vmatprep.subr.mxu0 0.0
      %1737 = vmatpush1.msra.mxu0 0.0
      %1738 = vmatprep.subr.mxu0 0.0
      %1739 = vmatpush1.msra.mxu0 0.0
      %1740 = vmatprep.subr.mxu0 0.0
      %1741 = vmatpush1.msra.mxu0 0.0
      %1742 = vmatprep.subr.mxu0 0.0
      %1743 = vmatpush1.msra.mxu0 0.0
      %1744 = vmatprep.subr.mxu0 0.0
      %1745 = vmatpush1.msra.mxu0 0.0
      %1746 = vmatprep.subr.mxu0 0.0
      %1747 = vmatpush1.msra.mxu0 0.0
      %1748 = vmatprep.subr.mxu0 0.0
      %1749 = vmatpush1.msra.mxu0 0.0
      %1750 = vmatprep.subr.mxu0 0.0
      %1751 = vmatpush1.msra.mxu0 0.0
      %1752 = vmatprep.subr.mxu0 0.0
      %1753 = vmatpush1.msra.mxu0 0.0
      %1754 = vmatprep.subr.mxu0 0.0
      %1755 = vmatpush1.msra.mxu0 0.0
      %1756 = vmatprep.subr.mxu0 0.0
      %1757 = vmatpush1.msra.mxu0 0.0
      %1758 = vmatprep.subr.mxu0 0.0
      %1759 = vmatpush1.msra.mxu0 0.0
      %1760 = vmatprep.subr.mxu0 0.0
      %1761 = vmatpush1.msra.mxu0 0.0
      %1762 = vmatprep.subr.mxu0 0.0
      %1763 = vmatpush1.msra.mxu0 0.0
      %1764 = vmatprep.subr.mxu0 0.0
      %1765 = vmatpush1.msra.mxu0 0.0
      %1766 = vmatprep.subr.mxu0 0.0
      %1767 = vmatpush1.msra.mxu0 0.0
      %1768 = vmatprep.subr.mxu0 0.0
      %1769 = vmatpush1.msra.mxu0 0.0
      %1770 = vmatprep.subr.mxu0 0.0
      %1771 = vmatpush1.msra.mxu0 0.0
      %1772 = vmatprep.mubr.f32.mxu0 0.0
      %1773 = vmatmul.mubr.f32.gmra.mrb[0].mxu0 %v1697
      %v1774 = vpop.f32.mrb[0].mxu0
      %v1775 = vpop.f32.mrb[0].mxu0
      %1776 = vmatprep.mubr.f32.mxu0 0.0
      %1777 = vmatmul.mubr.f32.gmra.mrb[0].mxu0 %v1700
      %v1778 = vpop.f32.mrb[0].mxu0
      %v1779 = vpop.f32.mrb[0].mxu0
      %1780 = vmatprep.mubr.f32.mxu0 0.0
      %1781 = vmatmul.mubr.f32.gmra.mrb[0].mxu0 %v1703
      %v1782 = vpop.f32.mrb[0].mxu0
      %v1783 = vadd.f32 %v1689, %v1782
      %v1784 = vpop.f32.mrb[0].mxu0
      %1785 = vmatprep.mubr.f32.mxu0 0.0
      %1786 = vmatmul.mubr.f32.gmra.mrb[0].mxu0 %v1706
      %v1787 = vpop.f32.mrb[0].mxu0
      %v1788 = vadd.f32 %v1694, %v1787
      %v1789 = vpop.f32.mrb[0].mxu0
      %1790 = vdwg.mxu0
      %v1791 = vadd.f32 %v1412, %v1783
      %v1792 = vadd.f32 %v1413, %v1788
      %v1793 = vld [vmem:[%s9] sm:$0xff]
      %v1794 = vld [vmem:[%s9 + $0x8] sm:$0xff]
      %v1795 = vmax.f32 %v1791, 0.0
      %v1796 = vmax.f32 %v1792, 0.0
      %v1797 = vld [vmem:[%s10] sm:$0xff]
      %v1798 = vld [vmem:[%s10 + $0x8] sm:$0xff]
      %1800 = vset.pattern.permute.xlu0 0
      %1801 = vperm.xlu0 %1800, %v1797
      %v1802 = vpop.permute.xlu0 %1801
      %1805 = vset.pattern.permute.xlu0 0
      %1806 = vperm.xlu0 %1805, %v1798
      %v1807 = vpop.permute.xlu0 %1806
      %vm1809 = vcmask 130048
      %v1811 = vsel %vm1809, %v1793, 0
      %v1814 = vsel %vm1809, %v1794, 0
      %1816 = vmatprep.subr.mxu0 0.0
      %1817 = vmatpush1.msra.mxu0 %v1795
      %1818 = vmatprep.subr.mxu0 0.0
      %1819 = vmatpush1.msra.mxu0 %v1796
      %1820 = vmatprep.subr.mxu0 0.0
      %1821 = vmatpush1.msra.mxu0 0.0
      %1822 = vmatprep.subr.mxu0 0.0
      %1823 = vmatpush1.msra.mxu0 0.0
      %1824 = vmatprep.subr.mxu0 0.0
      %1825 = vmatpush1.msra.mxu0 0.0
      %1826 = vmatprep.subr.mxu0 0.0
      %1827 = vmatpush1.msra.mxu0 0.0
      %1828 = vmatprep.subr.mxu0 0.0
      %1829 = vmatpush1.msra.mxu0 0.0
      %1830 = vmatprep.subr.mxu0 0.0
      %1831 = vmatpush1.msra.mxu0 0.0
      %1832 = vmatprep.subr.mxu0 0.0
      %1833 = vmatpush1.msra.mxu0 0.0
      %1834 = vmatprep.subr.mxu0 0.0
      %1835 = vmatpush1.msra.mxu0 0.0
      %1836 = vmatprep.subr.mxu0 0.0
      %1837 = vmatpush1.msra.mxu0 0.0
      %1838 = vmatprep.subr.mxu0 0.0
      %1839 = vmatpush1.msra.mxu0 0.0
      %1840 = vmatprep.subr.mxu0 0.0
      %1841 = vmatpush1.msra.mxu0 0.0
      %1842 = vmatprep.subr.mxu0 0.0
      %1843 = vmatpush1.msra.mxu0 0.0
      %1844 = vmatprep.subr.mxu0 0.0
      %1845 = vmatpush1.msra.mxu0 0.0
      %1846 = vmatprep.subr.mxu0 0.0
      %1847 = vmatpush1.msra.mxu0 0.0
      %1848 = vmatprep.subr.mxu0 0.0
      %1849 = vmatpush1.msra.mxu0 0.0
      %1850 = vmatprep.subr.mxu0 0.0
      %1851 = vmatpush1.msra.mxu0 0.0
      %1852 = vmatprep.subr.mxu0 0.0
      %1853 = vmatpush1.msra.mxu0 0.0
      %1854 = vmatprep.subr.mxu0 0.0
      %1855 = vmatpush1.msra.mxu0 0.0
      %1856 = vmatprep.subr.mxu0 0.0
      %1857 = vmatpush1.msra.mxu0 0.0
      %1858 = vmatprep.subr.mxu0 0.0
      %1859 = vmatpush1.msra.mxu0 0.0
      %1860 = vmatprep.subr.mxu0 0.0
      %1861 = vmatpush1.msra.mxu0 0.0
      %1862 = vmatprep.subr.mxu0 0.0
      %1863 = vmatpush1.msra.mxu0 0.0
      %1864 = vmatprep.subr.mxu0 0.0
      %1865 = vmatpush1.msra.mxu0 0.0
      %1866 = vmatprep.subr.mxu0 0.0
      %1867 = vmatpush1.msra.mxu0 0.0
      %1868 = vmatprep.subr.mxu0 0.0
      %1869 = vmatpush1.msra.mxu0 0.0
      %1870 = vmatprep.subr.mxu0 0.0
      %1871 = vmatpush1.msra.mxu0 0.0
      %1872 = vmatprep.subr.mxu0 0.0
      %1873 = vmatpush1.msra.mxu0 0.0
      %1874 = vmatprep.subr.mxu0 0.0
      %1875 = vmatpush1.msra.mxu0 0.0
      %1876 = vmatprep.subr.mxu0 0.0
      %1877 = vmatpush1.msra.mxu0 0.0
      %1878 = vmatprep.subr.mxu0 0.0
      %1879 = vmatpush1.msra.mxu0 0.0
      %1880 = vmatprep.mubr.f32.mxu0 0.0
      %1881 = vmatmul.mubr.f32.gmra.mrb[0].mxu0 %v1811
      %v1882 = vpop.f32.mrb[0].mxu0
      %v1883 = vadd.f32 %v1802, %v1882
      %v1884 = vpop.f32.mrb[0].mxu0
      %1885 = vmatprep.mubr.f32.mxu0 0.0
      %1886 = vmatmul.mubr.f32.gmra.mrb[0].mxu0 %v1814
      %v1887 = vpop.f32.mrb[0].mxu0
      %v1888 = vadd.f32 %v1807, %v1887
      %v1889 = vpop.f32.mrb[0].mxu0
      %1890 = vdwg.mxu0
      %v1891 = vmax.f32 %v1883, 0.0
      %v1892 = vmax.f32 %v1888, 0.0
      %v1893 = vld [vmem:[%s11] sm:$0x3]
      %v1894 = vld [vmem:[%s12] sm:$0x3]
      %1896 = vset.pattern.permute.xlu0 0
      %1897 = vperm.xlu0 %1896, %v1894
      %v1898 = vpop.permute.xlu0 %1897
      %v1901 = vsel %vm1809, %v1893, 0
      %1903 = vmatprep.subr.mxu0 0.0
      %1904 = vmatpush1.msra.mxu0 %v1891
      %1905 = vmatprep.subr.mxu0 0.0
      %1906 = vmatpush1.msra.mxu0 %v1892
      %1907 = vmatprep.subr.mxu0 0.0
      %1908 = vmatpush1.msra.mxu0 0.0
      %1909 = vmatprep.subr.mxu0 0.0
      %1910 = vmatpush1.msra.mxu0 0.0
      %1911 = vmatprep.subr.mxu0 0.0
      %1912 = vmatpush1.msra.mxu0 0.0
      %1913 = vmatprep.subr.mxu0 0.0
      %1914 = vmatpush1.msra.mxu0 0.0
      %1915 = vmatprep.subr.mxu0 0.0
      %1916 = vmatpush1.msra.mxu0 0.0
      %1917 = vmatprep.subr.mxu0 0.0
      %1918 = vmatpush1.msra.mxu0 0.0
      %1919 = vmatprep.subr.mxu0 0.0
      %1920 = vmatpush1.msra.mxu0 0.0
      %1921 = vmatprep.subr.mxu0 0.0
      %1922 = vmatpush1.msra.mxu0 0.0
      %1923 = vmatprep.subr.mxu0 0.0
      %1924 = vmatpush1.msra.mxu0 0.0
      %1925 = vmatprep.subr.mxu0 0.0
      %1926 = vmatpush1.msra.mxu0 0.0
      %1927 = vmatprep.subr.mxu0 0.0
      %1928 = vmatpush1.msra.mxu0 0.0
      %1929 = vmatprep.subr.mxu0 0.0
      %1930 = vmatpush1.msra.mxu0 0.0
      %1931 = vmatprep.subr.mxu0 0.0
      %1932 = vmatpush1.msra.mxu0 0.0
      %1933 = vmatprep.subr.mxu0 0.0
      %1934 = vmatpush1.msra.mxu0 0.0
      %1935 = vmatprep.subr.mxu0 0.0
      %1936 = vmatpush1.msra.mxu0 0.0
      %1937 = vmatprep.subr.mxu0 0.0
      %1938 = vmatpush1.msra.mxu0 0.0
      %1939 = vmatprep.subr.mxu0 0.0
      %1940 = vmatpush1.msra.mxu0 0.0
      %1941 = vmatprep.subr.mxu0 0.0
      %1942 = vmatpush1.msra.mxu0 0.0
      %1943 = vmatprep.subr.mxu0 0.0
      %1944 = vmatpush1.msra.mxu0 0.0
      %1945 = vmatprep.subr.mxu0 0.0
      %1946 = vmatpush1.msra.mxu0 0.0
      %1947 = vmatprep.subr.mxu0 0.0
      %1948 = vmatpush1.msra.mxu0 0.0
      %1949 = vmatprep.subr.mxu0 0.0
      %1950 = vmatpush1.msra.mxu0 0.0
      %1951 = vmatprep.subr.mxu0 0.0
      %1952 = vmatpush1.msra.mxu0 0.0
      %1953 = vmatprep.subr.mxu0 0.0
      %1954 = vmatpush1.msra.mxu0 0.0
      %1955 = vmatprep.subr.mxu0 0.0
      %1956 = vmatpush1.msra.mxu0 0.0
      %1957 = vmatprep.subr.mxu0 0.0
      %1958 = vmatpush1.msra.mxu0 0.0
      %1959 = vmatprep.subr.mxu0 0.0
      %1960 = vmatpush1.msra.mxu0 0.0
      %1961 = vmatprep.subr.mxu0 0.0
      %1962 = vmatpush1.msra.mxu0 0.0
      %1963 = vmatprep.subr.mxu0 0.0
      %1964 = vmatpush1.msra.mxu0 0.0
      %1965 = vmatprep.subr.mxu0 0.0
      %1966 = vmatpush1.msra.mxu0 0.0
      %1967 = vmatprep.mubr.f32.mxu0 0.0
      %1968 = vmatmul.mubr.f32.gmra.mrb[0].mxu0 %v1901
      %v1969 = vpop.f32.mrb[0].mxu0
      %v1970 = vadd.f32 %v1898, %v1969
      %v1971 = vpop.f32.mrb[0].mxu0
      %1972 = vdwg.mxu0
      %v1973 = vld [vmem:[%s498] sm:$0x3]
      %v1974 = vmul.f32 %v1970, 1.442695
      %v1975 = vpow.pop %v1974
      %v1977 = vrot.slane %v1975, 1
      %v1979 = vmul.f32 %v1973, %v1977
      %v1980 = vadd.f32 %v1979, %v1970
      %v1981 = vadd.f32 %v1973, %v1970
      %vm1982 = vcmask 1040384
      %v1983 = vsel %vm1982, %v1980, %v1981
      %1984 = vst [vmem:[%s505] sm:$0x3] %v1983
      %1986 = vrot.lane.b32.xlu0 %v1970, 1
      %v1987 = vpop.permute.xlu0 %1986
      %v1989 = vsel %vm529, 0.0, %v1987
      %vm1990 = vcmp.ge.s32.totalorder %v508, 1
      %v1991 = vmul.f32 %v1989, 1.442695
      %v1992 = vpow.pop %v1991
      %v1995 = vunpack.c.l.s4 1966171168
      %v1996 = vunpack.c.0.s8 %v1995
      %v1997 = vlaneseq
      %v1998 = vshrl.u32 %v1997, 7
      %v1999 = vsub.s32 %v1996, %v1998
      %v2000 = vrot.slane %v1992, %v1999
      %v2001 = vcombine.high %v2000, %v2000
      %v2003 = vunpack.c.l.s4 1966171168
      %v2004 = vunpack.c.0.s8 %v2003
      %v2005 = vlaneseq
      %v2006 = vshrl.u32 %v2005, 7
      %v2007 = vsub.s32 %v2004, %v2006
      %v2008 = vrot.slane %v2001, %v2007
      %v2010 = vmul.f32 %v506, %v2008
      %v2011 = vadd.f32 %v2010, %v1989
      %v2012 = vsel %vm1990, %v2011, 0.0
      %2013 = vst [vmem:[%s501] sm:$0x1] %v2012
      %p2014 = scmp.lt.s32.totalorder %s26, 1
      %s2015 = scalar_select %p2014, %s26, 1
      %s2016 = scalar_lea.vmem %s13, %s2015
      %p2017 = scmp.lt.s32.totalorder %s26, 1
      %s2018 = scalar_select %p2017, %s26, 1
      %s2019 = smul.addr %s2018, 2
      %s2020 = scalar_lea.vmem %s14, %s2019
      // Predicated region
      $region73: #{wavenet_iaf_forward.4} parent=71 // pred_check
        %p2021 = pneg %p332
      $region74: #{wavenet_iaf_forward.4} parent=71 // pred_check_branch
        %2023 = sbr.rel (%p2021) target = $region76
      $region75: #{wavenet_iaf_forward.4} parent=71 // pred_region
        _
      $region76: #{wavenet_iaf_forward.4} parent=71 // pred_fallthru
        _
      // Predicated region
      $region77: #{wavenet_iaf_forward.4} parent=71 // pred_check
        %p2024 = pneg %p358
      $region78: #{wavenet_iaf_forward.4} parent=71 // pred_check_branch
        %2026 = sbr.rel (%p2024) target = $region80
      $region79: #{wavenet_iaf_forward.4} parent=71 // pred_region
        _
      $region80: #{wavenet_iaf_forward.4} parent=71 // pred_fallthru
        _
    $region72: #{wavenet_iaf_forward.4} parent=5 // pred_fallthru
      _
    %p2027 = scmp.le.s32.totalorder 2, %s21
    // Predicated region
    $region81: #{wavenet_iaf_forward.4} parent=5 // pred_check
      %p2028 = pneg %p2027
    $region82: #{wavenet_iaf_forward.4} parent=5 // pred_check_branch
      %2030 = sbr.rel (%p2028) target = $region84
    $region83: #{wavenet_iaf_forward.4} parent=5 // pred_region
      %s2031 = ssub.s32 %s21, 2
      // Predicated region
      $region85: #{wavenet_iaf_forward.4} parent=83 // pred_check
        %p2032 = pneg %p338
      $region86: #{wavenet_iaf_forward.4} parent=83 // pred_check_branch
        %2034 = sbr.rel (%p2032) target = $region88
      $region87: #{wavenet_iaf_forward.4} parent=83 // pred_region
        %p2035 = scmp.lt.s32.totalorder %s27, 1
        %s2036 = scalar_select %p2035, %s27, 1
        %s2037 = scalar_lea.vmem %s13, %s2036
      $region88: #{wavenet_iaf_forward.4} parent=83 // pred_fallthru
        _
      // Predicated region
      $region89: #{wavenet_iaf_forward.4} parent=83 // pred_check
        %p2038 = pneg %p364
      $region90: #{wavenet_iaf_forward.4} parent=83 // pred_check_branch
        %2040 = sbr.rel (%p2038) target = $region92
      $region91: #{wavenet_iaf_forward.4} parent=83 // pred_region
        %p2041 = scmp.lt.s32.totalorder %s27, 1
        %s2042 = scalar_select %p2041, %s27, 1
        %s2043 = smul.addr %s2042, 2
        %s2044 = scalar_lea.vmem %s14, %s2043
      $region92: #{wavenet_iaf_forward.4} parent=83 // pred_fallthru
        _
    $region84: #{wavenet_iaf_forward.4} parent=5 // pred_fallthru
      _
  $region6: #{wavenet_iaf_forward.4} parent=0 // loop_footer
    %s25 = sadd.s32 1, %s21
  $region7: #{wavenet_iaf_forward.4} parent=0 // loop_footer_branch
    %20 = sbr.rel target = $region3
  $region8: #{wavenet_iaf_forward.4} parent=0 // loop_exit
    _

</llo_original>
